<compile_context>
chip_gen: v5e
topology: v5e:2x2
jax: 0.10.0
libtpu: 0.0.40
codegen_flags: <defaults>
</compile_context>

<pallas_src>
import numpy as np
import jax
import jax.numpy as jnp
from jax.experimental import pallas as pl
from jax.experimental.pallas import tpu as pltpu


# ----------------------------------------------------------------------------
# VMEM budget / capability probes
# ----------------------------------------------------------------------------
_VMEM_PHYS = None
_PROBE_CACHE = {}


def _vmem_budget_bytes():
    """Physical VMEM per core (64 MiB v7x, 128 MiB v5e/v6e); conservative on error."""
    global _VMEM_PHYS
    if _VMEM_PHYS is None:
        try:
            info = pltpu.get_tpu_info()
            _VMEM_PHYS = int(getattr(info, "vmem_capacity_bytes", 0)) or (64 << 20)
        except Exception:
            _VMEM_PHYS = 64 << 20
    return _VMEM_PHYS


def _probe_reshape(key, fn, x, out_sds, expect_fn):
    """Compile + run a tiny kernel once to check Mosaic supports a relayout.
    Must be called outside jit (results are cached; under a trace it degrades
    to the safe fallback)."""
    ok = _PROBE_CACHE.get(key)
    if ok is not None:
        return ok
    try:
        got = np.asarray(jax.block_until_ready(
            pl.pallas_call(fn, out_shape=out_sds)(x))).astype(np.float32)
        exp = np.asarray(expect_fn(np.asarray(x))).astype(np.float32)
        ok = bool(np.array_equal(got, exp))
    except Exception:
        ok = False
    _PROBE_CACHE[key] = ok
    return ok


def _wrep_reshape_ok(rows, wl, c):
    """Can Mosaic lower the sublane-merge reshape used for the in-kernel W-repeat?"""
    def fn(x_ref, o_ref):
        v = x_ref[...]
        o_ref[...] = jnp.broadcast_to(
            v[:, :, None, :], (rows, wl, 2, c)).reshape(rows, 2 * wl, c)
    x = (jnp.arange(rows * wl * c) % 251).astype(jnp.bfloat16).reshape(rows, wl, c)
    return _probe_reshape(("wrep", rows, wl, c), fn, x,
                          jax.ShapeDtypeStruct((rows, 2 * wl, c), jnp.bfloat16),
                          lambda a: np.repeat(a, 2, axis=1))


def _lane_merge_ok(rows, w, c):
    """Can Mosaic lower the (rows*w, c) -> (rows, w*c) reshape (lane-dense store)?"""
    def fn(x_ref, o_ref):
        o_ref[...] = x_ref[...].reshape(rows, w * c)
    x = (jnp.arange(rows * w * c) % 251).astype(jnp.bfloat16).reshape(rows * w, c)
    return _probe_reshape(("lane", rows, w, c), fn, x,
                          jax.ShapeDtypeStruct((rows, w * c), jnp.bfloat16),
                          lambda a: a.reshape(rows, w * c))


# ----------------------------------------------------------------------------
# Tile-size selection from a VMEM byte budget (channel- and dtype-aware)
# ----------------------------------------------------------------------------
def _vmem_bytes_estimate(th, W, Cx, Cs, C1):
    thl, Wl, r1 = th // 2, W // 2, th + 2
    bf, f32 = 2, 4
    b = 0
    b += 2 * (thl + 2) * Wl * Cx * bf          # x rows (+halos), double-buffered
    b += 2 * (th + 4) * W * Cs * bf            # skip rows (+halos), double-buffered
    b += 2 * th * W * C1 * bf                  # output tile, double-buffered
    b += (th + 4) * (W + 2) * (Cx + Cs) * bf   # upsampled / W-padded windows
    b += r1 * W * max(Cx, Cs, C1) * bf         # largest tap slab
    b += r1 * W * C1 * (f32 + bf)              # conv1 accumulator + y1
    b += (r1 + 2) * (W + 2) * C1 * bf          # padded y1
    b += th * W * C1 * f32                     # conv2 accumulator
    b += 9 * (Cx + Cs + C1) * C1 * bf          # weights
    return b


def _pick_tile_h(H, W, Cx, Cs, C1, budget_bytes):
    """Largest tile height that fits the budget.  Prefers th == H (fewer grid
    steps on single-TC v5e/v6e; the batch axis keeps >=2 grid points for the
    v7x megacore)."""
    cands = sorted((d for d in range(2, H + 1, 2)
                    if H % d == 0 and (d == H or d % 8 == 0)), reverse=True)
    for d in cands:
        if _vmem_bytes_estimate(d, W, Cx, Cs, C1) <= budget_bytes:
            return d
    return cands[-1]


# ----------------------------------------------------------------------------
# BlockSpecs
# ----------------------------------------------------------------------------
def _const_map(nd):
    return lambda n, t: (0,) * nd


def _x_specs(hl, Wx, C, thl):
    """[1-row top halo, center rows, 1-row bottom halo] over the low-res x."""
    return [
        pl.BlockSpec((1, 1, Wx, C), lambda n, t: (n, jnp.maximum(t * thl - 1, 0), 0, 0)),
        pl.BlockSpec((1, thl, Wx, C), lambda n, t: (n, t, 0, 0)),
        pl.BlockSpec((1, 1, Wx, C),
                     lambda n, t: (n, jnp.minimum(t * thl + thl, hl - 1), 0, 0)),
    ]


def _skip_specs(H, W, C, th):
    """[2-row top halo, center rows, 2-row bottom halo] over the skip."""
    hb = th // 2  # halo block index is in units of 2 rows
    return [
        pl.BlockSpec((1, 2, W, C), lambda n, t: (n, jnp.maximum(t * hb - 1, 0), 0, 0)),
        pl.BlockSpec((1, th, W, C), lambda n, t: (n, t, 0, 0)),
        pl.BlockSpec((1, 2, W, C),
                     lambda n, t: (n, jnp.minimum(t * hb + hb, H // 2 - 1), 0, 0)),
    ]


# ----------------------------------------------------------------------------
# Fused decoder-block kernel (upsample + concat + conv1 + BN/ReLU + conv2 +
# BN/ReLU [+ final 1x1]) over one (th, W) row tile
# ----------------------------------------------------------------------------
def _make_block_kernel(th, W, Cx, Cs, C1, F, *, tiled, wrep, final, lane_dense):
    thl, Wl, r1 = th // 2, W // 2, th + 2
    x_w = Wl if wrep else W  # width of the x operands as passed in

    def _pad_w(a):
        # TODO(synk): replace the per-tile W zero-pad concat with masked edge taps.
        z = jnp.zeros((a.shape[0], 1, a.shape[2]), a.dtype)
        return jnp.concatenate([z, a, z], axis=1)

    def _conv3x3(win, w, rows, acc):
        # win: (rows+2, W+2, Cin) zero-padded in W; w: (3,3,Cin,Cout); acc f32.
        # 9 accumulating MXU dots (no lane-axis im2col concat).
        for dy in range(3):
            for dx in range(3):
                tap = win[dy:dy + rows, dx:dx + W, :].reshape(rows * W, win.shape[-1])
                acc = acc + jnp.dot(tap, w[dy, dx], preferred_element_type=jnp.float32)
        return acc

    def kernel(*refs):
        i = 0
        if tiled:
            x_top, x_mid, x_bot, s_top, s_mid, s_bot = refs[:6]
            i = 6
        else:
            x_mid, s_mid = refs[:2]
            i = 2
        w1x_ref, w1s_ref, sc1_ref, sh1_ref, w2_ref, sc2_ref, sh2_ref = refs[i:i + 7]
        i += 7
        if final:
            wf_ref, bf_ref = refs[i:i + 2]
            i += 2
        out_ref = refs[i]

        t = pl.program_id(1)
        nt = pl.num_programs(1)

        # ---- x branch: low-res rows (+1-row halos) -> fused 2x nearest up ----
        xm = x_mid[0]                                            # (thl, x_w, Cx)
        if tiled:
            xt = jnp.where(t > 0, x_top[0], jnp.zeros_like(x_top[0]))
            xb = jnp.where(t < nt - 1, x_bot[0], jnp.zeros_like(x_bot[0]))
        else:
            xt = jnp.zeros((1, x_w, Cx), xm.dtype)
            xb = jnp.zeros((1, x_w, Cx), xm.dtype)
        xw = jnp.concatenate([xt, xm, xb], axis=0)               # (thl+2, x_w, Cx)
        # 2x nearest along H (leading-dim reshape only)
        xw = jnp.broadcast_to(xw[:, None], (thl + 2, 2, x_w, Cx)).reshape(th + 4, x_w, Cx)
        if wrep:
            # 2x nearest along W, fused in VMEM
            xw = jnp.broadcast_to(xw[:, :, None, :],
                                  (th + 4, Wl, 2, Cx)).reshape(th + 4, W, Cx)

        # ---- skip branch: (th+4, W, Cs) window with 2-row halos --------------
        sm = s_mid[0]
        if tiled:
            st = jnp.where(t > 0, s_top[0], jnp.zeros_like(s_top[0]))
            sb = jnp.where(t < nt - 1, s_bot[0], jnp.zeros_like(s_bot[0]))
        else:
            st = jnp.zeros((2, W, Cs), sm.dtype)
            sb = jnp.zeros((2, W, Cs), sm.dtype)
        sw = jnp.concatenate([st, sm, sb], axis=0)               # (th+4, W, Cs)

        # ---- conv1 over concat([up(x), skip]) == two accumulating tap sums ---
        acc1 = jnp.zeros((r1 * W, C1), jnp.float32)
        acc1 = _conv3x3(_pad_w(xw), w1x_ref[...], r1, acc1)
        acc1 = _conv3x3(_pad_w(sw), w1s_ref[...], r1, acc1)
        y1 = jnp.maximum(acc1 * sc1_ref[...] + sh1_ref[...], 0.0)
        y1 = y1.astype(jnp.bfloat16).reshape(r1, W, C1)
        # rows of y1 that fall outside the image must be zero (conv2 SAME pad)
        row = t * th - 1 + jax.lax.broadcasted_iota(jnp.int32, (r1, 1, 1), 0)
        y1 = jnp.where((row >= 0) & (row < nt * th), y1, jnp.zeros_like(y1))

        # ---- conv2 on th rows: intermediate never leaves VMEM ----------------
        acc2 = jnp.zeros((th * W, C1), jnp.float32)
        acc2 = _conv3x3(_pad_w(y1), w2_ref[...], th, acc2)
        y2 = jnp.maximum(acc2 * sc2_ref[...] + sh2_ref[...], 0.0)
        y2 = y2.astype(jnp.bfloat16)

        if final:
            # fused final 1x1 conv; the block activation itself is never stored
            yf = jnp.dot(y2.astype(jnp.float32), wf_ref[...],
                         preferred_element_type=jnp.float32) + bf_ref[...]
            out_ref[0] = yf.reshape(th, W, F)
        elif lane_dense:
            out_ref[0] = y2.reshape(th, W * C1)                  # lane-dense store
        else:
            out_ref[0] = y2.reshape(th, W, C1)

    return kernel


# ----------------------------------------------------------------------------
# pallas_call wrapper for one decoder block
# ----------------------------------------------------------------------------
def decoder_block(x, skip, block_params, final_params=None, force_tile_h=None):
    """x: (N, H/2, W/2, Cx) bf16 low-res input, skip: (N, H, W, Cs) bf16.
    Returns (N, H, W, C1) bf16, or (N, H, W, F) f32 when final_params given."""
    (w1x, w1s, sc1, sh1), (w2, sc2, sh2) = block_params
    N, hl, Wl, Cx = x.shape
    Ns, H, W, Cs = skip.shape
    assert Ns == N and H == 2 * hl and W == 2 * Wl
    C1 = w2.shape[-1]

    if force_tile_h is not None:
        th = min(int(force_tile_h), H)
    else:
        th = _pick_tile_h(H, W, Cx, Cs, C1, _vmem_budget_bytes() // 3)
    assert H % th == 0 and th % 2 == 0 and (th == H or th % 8 == 0), (H, th)
    T = H // th
    thl = th // 2
    tiled = T > 1
    is_final = final_params is not None

    # Probe once which in-kernel relayouts Mosaic supports on this backend;
    # fall back to the previously-validated layouts otherwise.
    wrep = _wrep_reshape_ok(th + 4, Wl, Cx)
    lane_dense = (not is_final) and _lane_merge_ok(th, W, C1)

    if wrep:
        x_in, xw_in = x, Wl
    else:
        # TODO(synk): drop this XLA-side W-repeat once the sublane-merge reshape
        # lowers on every generation.
        x_in, xw_in = jnp.repeat(x, 2, axis=2), W

    if tiled:
        act_in = [x_in, x_in, x_in, skip, skip, skip]
        act_specs = _x_specs(hl, xw_in, Cx, thl) + _skip_specs(H, W, Cs, th)
    else:
        # whole-image rows per grid step: no halo streams at all
        act_in = [x_in, skip]
        act_specs = [pl.BlockSpec((1, hl, xw_in, Cx), lambda n, t: (n, 0, 0, 0)),
                     pl.BlockSpec((1, H, W, Cs), lambda n, t: (n, 0, 0, 0))]

    w_in = [w1x, w1s, sc1, sh1, w2, sc2, sh2]
    w_specs = [pl.BlockSpec(a.shape, _const_map(a.ndim)) for a in w_in]

    F = 0
    extra_in, extra_specs = [], []
    if is_final:
        wf = final_params["w"].astype(jnp.float32)
        bf = final_params["b"].reshape(1, -1).astype(jnp.float32)
        F = wf.shape[-1]
        extra_in = [wf, bf]
        extra_specs = [pl.BlockSpec(wf.shape, _const_map(2)),
                       pl.BlockSpec(bf.shape, _const_map(2))]
        out_shape = jax.ShapeDtypeStruct((N, H, W, F), jnp.float32)
        out_spec = pl.BlockSpec((1, th, W, F), lambda n, t: (n, t, 0, 0))
    elif lane_dense:
        out_shape = jax.ShapeDtypeStruct((N, H, W * C1), jnp.bfloat16)
        out_spec = pl.BlockSpec((1, th, W * C1), lambda n, t: (n, t, 0))
    else:
        out_shape = jax.ShapeDtypeStruct((N, H, W, C1), jnp.bfloat16)
        out_spec = pl.BlockSpec((1, th, W, C1), lambda n, t: (n, t, 0, 0))

    kernel = _make_block_kernel(th, W, Cx, Cs, C1, F, tiled=tiled, wrep=wrep,
                                final=is_final, lane_dense=lane_dense)

    cp = dict(dimension_semantics=("parallel", "parallel"))
    if _vmem_bytes_estimate(th, W, Cx, Cs, C1) > (12 << 20):
        # raise the scoped VMEM limit only when large tiles need it
        cp["vmem_limit_bytes"] = int(min(_vmem_budget_bytes() * 3 // 4, 112 << 20))

    y = pl.pallas_call(
        kernel,
        out_shape=out_shape,
        grid=(N, T),
        in_specs=act_specs + w_specs + extra_specs,
        out_specs=out_spec,
        compiler_params=pltpu.CompilerParams(**cp),
    )(*act_in, *w_in, *extra_in)

    if is_final:
        return y                               # (N, H, W, F) f32
    if lane_dense:
        y = y.reshape(N, H, W, C1)             # free row-major split, outside kernel
    return y


# ----------------------------------------------------------------------------
# Parameter prep / decoder forward (PyTorch-compatible NCHW interface)
# ----------------------------------------------------------------------------
def _fold_bn(bn, eps=1e-5):
    scale = bn["gamma"] * jax.lax.rsqrt(bn["var"] + eps)
    shift = bn["beta"] - bn["mean"] * scale
    return scale[None, :].astype(jnp.float32), shift[None, :].astype(jnp.float32)


def _prep_block(blk, cx):
    """Fold BN and split/cast the two conv weights of a decoder block (HWIO)."""
    w1 = blk["conv1_w"]                          # (3, 3, cx + cs, co)
    w1x = w1[:, :, :cx, :].astype(jnp.bfloat16)  # up(x) slice of the concat
    w1s = w1[:, :, cx:, :].astype(jnp.bfloat16)  # skip slice of the concat
    s1, b1 = _fold_bn(blk["bn1"])
    w2 = blk["conv2_w"].astype(jnp.bfloat16)
    s2, b2 = _fold_bn(blk["bn2"])
    return (w1x, w1s, s1, b1), (w2, s2, b2)


def unet_decoder_v2_forward(params, features_nchw, force_tile_h=None):
    feats = [jnp.transpose(f, (0, 2, 3, 1)).astype(jnp.bfloat16)
             for f in features_nchw]                              # -> NHWC bf16
    x, skips = feats[0], feats[1:]
    blocks = params["blocks"]
    out = None
    for i, (blk, skip) in enumerate(zip(blocks, skips)):
        prepped = _prep_block(blk, x.shape[-1])
        fin = params["final"] if i == len(blocks) - 1 else None
        y = decoder_block(x, skip, prepped, final_params=fin,
                          force_tile_h=force_tile_h)
        if fin is None:
            x = y
        else:
            out = y
    return jnp.transpose(out, (0, 3, 1, 2))                       # NCHW, f32


# ----------------------------------------------------------------------------
# Deterministic parameter initialization (shapes per UnetDecoderv2.__init__)
# ----------------------------------------------------------------------------
def init_params(key, encoder_channels, decoder_channels, final_channels):
    in_channels = [ic + sc for ic, sc in zip(
        [encoder_channels[0]] + list(decoder_channels[:-1]),
        list(encoder_channels[1:]))]
    blocks = []
    for ci, co in zip(in_channels, decoder_channels):
        blk = {}
        for name, bn_name, (a, b) in (("conv1_w", "bn1", (ci, co)),
                                      ("conv2_w", "bn2", (co, co))):
            key, kw, kg, kb, km, kv = jax.random.split(key, 6)
            blk[name] = (jax.random.normal(kw, (3, 3, a, b), jnp.float32)
                         * np.sqrt(2.0 / (9 * a)))
            blk[bn_name] = {
                "gamma": 1.0 + 0.1 * jax.random.normal(kg, (b,), jnp.float32),
                "beta": 0.1 * jax.random.normal(kb, (b,), jnp.float32),
                "mean": 0.1 * jax.random.normal(km, (b,), jnp.float32),
                "var": 1.0 + 0.1 * jax.random.uniform(kv, (b,), jnp.float32),
            }
        blocks.append(blk)
    key, kw, kb = jax.random.split(key, 3)
    c_last = decoder_channels[-1]
    final = {
        "w": (jax.random.normal(kw, (c_last, final_channels), jnp.float32)
              * np.sqrt(1.0 / c_last)),
        "b": 0.01 * jax.random.normal(kb, (final_channels,), jnp.float32),
    }
    return {"blocks": blocks, "final": final}


# ----------------------------------------------------------------------------
# Precision-matched XLA reference (same bf16 quantization points, f32 accum)
# ----------------------------------------------------------------------------
def reference_forward(params, features_nchw):
    feats = [jnp.transpose(f, (0, 2, 3, 1)).astype(jnp.bfloat16)
             for f in features_nchw]
    x, skips = feats[0], feats[1:]
    for blk, skip in zip(params["blocks"], skips):
        x = jnp.repeat(jnp.repeat(x, 2, axis=1), 2, axis=2)       # nearest 2x
        x = jnp.concatenate([x, skip], axis=-1)
        for wname, bname in (("conv1_w", "bn1"), ("conv2_w", "bn2")):
            s, b = _fold_bn(blk[bname])
            y = jax.lax.conv_general_dilated(
                x, blk[wname].astype(jnp.bfloat16), (1, 1), "SAME",
                dimension_numbers=("NHWC", "HWIO", "NHWC"),
                preferred_element_type=jnp.float32)
            x = jnp.maximum(y * s[0] + b[0], 0.0).astype(jnp.bfloat16)
    fp = params["final"]
    y = jnp.einsum("nhwc,cf->nhwf", x.astype(jnp.float32), fp["w"]) + fp["b"]
    return jnp.transpose(y, (0, 3, 1, 2))


# ----------------------------------------------------------------------------
if __name__ == "__main__":
    encoder_channels = (32, 16, 8, 8)    # x[0] plus 3 skips
    decoder_channels = (16, 8, 8)
    final_channels = 2
    N, base = 2, 4                       # deepest feature is 4x4

    key = jax.random.PRNGKey(0)
    key, kp = jax.random.split(key)
    params = init_params(kp, encoder_channels, decoder_channels, final_channels)

    feats = []
    s = base
    for c in encoder_channels:
        key, kf = jax.random.split(key)
        feats.append(jax.random.normal(kf, (N, c, s, s), jnp.float32))  # NCHW
        s *= 2

    # NOTE: called eagerly so the one-time Mosaic capability probes run outside
    # any trace (their results are cached; each pallas_call is compiled anyway).
    out = jax.block_until_ready(unet_decoder_v2_forward(params, feats))

    out_hw = base * (2 ** len(decoder_channels))
    assert out.shape == (N, final_channels, out_hw, out_hw), out.shape
    assert out.dtype == jnp.float32

    ref = np.asarray(jax.jit(reference_forward)(params, feats))
    out_np = np.asarray(out)
    assert np.isfinite(out_np).all()
    tol = 3e-2 * max(1.0, float(np.max(np.abs(ref))))
    err = float(np.max(np.abs(out_np - ref)))
    assert err < tol, f"default-tile max_err={err} tol={tol}"

    # Exercise the spatially-tiled (halo) path as well and re-check numerics.
    out_t = jax.block_until_ready(
        unet_decoder_v2_forward(params, feats, force_tile_h=8))
    err_t = float(np.max(np.abs(np.asarray(out_t) - ref)))
    assert err_t < tol, f"tiled max_err={err_t} tol={tol}"

    print("KERNEL_OK")
</pallas_src>

<mosaic_0001>
module attributes {stable_mosaic.version = 11 : i64} {
  func.func @fn(%arg0: memref<12x4x32xbf16, #tpu.memory_space<vmem>>, %arg1: memref<12x8x32xbf16, #tpu.memory_space<vmem>>) attributes {dimension_semantics = [], scalar_prefetch = 0 : i64, scratch_operands = 0 : i64, tpu.core_type = #tpu.core_type<tc>} {
    %c0 = arith.constant 0 : index
    %c0_0 = arith.constant 0 : index
    %c0_1 = arith.constant 0 : index
    %0 = vector.load %arg0[%c0, %c0_0, %c0_1] : memref<12x4x32xbf16, #tpu.memory_space<vmem>>, vector<12x4x32xbf16>
    %1 = vector.shape_cast %0 : vector<12x4x32xbf16> to vector<12x4x1x32xbf16>
    %2 = vector.shape_cast %1 : vector<12x4x1x32xbf16> to vector<12x4x1x32xbf16>
    %3 = vector.broadcast %2 : vector<12x4x1x32xbf16> to vector<12x4x2x32xbf16>
    %4 = vector.shape_cast %3 : vector<12x4x2x32xbf16> to vector<12x8x32xbf16>
    %c0_2 = arith.constant 0 : index
    %c0_3 = arith.constant 0 : index
    %c0_4 = arith.constant 0 : index
    %5 = vector.load %arg1[%c0_2, %c0_3, %c0_4] : memref<12x8x32xbf16, #tpu.memory_space<vmem>>, vector<12x8x32xbf16>
    tpu.vector_store %arg1[%c0_2, %c0_3, %c0_4], %4 {strides = array<i32>} : memref<12x8x32xbf16, #tpu.memory_space<vmem>>, vector<12x8x32xbf16>,
    return
  }
}

module attributes {stable_mosaic.version = 11 : i64} {
  func.func @fn(%arg0: memref<64x16xbf16, #tpu.memory_space<vmem>>, %arg1: memref<8x128xbf16, #tpu.memory_space<vmem>>) attributes {dimension_semantics = [], scalar_prefetch = 0 : i64, scratch_operands = 0 : i64, tpu.core_type = #tpu.core_type<tc>} {
    %c0 = arith.constant 0 : index
    %c0_0 = arith.constant 0 : index
    %0 = vector.load %arg0[%c0, %c0_0] : memref<64x16xbf16, #tpu.memory_space<vmem>>, vector<64x16xbf16>
    %1 = vector.shape_cast %0 : vector<64x16xbf16> to vector<8x128xbf16>
    %c0_1 = arith.constant 0 : index
    %c0_2 = arith.constant 0 : index
    %2 = vector.load %arg1[%c0_1, %c0_2] : memref<8x128xbf16, #tpu.memory_space<vmem>>, vector<8x128xbf16>
    tpu.vector_store %arg1[%c0_1, %c0_2], %1 {strides = array<i32>} : memref<8x128xbf16, #tpu.memory_space<vmem>>, vector<8x128xbf16>,
    return
  }
}

module attributes {stable_mosaic.version = 11 : i64} {
  func.func @kernel(%arg0: i32, %arg1: i32, %arg2: memref<1x4x8x32xbf16, #tpu.memory_space<vmem>>, %arg3: memref<1x8x8x16xbf16, #tpu.memory_space<vmem>>, %arg4: memref<3x3x32x16xbf16, #tpu.memory_space<vmem>>, %arg5: memref<3x3x16x16xbf16, #tpu.memory_space<vmem>>, %arg6: memref<1x16xf32, #tpu.memory_space<vmem>>, %arg7: memref<1x16xf32, #tpu.memory_space<vmem>>, %arg8: memref<3x3x16x16xbf16, #tpu.memory_space<vmem>>, %arg9: memref<1x16xf32, #tpu.memory_space<vmem>>, %arg10: memref<1x16xf32, #tpu.memory_space<vmem>>, %arg11: memref<1x8x8x16xbf16, #tpu.memory_space<vmem>>) attributes {dimension_semantics = [#tpu.dimension_semantics<parallel>, #tpu.dimension_semantics<parallel>], iteration_bounds = array<i64: 2, 1>, scalar_prefetch = 0 : i64, scratch_operands = 0 : i64, tpu.core_type = #tpu.core_type<tc>, window_params = [{transform_indices = @transform_0, window_bounds = array<i64: 1, 4, 8, 32>}, {transform_indices = @transform_1, window_bounds = array<i64: 1, 8, 8, 16>}, {pipeline_mode = #tpu.pipeline_mode<synchronous>, transform_indices = @transform_2, window_bounds = array<i64: 3, 3, 32, 16>}, {pipeline_mode = #tpu.pipeline_mode<synchronous>, transform_indices = @transform_3, window_bounds = array<i64: 3, 3, 16, 16>}, {pipeline_mode = #tpu.pipeline_mode<synchronous>, transform_indices = @transform_4, window_bounds = array<i64: 1, 16>}, {pipeline_mode = #tpu.pipeline_mode<synchronous>, transform_indices = @transform_5, window_bounds = array<i64: 1, 16>}, {pipeline_mode = #tpu.pipeline_mode<synchronous>, transform_indices = @transform_6, window_bounds = array<i64: 3, 3, 16, 16>}, {pipeline_mode = #tpu.pipeline_mode<synchronous>, transform_indices = @transform_7, window_bounds = array<i64: 1, 16>}, {pipeline_mode = #tpu.pipeline_mode<synchronous>, transform_indices = @transform_8, window_bounds = array<i64: 1, 16>}, {transform_indices = @transform_9, window_bounds = array<i64: 1, 8, 8, 16>}]} {
    %c0 = arith.constant 0 : index
    %c0_0 = arith.constant 0 : index
    %c0_1 = arith.constant 0 : index
    %c0_2 = arith.constant 0 : index
    %0 = vector.load %arg2[%c0, %c0_0, %c0_1, %c0_2] : memref<1x4x8x32xbf16, #tpu.memory_space<vmem>>, vector<1x4x8x32xbf16>
    %1 = vector.shape_cast %0 : vector<1x4x8x32xbf16> to vector<4x8x32xbf16>
    %cst = arith.constant 0.000000e+00 : bf16
    %2 = vector.broadcast %cst : bf16 to vector<1x8x32xbf16>
    %cst_3 = arith.constant 0.000000e+00 : bf16
    %3 = vector.broadcast %cst_3 : bf16 to vector<1x8x32xbf16>
    %4 = tpu.concatenate %2, %1, %3 in 0 : vector<1x8x32xbf16>, vector<4x8x32xbf16>, vector<1x8x32xbf16> -> vector<6x8x32xbf16>
    %5 = vector.shape_cast %4 : vector<6x8x32xbf16> to vector<6x1x8x32xbf16>
    %6 = vector.shape_cast %5 : vector<6x1x8x32xbf16> to vector<6x1x8x32xbf16>
    %7 = vector.broadcast %6 : vector<6x1x8x32xbf16> to vector<6x2x8x32xbf16>
    %8 = vector.shape_cast %7 : vector<6x2x8x32xbf16> to vector<12x8x32xbf16>
    %c0_4 = arith.constant 0 : index
    %c0_5 = arith.constant 0 : index
    %c0_6 = arith.constant 0 : index
    %c0_7 = arith.constant 0 : index
    %9 = vector.load %arg3[%c0_4, %c0_5, %c0_6, %c0_7] : memref<1x8x8x16xbf16, #tpu.memory_space<vmem>>, vector<1x8x8x16xbf16>
    %10 = vector.shape_cast %9 : vector<1x8x8x16xbf16> to vector<8x8x16xbf16>
    %cst_8 = arith.constant 0.000000e+00 : bf16
    %11 = vector.broadcast %cst_8 : bf16 to vector<2x8x16xbf16>
    %cst_9 = arith.constant 0.000000e+00 : bf16
    %12 = vector.broadcast %cst_9 : bf16 to vector<2x8x16xbf16>
    %13 = tpu.concatenate %11, %10, %12 in 0 : vector<2x8x16xbf16>, vector<8x8x16xbf16>, vector<2x8x16xbf16> -> vector<12x8x16xbf16>
    %cst_10 = arith.constant 0.000000e+00 : f32
    %14 = vector.broadcast %cst_10 : f32 to vector<80x16xf32>
    %cst_11 = arith.constant 0.000000e+00 : bf16
    %15 = vector.broadcast %cst_11 : bf16 to vector<12x1x32xbf16>
    %16 = tpu.concatenate %15, %8, %15 in 1 : vector<12x1x32xbf16>, vector<12x8x32xbf16>, vector<12x1x32xbf16> -> vector<12x10x32xbf16>
    %c0_12 = arith.constant 0 : index
    %c0_13 = arith.constant 0 : index
    %c0_14 = arith.constant 0 : index
    %c0_15 = arith.constant 0 : index
    %17 = vector.load %arg4[%c0_12, %c0_13, %c0_14, %c0_15] : memref<3x3x32x16xbf16, #tpu.memory_space<vmem>>, vector<3x3x32x16xbf16>
    %18 = vector.extract_strided_slice %16 {offsets = [0, 0, 0], sizes = [10, 8, 32], strides = [1, 1, 1]} : vector<12x10x32xbf16> to vector<10x8x32xbf16>
    %19 = vector.shape_cast %18 : vector<10x8x32xbf16> to vector<80x32xbf16>
    %20 = vector.extract_strided_slice %17 {offsets = [0, 0, 0, 0], sizes = [1, 1, 32, 16], strides = [1, 1, 1, 1]} : vector<3x3x32x16xbf16> to vector<1x1x32x16xbf16>
    %21 = vector.shape_cast %20 : vector<1x1x32x16xbf16> to vector<32x16xbf16>
    %cst_16 = arith.constant dense<0.000000e+00> : vector<80x16xf32>
    %22 = tpu.matmul %19, %21, %cst_16 {dimension_numbers = #tpu.dot_dimension_numbers<[1], [0], [0], [1], [0, 0, 1, 1], [], []>} : vector<80x32xbf16>, vector<32x16xbf16>, vector<80x16xf32> -> vector<80x16xf32>
    %23 = arith.addf %14, %22 : vector<80x16xf32>
    %24 = vector.extract_strided_slice %16 {offsets = [0, 1, 0], sizes = [10, 8, 32], strides = [1, 1, 1]} : vector<12x10x32xbf16> to vector<10x8x32xbf16>
    %25 = vector.shape_cast %24 : vector<10x8x32xbf16> to vector<80x32xbf16>
    %26 = vector.extract_strided_slice %17 {offsets = [0, 1, 0, 0], sizes = [1, 1, 32, 16], strides = [1, 1, 1, 1]} : vector<3x3x32x16xbf16> to vector<1x1x32x16xbf16>
    %27 = vector.shape_cast %26 : vector<1x1x32x16xbf16> to vector<32x16xbf16>
    %cst_17 = arith.constant dense<0.000000e+00> : vector<80x16xf32>
    %28 = tpu.matmul %25, %27, %cst_17 {dimension_numbers = #tpu.dot_dimension_numbers<[1], [0], [0], [1], [0, 0, 1, 1], [], []>} : vector<80x32xbf16>, vector<32x16xbf16>, vector<80x16xf32> -> vector<80x16xf32>
    %29 = arith.addf %23, %28 : vector<80x16xf32>
    %30 = vector.extract_strided_slice %16 {offsets = [0, 2, 0], sizes = [10, 8, 32], strides = [1, 1, 1]} : vector<12x10x32xbf16> to vector<10x8x32xbf16>
    %31 = vector.shape_cast %30 : vector<10x8x32xbf16> to vector<80x32xbf16>
    %32 = vector.extract_strided_slice %17 {offsets = [0, 2, 0, 0], sizes = [1, 1, 32, 16], strides = [1, 1, 1, 1]} : vector<3x3x32x16xbf16> to vector<1x1x32x16xbf16>
    %33 = vector.shape_cast %32 : vector<1x1x32x16xbf16> to vector<32x16xbf16>
    %cst_18 = arith.constant dense<0.000000e+00> : vector<80x16xf32>
    %34 = tpu.matmul %31, %33, %cst_18 {dimension_numbers = #tpu.dot_dimension_numbers<[1], [0], [0], [1], [0, 0, 1, 1], [], []>} : vector<80x32xbf16>, vector<32x16xbf16>, vector<80x16xf32> -> vector<80x16xf32>
    %35 = arith.addf %29, %34 : vector<80x16xf32>
    %36 = vector.extract_strided_slice %16 {offsets = [1, 0, 0], sizes = [10, 8, 32], strides = [1, 1, 1]} : vector<12x10x32xbf16> to vector<10x8x32xbf16>
    %37 = vector.shape_cast %36 : vector<10x8x32xbf16> to vector<80x32xbf16>
    %38 = vector.extract_strided_slice %17 {offsets = [1, 0, 0, 0], sizes = [1, 1, 32, 16], strides = [1, 1, 1, 1]} : vector<3x3x32x16xbf16> to vector<1x1x32x16xbf16>
    %39 = vector.shape_cast %38 : vector<1x1x32x16xbf16> to vector<32x16xbf16>
    %cst_19 = arith.constant dense<0.000000e+00> : vector<80x16xf32>
    %40 = tpu.matmul %37, %39, %cst_19 {dimension_numbers = #tpu.dot_dimension_numbers<[1], [0], [0], [1], [0, 0, 1, 1], [], []>} : vector<80x32xbf16>, vector<32x16xbf16>, vector<80x16xf32> -> vector<80x16xf32>
    %41 = arith.addf %35, %40 : vector<80x16xf32>
    %42 = vector.extract_strided_slice %16 {offsets = [1, 1, 0], sizes = [10, 8, 32], strides = [1, 1, 1]} : vector<12x10x32xbf16> to vector<10x8x32xbf16>
    %43 = vector.shape_cast %42 : vector<10x8x32xbf16> to vector<80x32xbf16>
    %44 = vector.extract_strided_slice %17 {offsets = [1, 1, 0, 0], sizes = [1, 1, 32, 16], strides = [1, 1, 1, 1]} : vector<3x3x32x16xbf16> to vector<1x1x32x16xbf16>
    %45 = vector.shape_cast %44 : vector<1x1x32x16xbf16> to vector<32x16xbf16>
    %cst_20 = arith.constant dense<0.000000e+00> : vector<80x16xf32>
    %46 = tpu.matmul %43, %45, %cst_20 {dimension_numbers = #tpu.dot_dimension_numbers<[1], [0], [0], [1], [0, 0, 1, 1], [], []>} : vector<80x32xbf16>, vector<32x16xbf16>, vector<80x16xf32> -> vector<80x16xf32>
    %47 = arith.addf %41, %46 : vector<80x16xf32>
    %48 = vector.extract_strided_slice %16 {offsets = [1, 2, 0], sizes = [10, 8, 32], strides = [1, 1, 1]} : vector<12x10x32xbf16> to vector<10x8x32xbf16>
    %49 = vector.shape_cast %48 : vector<10x8x32xbf16> to vector<80x32xbf16>
    %50 = vector.extract_strided_slice %17 {offsets = [1, 2, 0, 0], sizes = [1, 1, 32, 16], strides = [1, 1, 1, 1]} : vector<3x3x32x16xbf16> to vector<1x1x32x16xbf16>
    %51 = vector.shape_cast %50 : vector<1x1x32x16xbf16> to vector<32x16xbf16>
    %cst_21 = arith.constant dense<0.000000e+00> : vector<80x16xf32>
    %52 = tpu.matmul %49, %51, %cst_21 {dimension_numbers = #tpu.dot_dimension_numbers<[1], [0], [0], [1], [0, 0, 1, 1], [], []>} : vector<80x32xbf16>, vector<32x16xbf16>, vector<80x16xf32> -> vector<80x16xf32>
    %53 = arith.addf %47, %52 : vector<80x16xf32>
    %54 = vector.extract_strided_slice %16 {offsets = [2, 0, 0], sizes = [10, 8, 32], strides = [1, 1, 1]} : vector<12x10x32xbf16> to vector<10x8x32xbf16>
    %55 = vector.shape_cast %54 : vector<10x8x32xbf16> to vector<80x32xbf16>
    %56 = vector.extract_strided_slice %17 {offsets = [2, 0, 0, 0], sizes = [1, 1, 32, 16], strides = [1, 1, 1, 1]} : vector<3x3x32x16xbf16> to vector<1x1x32x16xbf16>
    %57 = vector.shape_cast %56 : vector<1x1x32x16xbf16> to vector<32x16xbf16>
    %cst_22 = arith.constant dense<0.000000e+00> : vector<80x16xf32>
    %58 = tpu.matmul %55, %57, %cst_22 {dimension_numbers = #tpu.dot_dimension_numbers<[1], [0], [0], [1], [0, 0, 1, 1], [], []>} : vector<80x32xbf16>, vector<32x16xbf16>, vector<80x16xf32> -> vector<80x16xf32>
    %59 = arith.addf %53, %58 : vector<80x16xf32>
    %60 = vector.extract_strided_slice %16 {offsets = [2, 1, 0], sizes = [10, 8, 32], strides = [1, 1, 1]} : vector<12x10x32xbf16> to vector<10x8x32xbf16>
    %61 = vector.shape_cast %60 : vector<10x8x32xbf16> to vector<80x32xbf16>
    %62 = vector.extract_strided_slice %17 {offsets = [2, 1, 0, 0], sizes = [1, 1, 32, 16], strides = [1, 1, 1, 1]} : vector<3x3x32x16xbf16> to vector<1x1x32x16xbf16>
    %63 = vector.shape_cast %62 : vector<1x1x32x16xbf16> to vector<32x16xbf16>
    %cst_23 = arith.constant dense<0.000000e+00> : vector<80x16xf32>
    %64 = tpu.matmul %61, %63, %cst_23 {dimension_numbers = #tpu.dot_dimension_numbers<[1], [0], [0], [1], [0, 0, 1, 1], [], []>} : vector<80x32xbf16>, vector<32x16xbf16>, vector<80x16xf32> -> vector<80x16xf32>
    %65 = arith.addf %59, %64 : vector<80x16xf32>
    %66 = vector.extract_strided_slice %16 {offsets = [2, 2, 0], sizes = [10, 8, 32], strides = [1, 1, 1]} : vector<12x10x32xbf16> to vector<10x8x32xbf16>
    %67 = vector.shape_cast %66 : vector<10x8x32xbf16> to vector<80x32xbf16>
    %68 = vector.extract_strided_slice %17 {offsets = [2, 2, 0, 0], sizes = [1, 1, 32, 16], strides = [1, 1, 1, 1]} : vector<3x3x32x16xbf16> to vector<1x1x32x16xbf16>
    %69 = vector.shape_cast %68 : vector<1x1x32x16xbf16> to vector<32x16xbf16>
    %cst_24 = arith.constant dense<0.000000e+00> : vector<80x16xf32>
    %70 = tpu.matmul %67, %69, %cst_24 {dimension_numbers = #tpu.dot_dimension_numbers<[1], [0], [0], [1], [0, 0, 1, 1], [], []>} : vector<80x32xbf16>, vector<32x16xbf16>, vector<80x16xf32> -> vector<80x16xf32>
    %71 = arith.addf %65, %70 : vector<80x16xf32>
    %cst_25 = arith.constant 0.000000e+00 : bf16
    %72 = vector.broadcast %cst_25 : bf16 to vector<12x1x16xbf16>
    %73 = tpu.concatenate %72, %13, %72 in 1 : vector<12x1x16xbf16>, vector<12x8x16xbf16>, vector<12x1x16xbf16> -> vector<12x10x16xbf16>
    %c0_26 = arith.constant 0 : index
    %c0_27 = arith.constant 0 : index
    %c0_28 = arith.constant 0 : index
    %c0_29 = arith.constant 0 : index
    %74 = vector.load %arg5[%c0_26, %c0_27, %c0_28, %c0_29] : memref<3x3x16x16xbf16, #tpu.memory_space<vmem>>, vector<3x3x16x16xbf16>
    %75 = vector.extract_strided_slice %73 {offsets = [0, 0, 0], sizes = [10, 8, 16], strides = [1, 1, 1]} : vector<12x10x16xbf16> to vector<10x8x16xbf16>
    %76 = vector.shape_cast %75 : vector<10x8x16xbf16> to vector<80x16xbf16>
    %77 = vector.extract_strided_slice %74 {offsets = [0, 0, 0, 0], sizes = [1, 1, 16, 16], strides = [1, 1, 1, 1]} : vector<3x3x16x16xbf16> to vector<1x1x16x16xbf16>
    %78 = vector.shape_cast %77 : vector<1x1x16x16xbf16> to vector<16x16xbf16>
    %cst_30 = arith.constant dense<0.000000e+00> : vector<80x16xf32>
    %79 = tpu.matmul %76, %78, %cst_30 {dimension_numbers = #tpu.dot_dimension_numbers<[1], [0], [0], [1], [0, 0, 1, 1], [], []>} : vector<80x16xbf16>, vector<16x16xbf16>, vector<80x16xf32> -> vector<80x16xf32>
    %80 = arith.addf %71, %79 : vector<80x16xf32>
    %81 = vector.extract_strided_slice %73 {offsets = [0, 1, 0], sizes = [10, 8, 16], strides = [1, 1, 1]} : vector<12x10x16xbf16> to vector<10x8x16xbf16>
    %82 = vector.shape_cast %81 : vector<10x8x16xbf16> to vector<80x16xbf16>
    %83 = vector.extract_strided_slice %74 {offsets = [0, 1, 0, 0], sizes = [1, 1, 16, 16], strides = [1, 1, 1, 1]} : vector<3x3x16x16xbf16> to vector<1x1x16x16xbf16>
    %84 = vector.shape_cast %83 : vector<1x1x16x16xbf16> to vector<16x16xbf16>
    %cst_31 = arith.constant dense<0.000000e+00> : vector<80x16xf32>
    %85 = tpu.matmul %82, %84, %cst_31 {dimension_numbers = #tpu.dot_dimension_numbers<[1], [0], [0], [1], [0, 0, 1, 1], [], []>} : vector<80x16xbf16>, vector<16x16xbf16>, vector<80x16xf32> -> vector<80x16xf32>
    %86 = arith.addf %80, %85 : vector<80x16xf32>
    %87 = vector.extract_strided_slice %73 {offsets = [0, 2, 0], sizes = [10, 8, 16], strides = [1, 1, 1]} : vector<12x10x16xbf16> to vector<10x8x16xbf16>
    %88 = vector.shape_cast %87 : vector<10x8x16xbf16> to vector<80x16xbf16>
    %89 = vector.extract_strided_slice %74 {offsets = [0, 2, 0, 0], sizes = [1, 1, 16, 16], strides = [1, 1, 1, 1]} : vector<3x3x16x16xbf16> to vector<1x1x16x16xbf16>
    %90 = vector.shape_cast %89 : vector<1x1x16x16xbf16> to vector<16x16xbf16>
    %cst_32 = arith.constant dense<0.000000e+00> : vector<80x16xf32>
    %91 = tpu.matmul %88, %90, %cst_32 {dimension_numbers = #tpu.dot_dimension_numbers<[1], [0], [0], [1], [0, 0, 1, 1], [], []>} : vector<80x16xbf16>, vector<16x16xbf16>, vector<80x16xf32> -> vector<80x16xf32>
    %92 = arith.addf %86, %91 : vector<80x16xf32>
    %93 = vector.extract_strided_slice %73 {offsets = [1, 0, 0], sizes = [10, 8, 16], strides = [1, 1, 1]} : vector<12x10x16xbf16> to vector<10x8x16xbf16>
    %94 = vector.shape_cast %93 : vector<10x8x16xbf16> to vector<80x16xbf16>
    %95 = vector.extract_strided_slice %74 {offsets = [1, 0, 0, 0], sizes = [1, 1, 16, 16], strides = [1, 1, 1, 1]} : vector<3x3x16x16xbf16> to vector<1x1x16x16xbf16>
    %96 = vector.shape_cast %95 : vector<1x1x16x16xbf16> to vector<16x16xbf16>
    %cst_33 = arith.constant dense<0.000000e+00> : vector<80x16xf32>
    %97 = tpu.matmul %94, %96, %cst_33 {dimension_numbers = #tpu.dot_dimension_numbers<[1], [0], [0], [1], [0, 0, 1, 1], [], []>} : vector<80x16xbf16>, vector<16x16xbf16>, vector<80x16xf32> -> vector<80x16xf32>
    %98 = arith.addf %92, %97 : vector<80x16xf32>
    %99 = vector.extract_strided_slice %73 {offsets = [1, 1, 0], sizes = [10, 8, 16], strides = [1, 1, 1]} : vector<12x10x16xbf16> to vector<10x8x16xbf16>
    %100 = vector.shape_cast %99 : vector<10x8x16xbf16> to vector<80x16xbf16>
    %101 = vector.extract_strided_slice %74 {offsets = [1, 1, 0, 0], sizes = [1, 1, 16, 16], strides = [1, 1, 1, 1]} : vector<3x3x16x16xbf16> to vector<1x1x16x16xbf16>
    %102 = vector.shape_cast %101 : vector<1x1x16x16xbf16> to vector<16x16xbf16>
    %cst_34 = arith.constant dense<0.000000e+00> : vector<80x16xf32>
    %103 = tpu.matmul %100, %102, %cst_34 {dimension_numbers = #tpu.dot_dimension_numbers<[1], [0], [0], [1], [0, 0, 1, 1], [], []>} : vector<80x16xbf16>, vector<16x16xbf16>, vector<80x16xf32> -> vector<80x16xf32>
    %104 = arith.addf %98, %103 : vector<80x16xf32>
    %105 = vector.extract_strided_slice %73 {offsets = [1, 2, 0], sizes = [10, 8, 16], strides = [1, 1, 1]} : vector<12x10x16xbf16> to vector<10x8x16xbf16>
    %106 = vector.shape_cast %105 : vector<10x8x16xbf16> to vector<80x16xbf16>
    %107 = vector.extract_strided_slice %74 {offsets = [1, 2, 0, 0], sizes = [1, 1, 16, 16], strides = [1, 1, 1, 1]} : vector<3x3x16x16xbf16> to vector<1x1x16x16xbf16>
    %108 = vector.shape_cast %107 : vector<1x1x16x16xbf16> to vector<16x16xbf16>
    %cst_35 = arith.constant dense<0.000000e+00> : vector<80x16xf32>
    %109 = tpu.matmul %106, %108, %cst_35 {dimension_numbers = #tpu.dot_dimension_numbers<[1], [0], [0], [1], [0, 0, 1, 1], [], []>} : vector<80x16xbf16>, vector<16x16xbf16>, vector<80x16xf32> -> vector<80x16xf32>
    %110 = arith.addf %104, %109 : vector<80x16xf32>
    %111 = vector.extract_strided_slice %73 {offsets = [2, 0, 0], sizes = [10, 8, 16], strides = [1, 1, 1]} : vector<12x10x16xbf16> to vector<10x8x16xbf16>
    %112 = vector.shape_cast %111 : vector<10x8x16xbf16> to vector<80x16xbf16>
    %113 = vector.extract_strided_slice %74 {offsets = [2, 0, 0, 0], sizes = [1, 1, 16, 16], strides = [1, 1, 1, 1]} : vector<3x3x16x16xbf16> to vector<1x1x16x16xbf16>
    %114 = vector.shape_cast %113 : vector<1x1x16x16xbf16> to vector<16x16xbf16>
    %cst_36 = arith.constant dense<0.000000e+00> : vector<80x16xf32>
    %115 = tpu.matmul %112, %114, %cst_36 {dimension_numbers = #tpu.dot_dimension_numbers<[1], [0], [0], [1], [0, 0, 1, 1], [], []>} : vector<80x16xbf16>, vector<16x16xbf16>, vector<80x16xf32> -> vector<80x16xf32>
    %116 = arith.addf %110, %115 : vector<80x16xf32>
    %117 = vector.extract_strided_slice %73 {offsets = [2, 1, 0], sizes = [10, 8, 16], strides = [1, 1, 1]} : vector<12x10x16xbf16> to vector<10x8x16xbf16>
    %118 = vector.shape_cast %117 : vector<10x8x16xbf16> to vector<80x16xbf16>
    %119 = vector.extract_strided_slice %74 {offsets = [2, 1, 0, 0], sizes = [1, 1, 16, 16], strides = [1, 1, 1, 1]} : vector<3x3x16x16xbf16> to vector<1x1x16x16xbf16>
    %120 = vector.shape_cast %119 : vector<1x1x16x16xbf16> to vector<16x16xbf16>
    %cst_37 = arith.constant dense<0.000000e+00> : vector<80x16xf32>
    %121 = tpu.matmul %118, %120, %cst_37 {dimension_numbers = #tpu.dot_dimension_numbers<[1], [0], [0], [1], [0, 0, 1, 1], [], []>} : vector<80x16xbf16>, vector<16x16xbf16>, vector<80x16xf32> -> vector<80x16xf32>
    %122 = arith.addf %116, %121 : vector<80x16xf32>
    %123 = vector.extract_strided_slice %73 {offsets = [2, 2, 0], sizes = [10, 8, 16], strides = [1, 1, 1]} : vector<12x10x16xbf16> to vector<10x8x16xbf16>
    %124 = vector.shape_cast %123 : vector<10x8x16xbf16> to vector<80x16xbf16>
    %125 = vector.extract_strided_slice %74 {offsets = [2, 2, 0, 0], sizes = [1, 1, 16, 16], strides = [1, 1, 1, 1]} : vector<3x3x16x16xbf16> to vector<1x1x16x16xbf16>
    %126 = vector.shape_cast %125 : vector<1x1x16x16xbf16> to vector<16x16xbf16>
    %cst_38 = arith.constant dense<0.000000e+00> : vector<80x16xf32>
    %127 = tpu.matmul %124, %126, %cst_38 {dimension_numbers = #tpu.dot_dimension_numbers<[1], [0], [0], [1], [0, 0, 1, 1], [], []>} : vector<80x16xbf16>, vector<16x16xbf16>, vector<80x16xf32> -> vector<80x16xf32>
    %128 = arith.addf %122, %127 : vector<80x16xf32>
    %c0_39 = arith.constant 0 : index
    %c0_40 = arith.constant 0 : index
    %129 = vector.load %arg6[%c0_39, %c0_40] : memref<1x16xf32, #tpu.memory_space<vmem>>, vector<1x16xf32>
    %130 = vector.broadcast %129 : vector<1x16xf32> to vector<80x16xf32>
    %131 = arith.mulf %128, %130 : vector<80x16xf32>
    %c0_41 = arith.constant 0 : index
    %c0_42 = arith.constant 0 : index
    %132 = vector.load %arg7[%c0_41, %c0_42] : memref<1x16xf32, #tpu.memory_space<vmem>>, vector<1x16xf32>
    %133 = vector.broadcast %132 : vector<1x16xf32> to vector<80x16xf32>
    %134 = arith.addf %131, %133 : vector<80x16xf32>
    %cst_43 = arith.constant 0.000000e+00 : f32
    %135 = vector.broadcast %cst_43 : f32 to vector<80x16xf32>
    %136 = arith.maximumf %134, %135 : vector<80x16xf32>
    %137 = arith.truncf %136 : vector<80x16xf32> to vector<80x16xbf16>
    %138 = vector.shape_cast %137 : vector<80x16xbf16> to vector<10x8x16xbf16>
    %c8_i32 = arith.constant 8 : i32
    %139 = arith.muli %arg1, %c8_i32 : i32
    %c1_i32 = arith.constant 1 : i32
    %140 = arith.subi %139, %c1_i32 : i32
    %141 = tpu.iota {dimensions = array<i32: 0>} : vector<10x1x1xi32>
    %142 = vector.broadcast %140 : i32 to vector<10x1x1xi32>
    %143 = arith.addi %142, %141 : vector<10x1x1xi32>
    %c0_i32 = arith.constant 0 : i32
    %144 = vector.broadcast %c0_i32 : i32 to vector<10x1x1xi32>
    %145 = arith.cmpi sge, %143, %144 : vector<10x1x1xi32>
    %c8_i32_44 = arith.constant 8 : i32
    %146 = vector.broadcast %c8_i32_44 : i32 to vector<10x1x1xi32>
    %147 = arith.cmpi slt, %143, %146 : vector<10x1x1xi32>
    %148 = arith.andi %145, %147 : vector<10x1x1xi1>
    %cst_45 = arith.constant 0.000000e+00 : bf16
    %149 = vector.broadcast %cst_45 : bf16 to vector<10x8x16xbf16>
    %150 = vector.shape_cast %148 : vector<10x1x1xi1> to vector<10x1x1xi1>
    %151 = vector.broadcast %150 : vector<10x1x1xi1> to vector<10x8x16xi1>
    %152 = arith.select %151, %138, %149 : vector<10x8x16xi1>, vector<10x8x16xbf16>
    %cst_46 = arith.constant 0.000000e+00 : f32
    %153 = vector.broadcast %cst_46 : f32 to vector<64x16xf32>
    %cst_47 = arith.constant 0.000000e+00 : bf16
    %154 = vector.broadcast %cst_47 : bf16 to vector<10x1x16xbf16>
    %155 = tpu.concatenate %154, %152, %154 in 1 : vector<10x1x16xbf16>, vector<10x8x16xbf16>, vector<10x1x16xbf16> -> vector<10x10x16xbf16>
    %c0_48 = arith.constant 0 : index
    %c0_49 = arith.constant 0 : index
    %c0_50 = arith.constant 0 : index
    %c0_51 = arith.constant 0 : index
    %156 = vector.load %arg8[%c0_48, %c0_49, %c0_50, %c0_51] : memref<3x3x16x16xbf16, #tpu.memory_space<vmem>>, vector<3x3x16x16xbf16>
    %157 = vector.extract_strided_slice %155 {offsets = [0, 0, 0], sizes = [8, 8, 16], strides = [1, 1, 1]} : vector<10x10x16xbf16> to vector<8x8x16xbf16>
    %158 = vector.shape_cast %157 : vector<8x8x16xbf16> to vector<64x16xbf16>
    %159 = vector.extract_strided_slice %156 {offsets = [0, 0, 0, 0], sizes = [1, 1, 16, 16], strides = [1, 1, 1, 1]} : vector<3x3x16x16xbf16> to vector<1x1x16x16xbf16>
    %160 = vector.shape_cast %159 : vector<1x1x16x16xbf16> to vector<16x16xbf16>
    %cst_52 = arith.constant dense<0.000000e+00> : vector<64x16xf32>
    %161 = tpu.matmul %158, %160, %cst_52 {dimension_numbers = #tpu.dot_dimension_numbers<[1], [0], [0], [1], [0, 0, 1, 1], [], []>} : vector<64x16xbf16>, vector<16x16xbf16>, vector<64x16xf32> -> vector<64x16xf32>
    %162 = arith.addf %153, %161 : vector<64x16xf32>
    %163 = vector.extract_strided_slice %155 {offsets = [0, 1, 0], sizes = [8, 8, 16], strides = [1, 1, 1]} : vector<10x10x16xbf16> to vector<8x8x16xbf16>
    %164 = vector.shape_cast %163 : vector<8x8x16xbf16> to vector<64x16xbf16>
    %165 = vector.extract_strided_slice %156 {offsets = [0, 1, 0, 0], sizes = [1, 1, 16, 16], strides = [1, 1, 1, 1]} : vector<3x3x16x16xbf16> to vector<1x1x16x16xbf16>
    %166 = vector.shape_cast %165 : vector<1x1x16x16xbf16> to vector<16x16xbf16>
    %cst_53 = arith.constant dense<0.000000e+00> : vector<64x16xf32>
    %167 = tpu.matmul %164, %166, %cst_53 {dimension_numbers = #tpu.dot_dimension_numbers<[1], [0], [0], [1], [0, 0, 1, 1], [], []>} : vector<64x16xbf16>, vector<16x16xbf16>, vector<64x16xf32> -> vector<64x16xf32>
    %168 = arith.addf %162, %167 : vector<64x16xf32>
    %169 = vector.extract_strided_slice %155 {offsets = [0, 2, 0], sizes = [8, 8, 16], strides = [1, 1, 1]} : vector<10x10x16xbf16> to vector<8x8x16xbf16>
    %170 = vector.shape_cast %169 : vector<8x8x16xbf16> to vector<64x16xbf16>
    %171 = vector.extract_strided_slice %156 {offsets = [0, 2, 0, 0], sizes = [1, 1, 16, 16], strides = [1, 1, 1, 1]} : vector<3x3x16x16xbf16> to vector<1x1x16x16xbf16>
    %172 = vector.shape_cast %171 : vector<1x1x16x16xbf16> to vector<16x16xbf16>
    %cst_54 = arith.constant dense<0.000000e+00> : vector<64x16xf32>
    %173 = tpu.matmul %170, %172, %cst_54 {dimension_numbers = #tpu.dot_dimension_numbers<[1], [0], [0], [1], [0, 0, 1, 1], [], []>} : vector<64x16xbf16>, vector<16x16xbf16>, vector<64x16xf32> -> vector<64x16xf32>
    %174 = arith.addf %168, %173 : vector<64x16xf32>
    %175 = vector.extract_strided_slice %155 {offsets = [1, 0, 0], sizes = [8, 8, 16], strides = [1, 1, 1]} : vector<10x10x16xbf16> to vector<8x8x16xbf16>
    %176 = vector.shape_cast %175 : vector<8x8x16xbf16> to vector<64x16xbf16>
    %177 = vector.extract_strided_slice %156 {offsets = [1, 0, 0, 0], sizes = [1, 1, 16, 16], strides = [1, 1, 1, 1]} : vector<3x3x16x16xbf16> to vector<1x1x16x16xbf16>
    %178 = vector.shape_cast %177 : vector<1x1x16x16xbf16> to vector<16x16xbf16>
    %cst_55 = arith.constant dense<0.000000e+00> : vector<64x16xf32>
    %179 = tpu.matmul %176, %178, %cst_55 {dimension_numbers = #tpu.dot_dimension_numbers<[1], [0], [0], [1], [0, 0, 1, 1], [], []>} : vector<64x16xbf16>, vector<16x16xbf16>, vector<64x16xf32> -> vector<64x16xf32>
    %180 = arith.addf %174, %179 : vector<64x16xf32>
    %181 = vector.extract_strided_slice %155 {offsets = [1, 1, 0], sizes = [8, 8, 16], strides = [1, 1, 1]} : vector<10x10x16xbf16> to vector<8x8x16xbf16>
    %182 = vector.shape_cast %181 : vector<8x8x16xbf16> to vector<64x16xbf16>
    %183 = vector.extract_strided_slice %156 {offsets = [1, 1, 0, 0], sizes = [1, 1, 16, 16], strides = [1, 1, 1, 1]} : vector<3x3x16x16xbf16> to vector<1x1x16x16xbf16>
    %184 = vector.shape_cast %183 : vector<1x1x16x16xbf16> to vector<16x16xbf16>
    %cst_56 = arith.constant dense<0.000000e+00> : vector<64x16xf32>
    %185 = tpu.matmul %182, %184, %cst_56 {dimension_numbers = #tpu.dot_dimension_numbers<[1], [0], [0], [1], [0, 0, 1, 1], [], []>} : vector<64x16xbf16>, vector<16x16xbf16>, vector<64x16xf32> -> vector<64x16xf32>
    %186 = arith.addf %180, %185 : vector<64x16xf32>
    %187 = vector.extract_strided_slice %155 {offsets = [1, 2, 0], sizes = [8, 8, 16], strides = [1, 1, 1]} : vector<10x10x16xbf16> to vector<8x8x16xbf16>
    %188 = vector.shape_cast %187 : vector<8x8x16xbf16> to vector<64x16xbf16>
    %189 = vector.extract_strided_slice %156 {offsets = [1, 2, 0, 0], sizes = [1, 1, 16, 16], strides = [1, 1, 1, 1]} : vector<3x3x16x16xbf16> to vector<1x1x16x16xbf16>
    %190 = vector.shape_cast %189 : vector<1x1x16x16xbf16> to vector<16x16xbf16>
    %cst_57 = arith.constant dense<0.000000e+00> : vector<64x16xf32>
    %191 = tpu.matmul %188, %190, %cst_57 {dimension_numbers = #tpu.dot_dimension_numbers<[1], [0], [0], [1], [0, 0, 1, 1], [], []>} : vector<64x16xbf16>, vector<16x16xbf16>, vector<64x16xf32> -> vector<64x16xf32>
    %192 = arith.addf %186, %191 : vector<64x16xf32>
    %193 = vector.extract_strided_slice %155 {offsets = [2, 0, 0], sizes = [8, 8, 16], strides = [1, 1, 1]} : vector<10x10x16xbf16> to vector<8x8x16xbf16>
    %194 = vector.shape_cast %193 : vector<8x8x16xbf16> to vector<64x16xbf16>
    %195 = vector.extract_strided_slice %156 {offsets = [2, 0, 0, 0], sizes = [1, 1, 16, 16], strides = [1, 1, 1, 1]} : vector<3x3x16x16xbf16> to vector<1x1x16x16xbf16>
    %196 = vector.shape_cast %195 : vector<1x1x16x16xbf16> to vector<16x16xbf16>
    %cst_58 = arith.constant dense<0.000000e+00> : vector<64x16xf32>
    %197 = tpu.matmul %194, %196, %cst_58 {dimension_numbers = #tpu.dot_dimension_numbers<[1], [0], [0], [1], [0, 0, 1, 1], [], []>} : vector<64x16xbf16>, vector<16x16xbf16>, vector<64x16xf32> -> vector<64x16xf32>
    %198 = arith.addf %192, %197 : vector<64x16xf32>
    %199 = vector.extract_strided_slice %155 {offsets = [2, 1, 0], sizes = [8, 8, 16], strides = [1, 1, 1]} : vector<10x10x16xbf16> to vector<8x8x16xbf16>
    %200 = vector.shape_cast %199 : vector<8x8x16xbf16> to vector<64x16xbf16>
    %201 = vector.extract_strided_slice %156 {offsets = [2, 1, 0, 0], sizes = [1, 1, 16, 16], strides = [1, 1, 1, 1]} : vector<3x3x16x16xbf16> to vector<1x1x16x16xbf16>
    %202 = vector.shape_cast %201 : vector<1x1x16x16xbf16> to vector<16x16xbf16>
    %cst_59 = arith.constant dense<0.000000e+00> : vector<64x16xf32>
    %203 = tpu.matmul %200, %202, %cst_59 {dimension_numbers = #tpu.dot_dimension_numbers<[1], [0], [0], [1], [0, 0, 1, 1], [], []>} : vector<64x16xbf16>, vector<16x16xbf16>, vector<64x16xf32> -> vector<64x16xf32>
    %204 = arith.addf %198, %203 : vector<64x16xf32>
    %205 = vector.extract_strided_slice %155 {offsets = [2, 2, 0], sizes = [8, 8, 16], strides = [1, 1, 1]} : vector<10x10x16xbf16> to vector<8x8x16xbf16>
    %206 = vector.shape_cast %205 : vector<8x8x16xbf16> to vector<64x16xbf16>
    %207 = vector.extract_strided_slice %156 {offsets = [2, 2, 0, 0], sizes = [1, 1, 16, 16], strides = [1, 1, 1, 1]} : vector<3x3x16x16xbf16> to vector<1x1x16x16xbf16>
    %208 = vector.shape_cast %207 : vector<1x1x16x16xbf16> to vector<16x16xbf16>
    %cst_60 = arith.constant dense<0.000000e+00> : vector<64x16xf32>
    %209 = tpu.matmul %206, %208, %cst_60 {dimension_numbers = #tpu.dot_dimension_numbers<[1], [0], [0], [1], [0, 0, 1, 1], [], []>} : vector<64x16xbf16>, vector<16x16xbf16>, vector<64x16xf32> -> vector<64x16xf32>
    %210 = arith.addf %204, %209 : vector<64x16xf32>
    %c0_61 = arith.constant 0 : index
    %c0_62 = arith.constant 0 : index
    %211 = vector.load %arg9[%c0_61, %c0_62] : memref<1x16xf32, #tpu.memory_space<vmem>>, vector<1x16xf32>
    %212 = vector.broadcast %211 : vector<1x16xf32> to vector<64x16xf32>
    %213 = arith.mulf %210, %212 : vector<64x16xf32>
    %c0_63 = arith.constant 0 : index
    %c0_64 = arith.constant 0 : index
    %214 = vector.load %arg10[%c0_63, %c0_64] : memref<1x16xf32, #tpu.memory_space<vmem>>, vector<1x16xf32>
    %215 = vector.broadcast %214 : vector<1x16xf32> to vector<64x16xf32>
    %216 = arith.addf %213, %215 : vector<64x16xf32>
    %cst_65 = arith.constant 0.000000e+00 : f32
    %217 = vector.broadcast %cst_65 : f32 to vector<64x16xf32>
    %218 = arith.maximumf %216, %217 : vector<64x16xf32>
    %219 = arith.truncf %218 : vector<64x16xf32> to vector<64x16xbf16>
    %220 = vector.shape_cast %219 : vector<64x16xbf16> to vector<8x8x16xbf16>
    %c0_66 = arith.constant 0 : index
    %c0_67 = arith.constant 0 : index
    %c0_68 = arith.constant 0 : index
    %c0_69 = arith.constant 0 : index
    %221 = vector.load %arg11[%c0_66, %c0_67, %c0_68, %c0_69] : memref<1x8x8x16xbf16, #tpu.memory_space<vmem>>, vector<1x8x8x16xbf16>
    %222 = vector.shape_cast %221 : vector<1x8x8x16xbf16> to vector<8x8x16xbf16>
    %223 = vector.shape_cast %220 : vector<8x8x16xbf16> to vector<1x8x8x16xbf16>
    tpu.vector_store %arg11[%c0_66, %c0_67, %c0_68, %c0_69], %223 {strides = array<i32>} : memref<1x8x8x16xbf16, #tpu.memory_space<vmem>>, vector<1x8x8x16xbf16>,
    return
  }
  func.func @transform_0(%arg0: i32, %arg1: i32) -> (i32, i32, i32, i32) {
    %c0_i32 = arith.constant 0 : i32
    %c0_i32_0 = arith.constant 0 : i32
    %c0_i32_1 = arith.constant 0 : i32
    %c0_i32_2 = arith.constant 0 : i32
    return %arg0, %c0_i32, %c0_i32_0, %c0_i32_1 : i32, i32, i32, i32
  }
  func.func @transform_1(%arg0: i32, %arg1: i32) -> (i32, i32, i32, i32) {
    %c0_i32 = arith.constant 0 : i32
    %c0_i32_0 = arith.constant 0 : i32
    %c0_i32_1 = arith.constant 0 : i32
    %c0_i32_2 = arith.constant 0 : i32
    return %arg0, %c0_i32, %c0_i32_0, %c0_i32_1 : i32, i32, i32, i32
  }
  func.func @transform_2(%arg0: i32, %arg1: i32) -> (i32, i32, i32, i32) {
    %c0_i32 = arith.constant 0 : i32
    %c0_i32_0 = arith.constant 0 : i32
    %c0_i32_1 = arith.constant 0 : i32
    %c0_i32_2 = arith.constant 0 : i32
    %c0_i32_3 = arith.constant 0 : i32
    return %c0_i32, %c0_i32_0, %c0_i32_1, %c0_i32_2 : i32, i32, i32, i32
  }
  func.func @transform_3(%arg0: i32, %arg1: i32) -> (i32, i32, i32, i32) {
    %c0_i32 = arith.constant 0 : i32
    %c0_i32_0 = arith.constant 0 : i32
    %c0_i32_1 = arith.constant 0 : i32
    %c0_i32_2 = arith.constant 0 : i32
    %c0_i32_3 = arith.constant 0 : i32
    return %c0_i32, %c0_i32_0, %c0_i32_1, %c0_i32_2 : i32, i32, i32, i32
  }
  func.func @transform_4(%arg0: i32, %arg1: i32) -> (i32, i32) {
    %c0_i32 = arith.constant 0 : i32
    %c0_i32_0 = arith.constant 0 : i32
    %c0_i32_1 = arith.constant 0 : i32
    return %c0_i32, %c0_i32_0 : i32, i32
  }
  func.func @transform_5(%arg0: i32, %arg1: i32) -> (i32, i32) {
    %c0_i32 = arith.constant 0 : i32
    %c0_i32_0 = arith.constant 0 : i32
    %c0_i32_1 = arith.constant 0 : i32
    return %c0_i32, %c0_i32_0 : i32, i32
  }
  func.func @transform_6(%arg0: i32, %arg1: i32) -> (i32, i32, i32, i32) {
    %c0_i32 = arith.constant 0 : i32
    %c0_i32_0 = arith.constant 0 : i32
    %c0_i32_1 = arith.constant 0 : i32
    %c0_i32_2 = arith.constant 0 : i32
    %c0_i32_3 = arith.constant 0 : i32
    return %c0_i32, %c0_i32_0, %c0_i32_1, %c0_i32_2 : i32, i32, i32, i32
  }
  func.func @transform_7(%arg0: i32, %arg1: i32) -> (i32, i32) {
    %c0_i32 = arith.constant 0 : i32
    %c0_i32_0 = arith.constant 0 : i32
    %c0_i32_1 = arith.constant 0 : i32
    return %c0_i32, %c0_i32_0 : i32, i32
  }
  func.func @transform_8(%arg0: i32, %arg1: i32) -> (i32, i32) {
    %c0_i32 = arith.constant 0 : i32
    %c0_i32_0 = arith.constant 0 : i32
    %c0_i32_1 = arith.constant 0 : i32
    return %c0_i32, %c0_i32_0 : i32, i32
  }
  func.func @transform_9(%arg0: i32, %arg1: i32) -> (i32, i32, i32, i32) {
    %c0_i32 = arith.constant 0 : i32
    %c0_i32_0 = arith.constant 0 : i32
    %c0_i32_1 = arith.constant 0 : i32
    return %arg0, %arg1, %c0_i32, %c0_i32_0 : i32, i32, i32, i32
  }
}

</mosaic_0001>

<llo_original>
// kernel: tpu_custom_call.1
$region0: #{tpu_custom_call.1}
  #allocation0 [shape = 'u32[]', space=smem, size = 0x4, offset = 0x4, fixed_abs, tag = 'smem constant byte address 0x4 - core index']
  #allocation1 [shape = 'u32[72,128]{1,0:T(1,128)}', space=vmem, size = 0x9000, scoped, tag = 'internal scratch']
  %s0 = inlined_call_operand.hbm [shape: bf16[12,4,32], index: 0, kind: input, shape index: {}]
  %s1 = inlined_call_operand.hbm [shape: bf16[12,8,32], index: 1, kind: output, shape index: {}]
  %s2 = sld [smem:[#allocation0]]
  $region18: #{tpu_custom_call.1} parent=0
    _
  %s4 = ssub.s32 1, %s2
  %s5 = scalar_select 0, %s4, %s2
  $region1: #{tpu_custom_call.1} parent=0
    #allocation2 [shape = 'u8[12288]{0}', space=vmem, size = 0x3000, scoped, tag = 'input window, operand 0, single buffered']
    #allocation3 [shape = 's32[1]{0}', space=sflag, size = 0x4, scoped, tag = 'scoped memory for tpu_custom_call.1']
    #allocation4 [shape = 's32[1]{0}', space=sflag, size = 0x4, scoped, tag = 'scoped memory for tpu_custom_call.1']
    #allocation5 [shape = 'u8[24576]{0}', space=vmem, size = 0x6000, scoped, tag = 'output window, operand 0, single buffered']
    %6 = vsyncpa [#allocation3], 0
    %7 = vsyncpa [#allocation4], 0
    // Predicated region
    $region2: #{tpu_custom_call.1} parent=1 // pred_check
      _
    $region3: #{tpu_custom_call.1} parent=1 // pred_check_branch
      %9 = sbr.rel (0) target = $region5
    $region4: #{tpu_custom_call.1} parent=1 // pred_region
      %11 = vsyncadd [#allocation3], 0
      %s12 = sshll.u32 %s0, 4
      %s13 = int_to_ptr.hbm [resolvable:$true] %s12
      %s14 = sshll.u32 [#allocation2], 4
      %s15 = int_to_ptr.vmem [resolvable:$true] %s14
      %20 = dma.hbm_to_vmem [thread:$0]  %s13, 384, %s15, [#allocation3], 32, 32, 2
    $region5: #{tpu_custom_call.1} parent=1 // pred_fallthru
      _
    // Predicated region
    $region6: #{tpu_custom_call.1} parent=1 // pred_check
      _
    $region7: #{tpu_custom_call.1} parent=1 // pred_check_branch
      %22 = sbr.rel (0) target = $region9
    $region8: #{tpu_custom_call.1} parent=1 // pred_region
      %24 = dma.done [#allocation3], 384
    $region9: #{tpu_custom_call.1} parent=1 // pred_fallthru
      _
    %v25 = vld [vmem:[#allocation2] sm:$0x3]
    %v26 = vld [vmem:[#allocation2 + $0x2] sm:$0x3]
    %v27 = vld [vmem:[#allocation2 + $0x4] sm:$0x3]
    %v28 = vld [vmem:[#allocation2 + $0x6] sm:$0x3]
    %v29 = vld [vmem:[#allocation2 + $0x8] sm:$0x3]
    %v30 = vld [vmem:[#allocation2 + $0xa] sm:$0x3]
    %v31 = vld [vmem:[#allocation2 + $0xc] sm:$0x3]
    %v32 = vld [vmem:[#allocation2 + $0xe] sm:$0x3]
    %v33 = vld [vmem:[#allocation2 + $0x10] sm:$0x3]
    %v34 = vld [vmem:[#allocation2 + $0x12] sm:$0x3]
    %v35 = vld [vmem:[#allocation2 + $0x14] sm:$0x3]
    %v36 = vld [vmem:[#allocation2 + $0x16] sm:$0x3]
    %v49 = vrot.slane %v25, 1
    %v50 = vrot.slane %v25, 2
    %v51 = vrot.slane %v25, 3
    %v52 = vrot.slane %v26, 1
    %v53 = vrot.slane %v26, 2
    %v54 = vrot.slane %v26, 3
    %v55 = vrot.slane %v27, 1
    %v56 = vrot.slane %v27, 2
    %v57 = vrot.slane %v27, 3
    %v58 = vrot.slane %v28, 1
    %v59 = vrot.slane %v28, 2
    %v60 = vrot.slane %v28, 3
    %v61 = vrot.slane %v29, 1
    %v62 = vrot.slane %v29, 2
    %v63 = vrot.slane %v29, 3
    %v64 = vrot.slane %v30, 1
    %v65 = vrot.slane %v30, 2
    %v66 = vrot.slane %v30, 3
    %v67 = vrot.slane %v31, 1
    %v68 = vrot.slane %v31, 2
    %v69 = vrot.slane %v31, 3
    %v70 = vrot.slane %v32, 1
    %v71 = vrot.slane %v32, 2
    %v72 = vrot.slane %v32, 3
    %v73 = vrot.slane %v33, 1
    %v74 = vrot.slane %v33, 2
    %v75 = vrot.slane %v33, 3
    %v76 = vrot.slane %v34, 1
    %v77 = vrot.slane %v34, 2
    %v78 = vrot.slane %v34, 3
    %v79 = vrot.slane %v35, 1
    %v80 = vrot.slane %v35, 2
    %v81 = vrot.slane %v35, 3
    %v82 = vrot.slane %v36, 1
    %v83 = vrot.slane %v36, 2
    %v84 = vrot.slane %v36, 3
    %vm85 = vcmask 1040384
    %v88 = vsel %vm85, %v25, %v49
    %vm89 = vcmask 1042434
    %v92 = vsel %vm89, %v50, %v51
    %vm93 = vcmask 1041408
    %v94 = vsel %vm93, %v88, %v92
    %vm96 = vcmask 1041409
    %v97 = vsel %vm96, %v25, %v49
    %vm98 = vcmask 1043459
    %v99 = vsel %vm98, %v50, %v51
    %vm100 = vcmask 1042433
    %v101 = vsel %vm100, %v97, %v99
    %v103 = vrot.slane %v101, 1
    %v106 = vsel %vm85, %v26, %v52
    %v109 = vsel %vm89, %v53, %v54
    %v110 = vsel %vm93, %v106, %v109
    %v112 = vsel %vm96, %v26, %v52
    %v113 = vsel %vm98, %v53, %v54
    %v114 = vsel %vm100, %v112, %v113
    %v116 = vrot.slane %v114, 1
    %v119 = vsel %vm85, %v27, %v55
    %v122 = vsel %vm89, %v56, %v57
    %v123 = vsel %vm93, %v119, %v122
    %v125 = vsel %vm96, %v27, %v55
    %v126 = vsel %vm98, %v56, %v57
    %v127 = vsel %vm100, %v125, %v126
    %v129 = vrot.slane %v127, 1
    %v132 = vsel %vm85, %v28, %v58
    %v135 = vsel %vm89, %v59, %v60
    %v136 = vsel %vm93, %v132, %v135
    %v138 = vsel %vm96, %v28, %v58
    %v139 = vsel %vm98, %v59, %v60
    %v140 = vsel %vm100, %v138, %v139
    %v142 = vrot.slane %v140, 1
    %v145 = vsel %vm85, %v29, %v61
    %v148 = vsel %vm89, %v62, %v63
    %v149 = vsel %vm93, %v145, %v148
    %v151 = vsel %vm96, %v29, %v61
    %v152 = vsel %vm98, %v62, %v63
    %v153 = vsel %vm100, %v151, %v152
    %v155 = vrot.slane %v153, 1
    %v158 = vsel %vm85, %v30, %v64
    %v161 = vsel %vm89, %v65, %v66
    %v162 = vsel %vm93, %v158, %v161
    %v164 = vsel %vm96, %v30, %v64
    %v165 = vsel %vm98, %v65, %v66
    %v166 = vsel %vm100, %v164, %v165
    %v168 = vrot.slane %v166, 1
    %v171 = vsel %vm85, %v31, %v67
    %v174 = vsel %vm89, %v68, %v69
    %v175 = vsel %vm93, %v171, %v174
    %v177 = vsel %vm96, %v31, %v67
    %v178 = vsel %vm98, %v68, %v69
    %v179 = vsel %vm100, %v177, %v178
    %v181 = vrot.slane %v179, 1
    %v184 = vsel %vm85, %v32, %v70
    %v187 = vsel %vm89, %v71, %v72
    %v188 = vsel %vm93, %v184, %v187
    %v190 = vsel %vm96, %v32, %v70
    %v191 = vsel %vm98, %v71, %v72
    %v192 = vsel %vm100, %v190, %v191
    %v194 = vrot.slane %v192, 1
    %v197 = vsel %vm85, %v33, %v73
    %v200 = vsel %vm89, %v74, %v75
    %v201 = vsel %vm93, %v197, %v200
    %v203 = vsel %vm96, %v33, %v73
    %v204 = vsel %vm98, %v74, %v75
    %v205 = vsel %vm100, %v203, %v204
    %v207 = vrot.slane %v205, 1
    %v210 = vsel %vm85, %v34, %v76
    %v213 = vsel %vm89, %v77, %v78
    %v214 = vsel %vm93, %v210, %v213
    %v216 = vsel %vm96, %v34, %v76
    %v217 = vsel %vm98, %v77, %v78
    %v218 = vsel %vm100, %v216, %v217
    %v220 = vrot.slane %v218, 1
    %v223 = vsel %vm85, %v35, %v79
    %v226 = vsel %vm89, %v80, %v81
    %v227 = vsel %vm93, %v223, %v226
    %v229 = vsel %vm96, %v35, %v79
    %v230 = vsel %vm98, %v80, %v81
    %v231 = vsel %vm100, %v229, %v230
    %v233 = vrot.slane %v231, 1
    %v236 = vsel %vm85, %v36, %v82
    %v239 = vsel %vm89, %v83, %v84
    %v240 = vsel %vm93, %v236, %v239
    %v242 = vsel %vm96, %v36, %v82
    %v243 = vsel %vm98, %v83, %v84
    %v244 = vsel %vm100, %v242, %v243
    %v246 = vrot.slane %v244, 1
    %v247 = vunpack.i.l.s16 %v94
    %v248 = vunpack.i.h.s16 %v94
    %v249 = vunpack.i.l.s16 %v103
    %v250 = vunpack.i.h.s16 %v103
    %v251 = vunpack.i.l.s16 %v110
    %v252 = vunpack.i.h.s16 %v110
    %v253 = vunpack.i.l.s16 %v116
    %v254 = vunpack.i.h.s16 %v116
    %v255 = vunpack.i.l.s16 %v123
    %v256 = vunpack.i.h.s16 %v123
    %v257 = vunpack.i.l.s16 %v129
    %v258 = vunpack.i.h.s16 %v129
    %v259 = vunpack.i.l.s16 %v136
    %v260 = vunpack.i.h.s16 %v136
    %v261 = vunpack.i.l.s16 %v142
    %v262 = vunpack.i.h.s16 %v142
    %v263 = vunpack.i.l.s16 %v149
    %v264 = vunpack.i.h.s16 %v149
    %v265 = vunpack.i.l.s16 %v155
    %v266 = vunpack.i.h.s16 %v155
    %v267 = vunpack.i.l.s16 %v162
    %v268 = vunpack.i.h.s16 %v162
    %v269 = vunpack.i.l.s16 %v168
    %v270 = vunpack.i.h.s16 %v168
    %v271 = vunpack.i.l.s16 %v175
    %v272 = vunpack.i.h.s16 %v175
    %v273 = vunpack.i.l.s16 %v181
    %v274 = vunpack.i.h.s16 %v181
    %v275 = vunpack.i.l.s16 %v188
    %v276 = vunpack.i.h.s16 %v188
    %v277 = vunpack.i.l.s16 %v194
    %v278 = vunpack.i.h.s16 %v194
    %v279 = vunpack.i.l.s16 %v201
    %v280 = vunpack.i.h.s16 %v201
    %v281 = vunpack.i.l.s16 %v207
    %v282 = vunpack.i.h.s16 %v207
    %v283 = vunpack.i.l.s16 %v214
    %v284 = vunpack.i.h.s16 %v214
    %v285 = vunpack.i.l.s16 %v220
    %v286 = vunpack.i.h.s16 %v220
    %v287 = vunpack.i.l.s16 %v227
    %v288 = vunpack.i.h.s16 %v227
    %v289 = vunpack.i.l.s16 %v233
    %v290 = vunpack.i.h.s16 %v233
    %v291 = vunpack.i.l.s16 %v240
    %v292 = vunpack.i.h.s16 %v240
    %v293 = vunpack.i.l.s16 %v246
    %v294 = vunpack.i.h.s16 %v246
    %v295 = vpack.i.b16 %v247, %v247
    %v296 = vpack.i.b16 %v248, %v248
    %v297 = vpack.i.b16 %v249, %v249
    %v298 = vpack.i.b16 %v250, %v250
    %v299 = vpack.i.b16 %v251, %v251
    %v300 = vpack.i.b16 %v252, %v252
    %v301 = vpack.i.b16 %v253, %v253
    %v302 = vpack.i.b16 %v254, %v254
    %v303 = vpack.i.b16 %v255, %v255
    %v304 = vpack.i.b16 %v256, %v256
    %v305 = vpack.i.b16 %v257, %v257
    %v306 = vpack.i.b16 %v258, %v258
    %v307 = vpack.i.b16 %v259, %v259
    %v308 = vpack.i.b16 %v260, %v260
    %v309 = vpack.i.b16 %v261, %v261
    %v310 = vpack.i.b16 %v262, %v262
    %v311 = vpack.i.b16 %v263, %v263
    %v312 = vpack.i.b16 %v264, %v264
    %v313 = vpack.i.b16 %v265, %v265
    %v314 = vpack.i.b16 %v266, %v266
    %v315 = vpack.i.b16 %v267, %v267
    %v316 = vpack.i.b16 %v268, %v268
    %v317 = vpack.i.b16 %v269, %v269
    %v318 = vpack.i.b16 %v270, %v270
    %v319 = vpack.i.b16 %v271, %v271
    %v320 = vpack.i.b16 %v272, %v272
    %v321 = vpack.i.b16 %v273, %v273
    %v322 = vpack.i.b16 %v274, %v274
    %v323 = vpack.i.b16 %v275, %v275
    %v324 = vpack.i.b16 %v276, %v276
    %v325 = vpack.i.b16 %v277, %v277
    %v326 = vpack.i.b16 %v278, %v278
    %v327 = vpack.i.b16 %v279, %v279
    %v328 = vpack.i.b16 %v280, %v280
    %v329 = vpack.i.b16 %v281, %v281
    %v330 = vpack.i.b16 %v282, %v282
    %v331 = vpack.i.b16 %v283, %v283
    %v332 = vpack.i.b16 %v284, %v284
    %v333 = vpack.i.b16 %v285, %v285
    %v334 = vpack.i.b16 %v286, %v286
    %v335 = vpack.i.b16 %v287, %v287
    %v336 = vpack.i.b16 %v288, %v288
    %v337 = vpack.i.b16 %v289, %v289
    %v338 = vpack.i.b16 %v290, %v290
    %v339 = vpack.i.b16 %v291, %v291
    %v340 = vpack.i.b16 %v292, %v292
    %v341 = vpack.i.b16 %v293, %v293
    %v342 = vpack.i.b16 %v294, %v294
    %v343 = vperm.slane %v295, 0
    %v344 = vperm.slane %v296, 0
    %v345 = vperm.slane %v297, 0
    %v346 = vperm.slane %v298, 0
    %v347 = vperm.slane %v299, 0
    %v348 = vperm.slane %v300, 0
    %v349 = vperm.slane %v301, 0
    %v350 = vperm.slane %v302, 0
    %v351 = vperm.slane %v303, 0
    %v352 = vperm.slane %v304, 0
    %v353 = vperm.slane %v305, 0
    %v354 = vperm.slane %v306, 0
    %v355 = vperm.slane %v307, 0
    %v356 = vperm.slane %v308, 0
    %v357 = vperm.slane %v309, 0
    %v358 = vperm.slane %v310, 0
    %v359 = vperm.slane %v311, 0
    %v360 = vperm.slane %v312, 0
    %v361 = vperm.slane %v313, 0
    %v362 = vperm.slane %v314, 0
    %v363 = vperm.slane %v315, 0
    %v364 = vperm.slane %v316, 0
    %v365 = vperm.slane %v317, 0
    %v366 = vperm.slane %v318, 0
    %v367 = vperm.slane %v319, 0
    %v368 = vperm.slane %v320, 0
    %v369 = vperm.slane %v321, 0
    %v370 = vperm.slane %v322, 0
    %v371 = vperm.slane %v323, 0
    %v372 = vperm.slane %v324, 0
    %v373 = vperm.slane %v325, 0
    %v374 = vperm.slane %v326, 0
    %v375 = vperm.slane %v327, 0
    %v376 = vperm.slane %v328, 0
    %v377 = vperm.slane %v329, 0
    %v378 = vperm.slane %v330, 0
    %v379 = vperm.slane %v331, 0
    %v380 = vperm.slane %v332, 0
    %v381 = vperm.slane %v333, 0
    %v382 = vperm.slane %v334, 0
    %v383 = vperm.slane %v335, 0
    %v384 = vperm.slane %v336, 0
    %v385 = vperm.slane %v337, 0
    %v386 = vperm.slane %v338, 0
    %v387 = vperm.slane %v339, 0
    %v388 = vperm.slane %v340, 0
    %v389 = vperm.slane %v341, 0
    %v390 = vperm.slane %v342, 0
    %v392 = vpack.i.b16 %v343, %v343
    %v394 = vperm.slane %v392, 0
    %v396 = vpack.i.b16 %v344, %v344
    %v398 = vperm.slane %v396, 0
    %v400 = vpack.i.b16 %v345, %v345
    %v402 = vperm.slane %v400, 0
    %v404 = vpack.i.b16 %v346, %v346
    %v406 = vperm.slane %v404, 0
    %v408 = vpack.i.b16 %v347, %v347
    %v410 = vperm.slane %v408, 0
    %v412 = vpack.i.b16 %v348, %v348
    %v414 = vperm.slane %v412, 0
    %v416 = vpack.i.b16 %v349, %v349
    %v418 = vperm.slane %v416, 0
    %v420 = vpack.i.b16 %v350, %v350
    %v422 = vperm.slane %v420, 0
    %v424 = vpack.i.b16 %v351, %v351
    %v426 = vperm.slane %v424, 0
    %v428 = vpack.i.b16 %v352, %v352
    %v430 = vperm.slane %v428, 0
    %v432 = vpack.i.b16 %v353, %v353
    %v434 = vperm.slane %v432, 0
    %v436 = vpack.i.b16 %v354, %v354
    %v438 = vperm.slane %v436, 0
    %v440 = vpack.i.b16 %v355, %v355
    %v442 = vperm.slane %v440, 0
    %v444 = vpack.i.b16 %v356, %v356
    %v446 = vperm.slane %v444, 0
    %v448 = vpack.i.b16 %v357, %v357
    %v450 = vperm.slane %v448, 0
    %v452 = vpack.i.b16 %v358, %v358
    %v454 = vperm.slane %v452, 0
    %v456 = vpack.i.b16 %v359, %v359
    %v458 = vperm.slane %v456, 0
    %v460 = vpack.i.b16 %v360, %v360
    %v462 = vperm.slane %v460, 0
    %v464 = vpack.i.b16 %v361, %v361
    %v466 = vperm.slane %v464, 0
    %v468 = vpack.i.b16 %v362, %v362
    %v470 = vperm.slane %v468, 0
    %v472 = vpack.i.b16 %v363, %v363
    %v474 = vperm.slane %v472, 0
    %v476 = vpack.i.b16 %v364, %v364
    %v478 = vperm.slane %v476, 0
    %v480 = vpack.i.b16 %v365, %v365
    %v482 = vperm.slane %v480, 0
    %v484 = vpack.i.b16 %v366, %v366
    %v486 = vperm.slane %v484, 0
    %v488 = vpack.i.b16 %v367, %v367
    %v490 = vperm.slane %v488, 0
    %v492 = vpack.i.b16 %v368, %v368
    %v494 = vperm.slane %v492, 0
    %v496 = vpack.i.b16 %v369, %v369
    %v498 = vperm.slane %v496, 0
    %v500 = vpack.i.b16 %v370, %v370
    %v502 = vperm.slane %v500, 0
    %v504 = vpack.i.b16 %v371, %v371
    %v506 = vperm.slane %v504, 0
    %v508 = vpack.i.b16 %v372, %v372
    %v510 = vperm.slane %v508, 0
    %v512 = vpack.i.b16 %v373, %v373
    %v514 = vperm.slane %v512, 0
    %v516 = vpack.i.b16 %v374, %v374
    %v518 = vperm.slane %v516, 0
    %v520 = vpack.i.b16 %v375, %v375
    %v522 = vperm.slane %v520, 0
    %v524 = vpack.i.b16 %v376, %v376
    %v526 = vperm.slane %v524, 0
    %v528 = vpack.i.b16 %v377, %v377
    %v530 = vperm.slane %v528, 0
    %v532 = vpack.i.b16 %v378, %v378
    %v534 = vperm.slane %v532, 0
    %v536 = vpack.i.b16 %v379, %v379
    %v538 = vperm.slane %v536, 0
    %v540 = vpack.i.b16 %v380, %v380
    %v542 = vperm.slane %v540, 0
    %v544 = vpack.i.b16 %v381, %v381
    %v546 = vperm.slane %v544, 0
    %v548 = vpack.i.b16 %v382, %v382
    %v550 = vperm.slane %v548, 0
    %v552 = vpack.i.b16 %v383, %v383
    %v554 = vperm.slane %v552, 0
    %v556 = vpack.i.b16 %v384, %v384
    %v558 = vperm.slane %v556, 0
    %v560 = vpack.i.b16 %v385, %v385
    %v562 = vperm.slane %v560, 0
    %v564 = vpack.i.b16 %v386, %v386
    %v566 = vperm.slane %v564, 0
    %v568 = vpack.i.b16 %v387, %v387
    %v570 = vperm.slane %v568, 0
    %v572 = vpack.i.b16 %v388, %v388
    %v574 = vperm.slane %v572, 0
    %v576 = vpack.i.b16 %v389, %v389
    %v578 = vperm.slane %v576, 0
    %v580 = vpack.i.b16 %v390, %v390
    %v582 = vperm.slane %v580, 0
    %584 = vst [vmem:[#allocation1] ss:$4 sm:$0xff] %v394
    %s586 = scalar_lea.vmem [#allocation1], 1
    %587 = vst [vmem:[%s586] ss:$4 sm:$0xff] %v398
    %s589 = scalar_lea.vmem [#allocation1], 2
    %590 = vst [vmem:[%s589] ss:$4 sm:$0xff] %v402
    %s592 = scalar_lea.vmem [#allocation1], 3
    %593 = vst [vmem:[%s592] ss:$4 sm:$0xff] %v406
    %v594 = vld [vmem:[#allocation1] sm:$0xff]
    %s596 = scalar_lea.vmem [#allocation1], 32
    %597 = vst [vmem:[%s596] ss:$4 sm:$0xff] %v410
    %s599 = scalar_lea.vmem [#allocation1], 33
    %600 = vst [vmem:[%s599] ss:$4 sm:$0xff] %v414
    %s602 = scalar_lea.vmem [#allocation1], 34
    %603 = vst [vmem:[%s602] ss:$4 sm:$0xff] %v418
    %s605 = scalar_lea.vmem [#allocation1], 35
    %606 = vst [vmem:[%s605] ss:$4 sm:$0xff] %v422
    %v607 = vld [vmem:[#allocation1 + $0x20] sm:$0xff]
    %609 = vst [vmem:[#allocation1] ss:$4 sm:$0xff] %v426
    %611 = vst [vmem:[%s586] ss:$4 sm:$0xff] %v430
    %613 = vst [vmem:[%s589] ss:$4 sm:$0xff] %v434
    %615 = vst [vmem:[%s592] ss:$4 sm:$0xff] %v438
    %v616 = vld [vmem:[#allocation1] sm:$0xff]
    %618 = vst [vmem:[%s596] ss:$4 sm:$0xff] %v442
    %620 = vst [vmem:[%s599] ss:$4 sm:$0xff] %v446
    %622 = vst [vmem:[%s602] ss:$4 sm:$0xff] %v450
    %624 = vst [vmem:[%s605] ss:$4 sm:$0xff] %v454
    %v625 = vld [vmem:[#allocation1 + $0x20] sm:$0xff]
    %627 = vst [vmem:[#allocation1] ss:$4 sm:$0xff] %v458
    %629 = vst [vmem:[%s586] ss:$4 sm:$0xff] %v462
    %631 = vst [vmem:[%s589] ss:$4 sm:$0xff] %v466
    %633 = vst [vmem:[%s592] ss:$4 sm:$0xff] %v470
    %v634 = vld [vmem:[#allocation1] sm:$0xff]
    %636 = vst [vmem:[%s596] ss:$4 sm:$0xff] %v474
    %638 = vst [vmem:[%s599] ss:$4 sm:$0xff] %v478
    %640 = vst [vmem:[%s602] ss:$4 sm:$0xff] %v482
    %642 = vst [vmem:[%s605] ss:$4 sm:$0xff] %v486
    %v643 = vld [vmem:[#allocation1 + $0x20] sm:$0xff]
    %645 = vst [vmem:[#allocation1] ss:$4 sm:$0xff] %v490
    %647 = vst [vmem:[%s586] ss:$4 sm:$0xff] %v494
    %649 = vst [vmem:[%s589] ss:$4 sm:$0xff] %v498
    %651 = vst [vmem:[%s592] ss:$4 sm:$0xff] %v502
    %v652 = vld [vmem:[#allocation1] sm:$0xff]
    %654 = vst [vmem:[%s596] ss:$4 sm:$0xff] %v506
    %656 = vst [vmem:[%s599] ss:$4 sm:$0xff] %v510
    %658 = vst [vmem:[%s602] ss:$4 sm:$0xff] %v514
    %660 = vst [vmem:[%s605] ss:$4 sm:$0xff] %v518
    %v661 = vld [vmem:[#allocation1 + $0x20] sm:$0xff]
    %663 = vst [vmem:[#allocation1] ss:$4 sm:$0xff] %v522
    %665 = vst [vmem:[%s586] ss:$4 sm:$0xff] %v526
    %667 = vst [vmem:[%s589] ss:$4 sm:$0xff] %v530
    %669 = vst [vmem:[%s592] ss:$4 sm:$0xff] %v534
    %v670 = vld [vmem:[#allocation1] sm:$0xff]
    %672 = vst [vmem:[%s596] ss:$4 sm:$0xff] %v538
    %674 = vst [vmem:[%s599] ss:$4 sm:$0xff] %v542
    %676 = vst [vmem:[%s602] ss:$4 sm:$0xff] %v546
    %678 = vst [vmem:[%s605] ss:$4 sm:$0xff] %v550
    %v679 = vld [vmem:[#allocation1 + $0x20] sm:$0xff]
    %681 = vst [vmem:[#allocation1] ss:$4 sm:$0xff] %v554
    %683 = vst [vmem:[%s586] ss:$4 sm:$0xff] %v558
    %685 = vst [vmem:[%s589] ss:$4 sm:$0xff] %v562
    %687 = vst [vmem:[%s592] ss:$4 sm:$0xff] %v566
    %v688 = vld [vmem:[#allocation1] sm:$0xff]
    %690 = vst [vmem:[%s596] ss:$4 sm:$0xff] %v570
    %692 = vst [vmem:[%s599] ss:$4 sm:$0xff] %v574
    %694 = vst [vmem:[%s602] ss:$4 sm:$0xff] %v578
    %696 = vst [vmem:[%s605] ss:$4 sm:$0xff] %v582
    %v697 = vld [vmem:[#allocation1 + $0x20] sm:$0xff]
    %vm710 = vcmask 257024
    %711 = vst.msk [vmem:[#allocation5] sm:$0xf] %vm710, %v594
    %712 = vst.msk [vmem:[#allocation5 + $0x4] sm:$0xf] %vm710, %v607
    %713 = vst.msk [vmem:[#allocation5 + $0x8] sm:$0xf] %vm710, %v616
    %714 = vst.msk [vmem:[#allocation5 + $0xc] sm:$0xf] %vm710, %v625
    %715 = vst.msk [vmem:[#allocation5 + $0x10] sm:$0xf] %vm710, %v634
    %716 = vst.msk [vmem:[#allocation5 + $0x14] sm:$0xf] %vm710, %v643
    %717 = vst.msk [vmem:[#allocation5 + $0x18] sm:$0xf] %vm710, %v652
    %718 = vst.msk [vmem:[#allocation5 + $0x1c] sm:$0xf] %vm710, %v661
    %719 = vst.msk [vmem:[#allocation5 + $0x20] sm:$0xf] %vm710, %v670
    %720 = vst.msk [vmem:[#allocation5 + $0x24] sm:$0xf] %vm710, %v679
    %721 = vst.msk [vmem:[#allocation5 + $0x28] sm:$0xf] %vm710, %v688
    %722 = vst.msk [vmem:[#allocation5 + $0x2c] sm:$0xf] %vm710, %v697
    // Predicated region
    $region10: #{tpu_custom_call.1} parent=1 // pred_check
      _
    $region11: #{tpu_custom_call.1} parent=1 // pred_check_branch
      %724 = sbr.rel (0) target = $region13
    $region12: #{tpu_custom_call.1} parent=1 // pred_region
      %726 = vsyncadd [#allocation4], 0
      %s727 = sshll.u32 [#allocation5], 4
      %s728 = int_to_ptr.vmem [resolvable:$true] %s727
      %s729 = sshll.u32 %s1, 4
      %s730 = int_to_ptr.hbm [resolvable:$true] %s729
      %735 = dma.vmem_to_hbm [thread:$0]  %s728, 768, %s730, [#allocation4], 64, 64, 4
    $region13: #{tpu_custom_call.1} parent=1 // pred_fallthru
      _
    // Predicated region
    $region14: #{tpu_custom_call.1} parent=1 // pred_check
      _
    $region15: #{tpu_custom_call.1} parent=1 // pred_check_branch
      %737 = sbr.rel (0) target = $region17
    $region16: #{tpu_custom_call.1} parent=1 // pred_region
      %739 = dma.done [#allocation4], 768
    $region17: #{tpu_custom_call.1} parent=1 // pred_fallthru
      _
    %740 = vsyncpa [#allocation3], 1
    %741 = vsyncpa [#allocation4], 1

// kernel: tpu_custom_call.1
$region0: #{tpu_custom_call.1}
  #allocation0 [shape = 'u32[]', space=smem, size = 0x4, offset = 0x4, fixed_abs, tag = 'smem constant byte address 0x4 - core index']
  #allocation1 [shape = 'u32[72,128]{1,0:T(1,128)}', space=vmem, size = 0x9000, scoped, tag = 'internal scratch']
  %s0 = inlined_call_operand.hbm [shape: bf16[2,4,8,32], index: 0, kind: input, shape index: {}]
  %s1 = inlined_call_operand.vmem [shape: bf16[2,8,8,16], index: 1, kind: input, shape index: {}]
  %s2 = inlined_call_operand.vmem [shape: bf16[3,3,32,16], index: 2, kind: input, shape index: {}]
  %s3 = inlined_call_operand.vmem [shape: bf16[3,3,16,16], index: 3, kind: input, shape index: {}]
  %s4 = inlined_call_operand.vmem [shape: f32[1,16], index: 4, kind: input, shape index: {}]
  %s5 = inlined_call_operand.vmem [shape: f32[1,16], index: 5, kind: input, shape index: {}]
  %s6 = inlined_call_operand.vmem [shape: bf16[3,3,16,16], index: 6, kind: input, shape index: {}]
  %s7 = inlined_call_operand.vmem [shape: f32[1,16], index: 7, kind: input, shape index: {}]
  %s8 = inlined_call_operand.vmem [shape: f32[1,16], index: 8, kind: input, shape index: {}]
  %s9 = inlined_call_operand.hbm [shape: bf16[2,8,8,16], index: 9, kind: output, shape index: {}]
  %s10 = sld [smem:[#allocation0]]
  $region73: #{tpu_custom_call.1} parent=0
    _
  %s12 = ssub.s32 1, %s10
  %s13 = scalar_select 0, %s12, %s10
  $region1: #{tpu_custom_call.1} parent=0
    #allocation2 [shape = 'u8[16384]{0}', space=vmem, size = 0x4000, scoped, tag = 'input window, operand 0']
    #allocation3 [shape = 's32[2]{0}', space=sflag, size = 0x8, scoped, tag = 'scoped memory for tpu_custom_call.1']
    #allocation4 [shape = 's32[2]{0}', space=sflag, size = 0x8, scoped, tag = 'scoped memory for tpu_custom_call.1']
    #allocation5 [shape = 'u8[32768]{0}', space=vmem, size = 0x8000, scoped, tag = 'output window, operand 0']
    %14 = vsyncpa [#allocation3], 0
    %s15 = scalar_lea.sflag [#allocation3], 1
    %16 = vsyncpa %s15, 0
    %17 = vsyncpa [#allocation4], 0
    %s18 = scalar_lea.sflag [#allocation4], 1
    %19 = vsyncpa %s18, 0
    loop: start=0, step=1, limit=4
    $region2: #{tpu_custom_call.1} parent=1 // loop_pre_header
      _
    $region3: #{tpu_custom_call.1} parent=1 // loop_header
      %s21 = sphi 0, %s25
      %p22 = scmp.ge.s32.totalorder %s21, 4
      %s28 = sphi 0, %s40
      %s29 = sphi 0, %s36
      %s30 = sphi 0, %s28
      %s31 = sphi 0, %s29
      %s32 = sphi 0, %s30
      %s33 = sphi 0, %s31
      %s43 = sphi 0, %s45
      %s46 = sphi 0, %s43
      %s47 = sphi 0, %s46
      %s63 = sphi 0, %s47
      %s69 = sphi 0, %s71
      %s72 = sphi 0, %s69
      %s73 = sphi 0, %s72
      %s89 = sphi 0, %s73
      %s93 = sphi 0, %s93
      %s95 = sphi 0, %s93
      %s96 = sphi 0, %s95
      %s110 = sphi 0, %s96
      %s114 = sphi 0, %s114
      %s116 = sphi 0, %s114
      %s117 = sphi 0, %s116
      %s131 = sphi 0, %s117
      %s135 = sphi 0, %s135
      %s137 = sphi 0, %s135
      %s138 = sphi 0, %s137
      %s152 = sphi 0, %s138
      %s156 = sphi 0, %s156
      %s158 = sphi 0, %s156
      %s159 = sphi 0, %s158
      %s173 = sphi 0, %s159
      %s177 = sphi 0, %s177
      %s179 = sphi 0, %s177
      %s180 = sphi 0, %s179
      %s194 = sphi 0, %s180
      %s198 = sphi 0, %s198
      %s200 = sphi 0, %s198
      %s201 = sphi 0, %s200
      %s215 = sphi 0, %s201
      %s219 = sphi 0, %s219
      %s221 = sphi 0, %s219
      %s222 = sphi 0, %s221
      %s236 = sphi 0, %s222
      %s244 = sphi 0, %s246
      %s247 = sphi 0, %s244
      %s248 = sphi 0, %s247
      %s264 = sphi 0, %s248
    $region4: #{tpu_custom_call.1} parent=1 // loop_header_branch
      %24 = sbr.rel (%p22) target = $region8
    $region5: #{tpu_custom_call.1} parent=1 // loop_body
      %s26 = ssub.s32 %s21, 1
      %s27 = ssub.s32 %s21, 2
      %s34 = sadd.s32 1, %s29
      %p35 = scmp.ge.s32.totalorder %s34, 1
      %s36 = scalar_select %p35, 0, %s34
      %s37 = sadd.s32 1, %s28
      %s38 = scalar_select %p35, %s37, %s28
      %p39 = scmp.ge.s32.totalorder %s38, 2
      %s40 = scalar_select %p39, 0, %s38
      %s41 = ssub.s32 %s28, %s40
      %p42 = scmp.eq.s32.totalorder %s41, 0
      %s44 = sadd.s32 %s43, 1
      %s45 = scalar_select %p42, %s43, %s44
      %p48 = pneg %p42
      %p49 = scmp.eq.s32.totalorder %s21, 1
      %p50 = por %p48, %p49
      %p51 = scmp.ne.s32.totalorder %s43, %s46
      %p52 = scmp.eq.s32.totalorder %s21, 0
      %p53 = por %p51, %p52
      %p54 = scmp.ne.s32.totalorder %s43, %s46
      %p55 = scmp.eq.s32.totalorder %s26, 1
      %p56 = por %p54, %p55
      %p57 = scmp.ne.s32.totalorder %s46, %s47
      %p58 = scmp.eq.s32.totalorder %s26, 0
      %p59 = por %p57, %p58
      %p60 = scmp.ne.s32.totalorder %s46, %s47
      %p61 = scmp.eq.s32.totalorder %s27, 1
      %p62 = por %p60, %p61
      %p64 = scmp.ne.s32.totalorder %s47, %s63
      %p65 = scmp.eq.s32.totalorder %s27, 0
      %p66 = por %p64, %p65
      %s67 = ssub.s32 %s28, %s40
      %p68 = scmp.eq.s32.totalorder %s67, 0
      %s70 = sadd.s32 %s69, 1
      %s71 = scalar_select %p68, %s69, %s70
      %p74 = pneg %p68
      %p75 = scmp.eq.s32.totalorder %s21, 1
      %p76 = por %p74, %p75
      %p77 = scmp.ne.s32.totalorder %s69, %s72
      %p78 = scmp.eq.s32.totalorder %s21, 0
      %p79 = por %p77, %p78
      %p80 = scmp.ne.s32.totalorder %s69, %s72
      %p81 = scmp.eq.s32.totalorder %s26, 1
      %p82 = por %p80, %p81
      %p83 = scmp.ne.s32.totalorder %s72, %s73
      %p84 = scmp.eq.s32.totalorder %s26, 0
      %p85 = por %p83, %p84
      %p86 = scmp.ne.s32.totalorder %s72, %s73
      %p87 = scmp.eq.s32.totalorder %s27, 1
      %p88 = por %p86, %p87
      %p90 = scmp.ne.s32.totalorder %s73, %s89
      %p91 = scmp.eq.s32.totalorder %s27, 0
      %p92 = por %p90, %p91
      %s94 = sadd.s32 %s93, 1
      %p97 = scmp.eq.s32.totalorder %s21, 1
      %p98 = scmp.ne.s32.totalorder %s93, %s95
      %p99 = scmp.eq.s32.totalorder %s21, 0
      %p100 = por %p98, %p99
      %p101 = scmp.ne.s32.totalorder %s93, %s95
      %p102 = scmp.eq.s32.totalorder %s26, 1
      %p103 = por %p101, %p102
      %p104 = scmp.ne.s32.totalorder %s95, %s96
      %p105 = scmp.eq.s32.totalorder %s26, 0
      %p106 = por %p104, %p105
      %p107 = scmp.ne.s32.totalorder %s95, %s96
      %p108 = scmp.eq.s32.totalorder %s27, 1
      %p109 = por %p107, %p108
      %p111 = scmp.ne.s32.totalorder %s96, %s110
      %p112 = scmp.eq.s32.totalorder %s27, 0
      %p113 = por %p111, %p112
      %s115 = sadd.s32 %s114, 1
      %p118 = scmp.eq.s32.totalorder %s21, 1
      %p119 = scmp.ne.s32.totalorder %s114, %s116
      %p120 = scmp.eq.s32.totalorder %s21, 0
      %p121 = por %p119, %p120
      %p122 = scmp.ne.s32.totalorder %s114, %s116
      %p123 = scmp.eq.s32.totalorder %s26, 1
      %p124 = por %p122, %p123
      %p125 = scmp.ne.s32.totalorder %s116, %s117
      %p126 = scmp.eq.s32.totalorder %s26, 0
      %p127 = por %p125, %p126
      %p128 = scmp.ne.s32.totalorder %s116, %s117
      %p129 = scmp.eq.s32.totalorder %s27, 1
      %p130 = por %p128, %p129
      %p132 = scmp.ne.s32.totalorder %s117, %s131
      %p133 = scmp.eq.s32.totalorder %s27, 0
      %p134 = por %p132, %p133
      %s136 = sadd.s32 %s135, 1
      %p139 = scmp.eq.s32.totalorder %s21, 1
      %p140 = scmp.ne.s32.totalorder %s135, %s137
      %p141 = scmp.eq.s32.totalorder %s21, 0
      %p142 = por %p140, %p141
      %p143 = scmp.ne.s32.totalorder %s135, %s137
      %p144 = scmp.eq.s32.totalorder %s26, 1
      %p145 = por %p143, %p144
      %p146 = scmp.ne.s32.totalorder %s137, %s138
      %p147 = scmp.eq.s32.totalorder %s26, 0
      %p148 = por %p146, %p147
      %p149 = scmp.ne.s32.totalorder %s137, %s138
      %p150 = scmp.eq.s32.totalorder %s27, 1
      %p151 = por %p149, %p150
      %p153 = scmp.ne.s32.totalorder %s138, %s152
      %p154 = scmp.eq.s32.totalorder %s27, 0
      %p155 = por %p153, %p154
      %s157 = sadd.s32 %s156, 1
      %p160 = scmp.eq.s32.totalorder %s21, 1
      %p161 = scmp.ne.s32.totalorder %s156, %s158
      %p162 = scmp.eq.s32.totalorder %s21, 0
      %p163 = por %p161, %p162
      %p164 = scmp.ne.s32.totalorder %s156, %s158
      %p165 = scmp.eq.s32.totalorder %s26, 1
      %p166 = por %p164, %p165
      %p167 = scmp.ne.s32.totalorder %s158, %s159
      %p168 = scmp.eq.s32.totalorder %s26, 0
      %p169 = por %p167, %p168
      %p170 = scmp.ne.s32.totalorder %s158, %s159
      %p171 = scmp.eq.s32.totalorder %s27, 1
      %p172 = por %p170, %p171
      %p174 = scmp.ne.s32.totalorder %s159, %s173
      %p175 = scmp.eq.s32.totalorder %s27, 0
      %p176 = por %p174, %p175
      %s178 = sadd.s32 %s177, 1
      %p181 = scmp.eq.s32.totalorder %s21, 1
      %p182 = scmp.ne.s32.totalorder %s177, %s179
      %p183 = scmp.eq.s32.totalorder %s21, 0
      %p184 = por %p182, %p183
      %p185 = scmp.ne.s32.totalorder %s177, %s179
      %p186 = scmp.eq.s32.totalorder %s26, 1
      %p187 = por %p185, %p186
      %p188 = scmp.ne.s32.totalorder %s179, %s180
      %p189 = scmp.eq.s32.totalorder %s26, 0
      %p190 = por %p188, %p189
      %p191 = scmp.ne.s32.totalorder %s179, %s180
      %p192 = scmp.eq.s32.totalorder %s27, 1
      %p193 = por %p191, %p192
      %p195 = scmp.ne.s32.totalorder %s180, %s194
      %p196 = scmp.eq.s32.totalorder %s27, 0
      %p197 = por %p195, %p196
      %s199 = sadd.s32 %s198, 1
      %p202 = scmp.eq.s32.totalorder %s21, 1
      %p203 = scmp.ne.s32.totalorder %s198, %s200
      %p204 = scmp.eq.s32.totalorder %s21, 0
      %p205 = por %p203, %p204
      %p206 = scmp.ne.s32.totalorder %s198, %s200
      %p207 = scmp.eq.s32.totalorder %s26, 1
      %p208 = por %p206, %p207
      %p209 = scmp.ne.s32.totalorder %s200, %s201
      %p210 = scmp.eq.s32.totalorder %s26, 0
      %p211 = por %p209, %p210
      %p212 = scmp.ne.s32.totalorder %s200, %s201
      %p213 = scmp.eq.s32.totalorder %s27, 1
      %p214 = por %p212, %p213
      %p216 = scmp.ne.s32.totalorder %s201, %s215
      %p217 = scmp.eq.s32.totalorder %s27, 0
      %p218 = por %p216, %p217
      %s220 = sadd.s32 %s219, 1
      %p223 = scmp.eq.s32.totalorder %s21, 1
      %p224 = scmp.ne.s32.totalorder %s219, %s221
      %p225 = scmp.eq.s32.totalorder %s21, 0
      %p226 = por %p224, %p225
      %p227 = scmp.ne.s32.totalorder %s219, %s221
      %p228 = scmp.eq.s32.totalorder %s26, 1
      %p229 = por %p227, %p228
      %p230 = scmp.ne.s32.totalorder %s221, %s222
      %p231 = scmp.eq.s32.totalorder %s26, 0
      %p232 = por %p230, %p231
      %p233 = scmp.ne.s32.totalorder %s221, %s222
      %p234 = scmp.eq.s32.totalorder %s27, 1
      %p235 = por %p233, %p234
      %p237 = scmp.ne.s32.totalorder %s222, %s236
      %p238 = scmp.eq.s32.totalorder %s27, 0
      %p239 = por %p237, %p238
      %s240 = ssub.s32 %s28, %s40
      %s241 = ssub.s32 %s29, %s36
      %s242 = sor.u32 %s240, %s241
      %p243 = scmp.eq.s32.totalorder %s242, 0
      %s245 = sadd.s32 %s244, 1
      %s246 = scalar_select %p243, %s244, %s245
      %p249 = pneg %p243
      %p250 = scmp.eq.s32.totalorder %s21, 1
      %p251 = por %p249, %p250
      %p252 = scmp.ne.s32.totalorder %s244, %s247
      %p253 = scmp.eq.s32.totalorder %s21, 0
      %p254 = por %p252, %p253
      %p255 = scmp.ne.s32.totalorder %s244, %s247
      %p256 = scmp.eq.s32.totalorder %s26, 1
      %p257 = por %p255, %p256
      %p258 = scmp.ne.s32.totalorder %s247, %s248
      %p259 = scmp.eq.s32.totalorder %s26, 0
      %p260 = por %p258, %p259
      %p261 = scmp.ne.s32.totalorder %s247, %s248
      %p262 = scmp.eq.s32.totalorder %s27, 1
      %p263 = por %p261, %p262
      %p265 = scmp.ne.s32.totalorder %s248, %s264
      %p266 = scmp.eq.s32.totalorder %s27, 0
      %p267 = por %p265, %p266
      %p268 = scmp.le.s32.totalorder 1, %s21
      %p269 = scmp.lt.s32.totalorder %s21, 3
      %p270 = pnand %p268, %p269
      %p271 = pneg %p270
      // Predicated region
      $region9: #{tpu_custom_call.1} parent=5 // pred_check
        _
      $region10: #{tpu_custom_call.1} parent=5 // pred_check_branch
        %273 = sbr.rel (%p270) target = $region12
      $region11: #{tpu_custom_call.1} parent=5 // pred_region
        %s274 = ssub.s32 %s21, 1
        // Predicated region
        $region13: #{tpu_custom_call.1} parent=11 // pred_check
          %p275 = pneg %p106
        $region14: #{tpu_custom_call.1} parent=11 // pred_check_branch
          %277 = sbr.rel (%p275) target = $region16
        $region15: #{tpu_custom_call.1} parent=11 // pred_region
          _
        $region16: #{tpu_custom_call.1} parent=11 // pred_fallthru
          _
        // Predicated region
        $region17: #{tpu_custom_call.1} parent=11 // pred_check
          %p278 = pneg %p127
        $region18: #{tpu_custom_call.1} parent=11 // pred_check_branch
          %280 = sbr.rel (%p278) target = $region20
        $region19: #{tpu_custom_call.1} parent=11 // pred_region
          _
        $region20: #{tpu_custom_call.1} parent=11 // pred_fallthru
          _
        // Predicated region
        $region21: #{tpu_custom_call.1} parent=11 // pred_check
          %p281 = pneg %p148
        $region22: #{tpu_custom_call.1} parent=11 // pred_check_branch
          %283 = sbr.rel (%p281) target = $region24
        $region23: #{tpu_custom_call.1} parent=11 // pred_region
          _
        $region24: #{tpu_custom_call.1} parent=11 // pred_fallthru
          _
        // Predicated region
        $region25: #{tpu_custom_call.1} parent=11 // pred_check
          %p284 = pneg %p169
        $region26: #{tpu_custom_call.1} parent=11 // pred_check_branch
          %286 = sbr.rel (%p284) target = $region28
        $region27: #{tpu_custom_call.1} parent=11 // pred_region
          _
        $region28: #{tpu_custom_call.1} parent=11 // pred_fallthru
          _
        // Predicated region
        $region29: #{tpu_custom_call.1} parent=11 // pred_check
          %p287 = pneg %p190
        $region30: #{tpu_custom_call.1} parent=11 // pred_check_branch
          %289 = sbr.rel (%p287) target = $region32
        $region31: #{tpu_custom_call.1} parent=11 // pred_region
          _
        $region32: #{tpu_custom_call.1} parent=11 // pred_fallthru
          _
        // Predicated region
        $region33: #{tpu_custom_call.1} parent=11 // pred_check
          %p290 = pneg %p211
        $region34: #{tpu_custom_call.1} parent=11 // pred_check_branch
          %292 = sbr.rel (%p290) target = $region36
        $region35: #{tpu_custom_call.1} parent=11 // pred_region
          _
        $region36: #{tpu_custom_call.1} parent=11 // pred_fallthru
          _
        // Predicated region
        $region37: #{tpu_custom_call.1} parent=11 // pred_check
          %p293 = pneg %p232
        $region38: #{tpu_custom_call.1} parent=11 // pred_check_branch
          %295 = sbr.rel (%p293) target = $region40
        $region39: #{tpu_custom_call.1} parent=11 // pred_region
          _
        $region40: #{tpu_custom_call.1} parent=11 // pred_fallthru
          _
      $region12: #{tpu_custom_call.1} parent=5 // pred_fallthru
        _
      %p296 = scmp.lt.s32.totalorder %s21, 2
      // Predicated region
      $region41: #{tpu_custom_call.1} parent=5 // pred_check
        %p297 = pneg %p296
      $region42: #{tpu_custom_call.1} parent=5 // pred_check_branch
        %299 = sbr.rel (%p297) target = $region44
      $region43: #{tpu_custom_call.1} parent=5 // pred_region
        // Predicated region
        $region45: #{tpu_custom_call.1} parent=43 // pred_check
          %p300 = pneg %p53
        $region46: #{tpu_custom_call.1} parent=43 // pred_check_branch
          %302 = sbr.rel (%p300) target = $region48
        $region47: #{tpu_custom_call.1} parent=43 // pred_region
          %s303 = sand.u32 %s43, 1
          %s304 = scalar_lea.sflag [#allocation3], %s303
          %s305 = sand.u32 %s43, 1
          %s306 = smul.addr %s305, 16
          %s307 = scalar_lea.vmem [#allocation2], %s306
          %309 = vsyncadd %s304, 0
          %s310 = smul.addr %s28, 4
          %s311 = smul.addr %s310, 4
          %s312 = scalar_lea.hbm %s0, %s311
          %s313 = sshll.u32 %s312, 4
          %s314 = int_to_ptr.hbm [resolvable:$true] %s313
          %s315 = sshll.u32 %s307, 4
          %s316 = int_to_ptr.vmem [resolvable:$true] %s315
          %321 = dma.hbm_to_vmem [thread:$0]  %s314, 256, %s316, %s304, 64, 64, 4
        $region48: #{tpu_custom_call.1} parent=43 // pred_fallthru
          _
        // Predicated region
        $region49: #{tpu_custom_call.1} parent=43 // pred_check
          %p322 = pneg %p79
        $region50: #{tpu_custom_call.1} parent=43 // pred_check_branch
          %324 = sbr.rel (%p322) target = $region52
        $region51: #{tpu_custom_call.1} parent=43 // pred_region
          %p325 = scmp.lt.s32.totalorder %s28, 1
          %s326 = scalar_select %p325, %s28, 1
          %s327 = smul.addr %s326, 8
          %s328 = smul.addr %s327, 4
          %s329 = scalar_lea.vmem %s1, %s328
        $region52: #{tpu_custom_call.1} parent=43 // pred_fallthru
          _
      $region44: #{tpu_custom_call.1} parent=5 // pred_fallthru
        _
      %p330 = scmp.le.s32.totalorder 1, %s21
      %p331 = scmp.lt.s32.totalorder %s21, 3
      %p332 = pnand %p330, %p331
      %p333 = pneg %p332
      // Predicated region
      $region53: #{tpu_custom_call.1} parent=5 // pred_check
        _
      $region54: #{tpu_custom_call.1} parent=5 // pred_check_branch
        %335 = sbr.rel (%p332) target = $region56
      $region55: #{tpu_custom_call.1} parent=5 // pred_region
        %s336 = ssub.s32 %s21, 1
        %s337 = sand.u32 %s46, 1
        %s338 = scalar_lea.sflag [#allocation3], %s337
        %s339 = sand.u32 %s46, 1
        %s340 = smul.addr %s339, 16
        %s341 = scalar_lea.vmem [#allocation2], %s340
        // Predicated region
        $region57: #{tpu_custom_call.1} parent=55 // pred_check
          %p342 = pneg %p59
        $region58: #{tpu_custom_call.1} parent=55 // pred_check_branch
          %344 = sbr.rel (%p342) target = $region60
        $region59: #{tpu_custom_call.1} parent=55 // pred_region
          %346 = dma.done %s338, 256
        $region60: #{tpu_custom_call.1} parent=55 // pred_fallthru
          _
        %s347 = sand.u32 %s46, 1
        %s348 = scalar_lea.sflag [#allocation3], %s347
        %s349 = sand.u32 %s46, 1
        %s350 = smul.addr %s349, 16
        %s351 = scalar_lea.vmem [#allocation2], %s350
        %p352 = pneg %p59
        %p353 = pneg %p56
        %p354 = scmp.lt.s32.totalorder %s30, 1
        %s355 = scalar_select %p354, %s30, 1
        %s356 = smul.addr %s355, 8
        %s357 = smul.addr %s356, 4
        %s358 = scalar_lea.vmem %s1, %s357
        %p359 = pneg %p85
        %p360 = pneg %p82
        %p361 = pneg %p106
        %p362 = pneg %p103
        %p363 = pneg %p127
        %p364 = pneg %p124
        %p365 = pneg %p148
        %p366 = pneg %p145
        %p367 = pneg %p169
        %p368 = pneg %p166
        %p369 = pneg %p190
        %p370 = pneg %p187
        %p371 = pneg %p211
        %p372 = pneg %p208
        %p373 = pneg %p232
        %p374 = pneg %p229
        %p375 = pneg %p260
        %p376 = pneg %p257
        %s377 = sand.u32 %s247, 1
        %s378 = scalar_lea.sflag [#allocation4], %s377
        %s379 = sand.u32 %s247, 1
        %s380 = smul.addr %s379, 32
        %s381 = scalar_lea.vmem [#allocation5], %s380
        %p382 = scmp.lt.s32.totalorder %s30, 1
        %s383 = scalar_select %p382, %s30, 1
        %s384 = smul.addr %s383, 8
        %s385 = smul.addr %s384, 4
        %s386 = scalar_lea.vmem %s1, %s385
        %s387 = smul.u32 8, %s31
        %v389 = vld [vmem:[%s341] sm:$0xf]
        %v390 = vld [vmem:[%s341 + $0x4] sm:$0xf]
        %v391 = vld [vmem:[%s341 + $0x8] sm:$0xf]
        %v392 = vld [vmem:[%s341 + $0xc] sm:$0xf]
        %v393 = vld [vmem:[%s386] sm:$0xf]
        %v394 = vld [vmem:[%s386 + $0x4] sm:$0xf]
        %v395 = vld [vmem:[%s386 + $0x8] sm:$0xf]
        %v396 = vld [vmem:[%s386 + $0xc] sm:$0xf]
        %v397 = vld [vmem:[%s386 + $0x10] sm:$0xf]
        %v398 = vld [vmem:[%s386 + $0x14] sm:$0xf]
        %v399 = vld [vmem:[%s386 + $0x18] sm:$0xf]
        %v400 = vld [vmem:[%s386 + $0x1c] sm:$0xf]
        %v402 = vshrl.u32 0, 16
        %v404 = vrot.slane %v402, 7
        %v405 = vshll.u32 0, 16
        %v407 = vor.u32 %v404, %v405
        %v409 = vshrl.u32 %v389, 16
        %v411 = vrot.slane %v409, 7
        %v412 = vshll.u32 %v389, 16
        %v414 = vor.u32 %v411, %v412
        %v416 = vshrl.u32 %v390, 16
        %v418 = vrot.slane %v416, 7
        %v419 = vshll.u32 %v390, 16
        %v421 = vor.u32 %v418, %v419
        %v423 = vshrl.u32 %v391, 16
        %v425 = vrot.slane %v423, 7
        %v426 = vshll.u32 %v391, 16
        %v428 = vor.u32 %v425, %v426
        %v430 = vshrl.u32 %v392, 16
        %v432 = vrot.slane %v430, 7
        %v433 = vshll.u32 %v392, 16
        %v435 = vor.u32 %v432, %v433
        %vm441 = vcmask 1040384
        %vm442 = vsmask.f32 256
        %vm443 = vmand %vm441, %vm442
        %v444 = vsel %vm443, 0, %v407
        %v445 = vsel %vm443, 0, %v414
        %v446 = vsel %vm443, 0, %v421
        %v447 = vsel %vm443, 0, %v428
        %v448 = vsel %vm443, 0, %v435
        %vm449 = vcmask 1044480
        %vm450 = vsmask.f32 4352
        %vm451 = vmand %vm449, %vm450
        %v452 = vsel %vm451, %v444, 0
        %v453 = vsel %vm451, %v445, 0
        %v454 = vsel %vm451, %v446, 0
        %v455 = vsel %vm451, %v447, 0
        %v456 = vsel %vm451, %v448, 0
        %v457 = vld [vmem:[%s2] sm:$0xf]
        %v458 = vld [vmem:[%s2 + $0x4] sm:$0xf]
        %v459 = vld [vmem:[%s2 + $0x8] sm:$0xf]
        %v460 = vld [vmem:[%s2 + $0xc] sm:$0xf]
        %v461 = vld [vmem:[%s2 + $0x10] sm:$0xf]
        %v462 = vld [vmem:[%s2 + $0x14] sm:$0xf]
        %v463 = vld [vmem:[%s2 + $0x18] sm:$0xf]
        %v464 = vld [vmem:[%s2 + $0x1c] sm:$0xf]
        %v465 = vld [vmem:[%s2 + $0x20] sm:$0xf]
        %v466 = vld [vmem:[%s2 + $0x24] sm:$0xf]
        %v467 = vld [vmem:[%s2 + $0x28] sm:$0xf]
        %v468 = vld [vmem:[%s2 + $0x2c] sm:$0xf]
        %v469 = vld [vmem:[%s2 + $0x30] sm:$0xf]
        %v470 = vld [vmem:[%s2 + $0x34] sm:$0xf]
        %v471 = vld [vmem:[%s2 + $0x38] sm:$0xf]
        %v472 = vld [vmem:[%s2 + $0x3c] sm:$0xf]
        %v473 = vld [vmem:[%s2 + $0x40] sm:$0xf]
        %v474 = vld [vmem:[%s2 + $0x44] sm:$0xf]
        %v475 = vld [vmem:[%s2 + $0x48] sm:$0xf]
        %v476 = vld [vmem:[%s2 + $0x4c] sm:$0xf]
        %v477 = vld [vmem:[%s2 + $0x50] sm:$0xf]
        %v478 = vld [vmem:[%s2 + $0x54] sm:$0xf]
        %v479 = vld [vmem:[%s2 + $0x58] sm:$0xf]
        %v480 = vld [vmem:[%s2 + $0x5c] sm:$0xf]
        %v481 = vld [vmem:[%s2 + $0x60] sm:$0xf]
        %v482 = vld [vmem:[%s2 + $0x64] sm:$0xf]
        %v483 = vld [vmem:[%s2 + $0x68] sm:$0xf]
        %v484 = vld [vmem:[%s2 + $0x6c] sm:$0xf]
        %v485 = vld [vmem:[%s2 + $0x70] sm:$0xf]
        %v486 = vld [vmem:[%s2 + $0x74] sm:$0xf]
        %v487 = vld [vmem:[%s2 + $0x78] sm:$0xf]
        %v488 = vld [vmem:[%s2 + $0x7c] sm:$0xf]
        %v489 = vld [vmem:[%s2 + $0x80] sm:$0xf]
        %v490 = vld [vmem:[%s2 + $0x84] sm:$0xf]
        %v491 = vld [vmem:[%s2 + $0x88] sm:$0xf]
        %v492 = vld [vmem:[%s2 + $0x8c] sm:$0xf]
        %v498 = vunpack.c.l.b16 %v452
        %v499 = vunpack.c.h.b16 %v452
        %v500 = vunpack.c.l.b16 %v453
        %v501 = vunpack.c.h.b16 %v453
        %v502 = vunpack.c.l.b16 %v454
        %v503 = vunpack.c.h.b16 %v454
        %v504 = vunpack.c.l.b16 %v455
        %v505 = vunpack.c.h.b16 %v455
        %v506 = vunpack.c.l.b16 %v456
        %v507 = vunpack.c.h.b16 %v456
        %v508 = vpack.c.b16 %v498, %v498
        %v509 = vpack.c.b16 %v499, %v499
        %v510 = vpack.c.b16 %v500, %v500
        %v511 = vpack.c.b16 %v501, %v501
        %v512 = vpack.c.b16 %v502, %v502
        %v513 = vpack.c.b16 %v503, %v503
        %v514 = vpack.c.b16 %v504, %v504
        %v515 = vpack.c.b16 %v505, %v505
        %v516 = vpack.c.b16 %v506, %v506
        %v517 = vpack.c.b16 %v507, %v507
        %vm518 = vsmask.f32 3328
        %vm519 = vsmask.f32 7440
        %vm520 = vmor %vm518, %vm519
        %v522 = vshrl.u32 %v508, 16
        %v524 = vrot.slane %v522, 4
        %v525 = vshll.u32 %v508, 16
        %v527 = vrot.slane %v525, 5
        %v528 = vor.u32 %v524, %v527
        %v529 = vrot.slane %v528, 4
        %v531 = vshll.u32 %v509, 16
        %v533 = vrot.slane %v531, 5
        %v534 = vsel %vm520, %v529, %v533
        %v536 = vshrl.u32 %v510, 16
        %v538 = vrot.slane %v536, 4
        %v539 = vshll.u32 %v510, 16
        %v541 = vrot.slane %v539, 5
        %v542 = vor.u32 %v538, %v541
        %v543 = vrot.slane %v542, 4
        %v545 = vshll.u32 %v511, 16
        %v547 = vrot.slane %v545, 5
        %v548 = vsel %vm520, %v543, %v547
        %v550 = vshrl.u32 %v512, 16
        %v552 = vrot.slane %v550, 4
        %v553 = vshll.u32 %v512, 16
        %v555 = vrot.slane %v553, 5
        %v556 = vor.u32 %v552, %v555
        %v557 = vrot.slane %v556, 4
        %v559 = vshll.u32 %v513, 16
        %v561 = vrot.slane %v559, 5
        %v562 = vsel %vm520, %v557, %v561
        %v564 = vshrl.u32 %v514, 16
        %v566 = vrot.slane %v564, 4
        %v567 = vshll.u32 %v514, 16
        %v569 = vrot.slane %v567, 5
        %v570 = vor.u32 %v566, %v569
        %v571 = vrot.slane %v570, 4
        %v573 = vshll.u32 %v515, 16
        %v575 = vrot.slane %v573, 5
        %v576 = vsel %vm520, %v571, %v575
        %v578 = vshrl.u32 %v516, 16
        %v580 = vrot.slane %v578, 4
        %v581 = vshll.u32 %v516, 16
        %v583 = vrot.slane %v581, 5
        %v584 = vor.u32 %v580, %v583
        %v585 = vrot.slane %v584, 4
        %v587 = vshll.u32 %v517, 16
        %v589 = vrot.slane %v587, 5
        %v590 = vsel %vm520, %v585, %v589
        %v591 = vunpack.c.l.b16 %v534
        %v592 = vunpack.c.l.b16 %v548
        %v593 = vunpack.c.l.b16 %v562
        %v594 = vunpack.c.l.b16 %v576
        %v595 = vunpack.c.l.b16 %v590
        %v596 = vpack.c.b16 %v591, %v591
        %v597 = vpack.c.b16 %v592, %v592
        %v598 = vpack.c.b16 %v593, %v593
        %v599 = vpack.c.b16 %v594, %v594
        %v600 = vpack.c.b16 %v595, %v595
        %v605 = vunpack.c.l.b16 %v461
        %v606 = vunpack.c.l.b16 %v462
        %v607 = vunpack.c.l.b16 %v463
        %v608 = vunpack.c.l.b16 %v464
        %v609 = vpack.c.b16 %v606, %v605
        %v610 = vpack.c.b16 %v608, %v607
        %vm613 = vcmask 261120
        %v615 = vsel %vm613, %v596, 0
        %v618 = vsel %vm613, %v597, 0
        %v621 = vsel %vm613, %v598, 0
        %v624 = vsel %vm613, %v599, 0
        %v627 = vsel %vm613, %v600, 0
        %629 = vmatpush.bf16.msra.mxu0 0
        %630 = vmatpush.bf16.msra.mxu0 0
        %631 = vmatpush.bf16.msra.mxu0 0
        %632 = vmatpush.bf16.msra.mxu0 0
        %633 = vmatpush.bf16.msra.mxu0 0
        %634 = vmatpush.bf16.msra.mxu0 0
        %635 = vmatpush.bf16.msra.mxu0 %v610
        %636 = vmatpush.bf16.msra.mxu0 %v609
        %637 = vmatmul.bf16.gmra.mxu0 %v615
        %v638 = vpop.f32.mrf.mxu0
        %v639 = vadd.f32 0.0, %v638
        %v640 = vpop.f32.mrf.mxu0
        %v641 = vadd.f32 0.0, %v640
        %642 = vmatmul.bf16.gmra.mxu0 %v618
        %v643 = vpop.f32.mrf.mxu0
        %v644 = vadd.f32 0.0, %v643
        %v645 = vpop.f32.mrf.mxu0
        %v646 = vadd.f32 0.0, %v645
        %647 = vmatmul.bf16.gmra.mxu0 %v621
        %v648 = vpop.f32.mrf.mxu0
        %v649 = vadd.f32 0.0, %v648
        %v650 = vpop.f32.mrf.mxu0
        %v651 = vadd.f32 0.0, %v650
        %652 = vmatmul.bf16.gmra.mxu0 %v624
        %v653 = vpop.f32.mrf.mxu0
        %v654 = vadd.f32 0.0, %v653
        %v655 = vpop.f32.mrf.mxu0
        %v656 = vadd.f32 0.0, %v655
        %657 = vmatmul.bf16.gmra.mxu0 %v627
        %v658 = vpop.f32.mrf.mxu0
        %v659 = vadd.f32 0.0, %v658
        %v660 = vpop.f32.mrf.mxu0
        %v661 = vadd.f32 0.0, %v660
        %662 = vdwg.mxu0
        %v667 = vunpack.c.l.b16 %v457
        %v668 = vunpack.c.l.b16 %v458
        %v669 = vunpack.c.l.b16 %v459
        %v670 = vunpack.c.l.b16 %v460
        %v671 = vpack.c.b16 %v668, %v667
        %v672 = vpack.c.b16 %v670, %v669
        %v675 = vsel %vm613, %v508, 0
        %v677 = vsel %vm613, %v510, 0
        %v679 = vsel %vm613, %v512, 0
        %v681 = vsel %vm613, %v514, 0
        %v683 = vsel %vm613, %v516, 0
        %685 = vmatpush.bf16.msra.mxu0 0
        %686 = vmatpush.bf16.msra.mxu0 0
        %687 = vmatpush.bf16.msra.mxu0 0
        %688 = vmatpush.bf16.msra.mxu0 0
        %689 = vmatpush.bf16.msra.mxu0 0
        %690 = vmatpush.bf16.msra.mxu0 0
        %691 = vmatpush.bf16.msra.mxu0 %v672
        %692 = vmatpush.bf16.msra.mxu0 %v671
        %693 = vmatmul.bf16.gmra.mxu0 %v675
        %v694 = vpop.f32.mrf.mxu0
        %v695 = vadd.f32 %v639, %v694
        %v696 = vpop.f32.mrf.mxu0
        %v697 = vadd.f32 %v641, %v696
        %698 = vmatmul.bf16.gmra.mxu0 %v677
        %v699 = vpop.f32.mrf.mxu0
        %v700 = vadd.f32 %v644, %v699
        %v701 = vpop.f32.mrf.mxu0
        %v702 = vadd.f32 %v646, %v701
        %703 = vmatmul.bf16.gmra.mxu0 %v679
        %v704 = vpop.f32.mrf.mxu0
        %v705 = vadd.f32 %v649, %v704
        %v706 = vpop.f32.mrf.mxu0
        %v707 = vadd.f32 %v651, %v706
        %708 = vmatmul.bf16.gmra.mxu0 %v681
        %v709 = vpop.f32.mrf.mxu0
        %v710 = vadd.f32 %v654, %v709
        %v711 = vpop.f32.mrf.mxu0
        %v712 = vadd.f32 %v656, %v711
        %713 = vmatmul.bf16.gmra.mxu0 %v683
        %v714 = vpop.f32.mrf.mxu0
        %v715 = vadd.f32 %v659, %v714
        %v716 = vpop.f32.mrf.mxu0
        %v717 = vadd.f32 %v661, %v716
        %718 = vdwg.mxu0
        %vm719 = vcmask 1042432
        %vm720 = vcmask 1046532
        %vm721 = vmor %vm719, %vm720
        %v722 = vrot.slane %v508, 5
        %v723 = vrot.slane %v722, 4
        %v724 = vrot.slane %v509, 5
        %v725 = vsel %vm721, %v723, %v724
        %v726 = vrot.slane %v510, 5
        %v727 = vrot.slane %v726, 4
        %v728 = vrot.slane %v511, 5
        %v729 = vsel %vm721, %v727, %v728
        %v730 = vrot.slane %v512, 5
        %v731 = vrot.slane %v730, 4
        %v732 = vrot.slane %v513, 5
        %v733 = vsel %vm721, %v731, %v732
        %v734 = vrot.slane %v514, 5
        %v735 = vrot.slane %v734, 4
        %v736 = vrot.slane %v515, 5
        %v737 = vsel %vm721, %v735, %v736
        %v738 = vrot.slane %v516, 5
        %v739 = vrot.slane %v738, 4
        %v740 = vrot.slane %v517, 5
        %v741 = vsel %vm721, %v739, %v740
        %v742 = vunpack.c.l.b16 %v725
        %v743 = vunpack.c.l.b16 %v729
        %v744 = vunpack.c.l.b16 %v733
        %v745 = vunpack.c.l.b16 %v737
        %v746 = vunpack.c.l.b16 %v741
        %v747 = vpack.c.b16 %v742, %v742
        %v748 = vpack.c.b16 %v743, %v743
        %v749 = vpack.c.b16 %v744, %v744
        %v750 = vpack.c.b16 %v745, %v745
        %v751 = vpack.c.b16 %v746, %v746
        %v756 = vunpack.c.l.b16 %v465
        %v757 = vunpack.c.l.b16 %v466
        %v758 = vunpack.c.l.b16 %v467
        %v759 = vunpack.c.l.b16 %v468
        %v760 = vpack.c.b16 %v757, %v756
        %v761 = vpack.c.b16 %v759, %v758
        %v765 = vsel %vm613, %v747, 0
        %v768 = vsel %vm613, %v748, 0
        %v771 = vsel %vm613, %v749, 0
        %v774 = vsel %vm613, %v750, 0
        %v777 = vsel %vm613, %v751, 0
        %779 = vmatpush.bf16.msra.mxu0 0
        %780 = vmatpush.bf16.msra.mxu0 0
        %781 = vmatpush.bf16.msra.mxu0 0
        %782 = vmatpush.bf16.msra.mxu0 0
        %783 = vmatpush.bf16.msra.mxu0 0
        %784 = vmatpush.bf16.msra.mxu0 0
        %785 = vmatpush.bf16.msra.mxu0 %v761
        %786 = vmatpush.bf16.msra.mxu0 %v760
        %787 = vmatmul.bf16.gmra.mxu0 %v765
        %v788 = vpop.f32.mrf.mxu0
        %v789 = vadd.f32 0.0, %v788
        %v790 = vpop.f32.mrf.mxu0
        %v791 = vadd.f32 0.0, %v790
        %792 = vmatmul.bf16.gmra.mxu0 %v768
        %v793 = vpop.f32.mrf.mxu0
        %v794 = vadd.f32 0.0, %v793
        %v795 = vpop.f32.mrf.mxu0
        %v796 = vadd.f32 0.0, %v795
        %797 = vmatmul.bf16.gmra.mxu0 %v771
        %v798 = vpop.f32.mrf.mxu0
        %v799 = vadd.f32 0.0, %v798
        %v800 = vpop.f32.mrf.mxu0
        %v801 = vadd.f32 0.0, %v800
        %802 = vmatmul.bf16.gmra.mxu0 %v774
        %v803 = vpop.f32.mrf.mxu0
        %v804 = vadd.f32 0.0, %v803
        %v805 = vpop.f32.mrf.mxu0
        %v806 = vadd.f32 0.0, %v805
        %807 = vmatmul.bf16.gmra.mxu0 %v777
        %v808 = vpop.f32.mrf.mxu0
        %v809 = vadd.f32 0.0, %v808
        %v810 = vpop.f32.mrf.mxu0
        %v811 = vadd.f32 0.0, %v810
        %812 = vdwg.mxu0
        %v813 = vadd.f32 %v695, %v789
        %v814 = vadd.f32 %v697, %v791
        %v815 = vadd.f32 %v700, %v794
        %v816 = vadd.f32 %v702, %v796
        %v817 = vadd.f32 %v705, %v799
        %v818 = vadd.f32 %v707, %v801
        %v819 = vadd.f32 %v710, %v804
        %v820 = vadd.f32 %v712, %v806
        %v821 = vadd.f32 %v715, %v809
        %v822 = vadd.f32 %v717, %v811
        %v823 = vpack.c.b16 %v500, %v498
        %v824 = vpack.c.b16 %v502, %v500
        %v825 = vpack.c.b16 %v504, %v502
        %v826 = vpack.c.b16 %v506, %v504
        %v827 = vpack.c.b16 %v498, %v506
        %v832 = vunpack.c.l.b16 %v469
        %v833 = vunpack.c.l.b16 %v470
        %v834 = vunpack.c.l.b16 %v471
        %v835 = vunpack.c.l.b16 %v472
        %v836 = vpack.c.b16 %v833, %v832
        %v837 = vpack.c.b16 %v835, %v834
        %v841 = vsel %vm613, %v823, 0
        %v844 = vsel %vm613, %v824, 0
        %v847 = vsel %vm613, %v825, 0
        %v850 = vsel %vm613, %v826, 0
        %v853 = vsel %vm613, %v827, 0
        %855 = vmatpush.bf16.msra.mxu0 0
        %856 = vmatpush.bf16.msra.mxu0 0
        %857 = vmatpush.bf16.msra.mxu0 0
        %858 = vmatpush.bf16.msra.mxu0 0
        %859 = vmatpush.bf16.msra.mxu0 0
        %860 = vmatpush.bf16.msra.mxu0 0
        %861 = vmatpush.bf16.msra.mxu0 %v837
        %862 = vmatpush.bf16.msra.mxu0 %v836
        %863 = vmatmul.bf16.gmra.mxu0 %v841
        %v864 = vpop.f32.mrf.mxu0
        %v865 = vadd.f32 0.0, %v864
        %v866 = vpop.f32.mrf.mxu0
        %v867 = vadd.f32 0.0, %v866
        %868 = vmatmul.bf16.gmra.mxu0 %v844
        %v869 = vpop.f32.mrf.mxu0
        %v870 = vadd.f32 0.0, %v869
        %v871 = vpop.f32.mrf.mxu0
        %v872 = vadd.f32 0.0, %v871
        %873 = vmatmul.bf16.gmra.mxu0 %v847
        %v874 = vpop.f32.mrf.mxu0
        %v875 = vadd.f32 0.0, %v874
        %v876 = vpop.f32.mrf.mxu0
        %v877 = vadd.f32 0.0, %v876
        %878 = vmatmul.bf16.gmra.mxu0 %v850
        %v879 = vpop.f32.mrf.mxu0
        %v880 = vadd.f32 0.0, %v879
        %v881 = vpop.f32.mrf.mxu0
        %v882 = vadd.f32 0.0, %v881
        %883 = vmatmul.bf16.gmra.mxu0 %v853
        %v884 = vpop.f32.mrf.mxu0
        %v885 = vadd.f32 0.0, %v884
        %v886 = vpop.f32.mrf.mxu0
        %v887 = vadd.f32 0.0, %v886
        %888 = vdwg.mxu0
        %v889 = vadd.f32 %v813, %v865
        %v890 = vadd.f32 %v814, %v867
        %v891 = vadd.f32 %v815, %v870
        %v892 = vadd.f32 %v816, %v872
        %v893 = vadd.f32 %v817, %v875
        %v894 = vadd.f32 %v818, %v877
        %v895 = vadd.f32 %v819, %v880
        %v896 = vadd.f32 %v820, %v882
        %v897 = vadd.f32 %v821, %v885
        %v898 = vadd.f32 %v822, %v887
        %v899 = vpack.c.b16 %v592, %v591
        %v900 = vpack.c.b16 %v593, %v592
        %v901 = vpack.c.b16 %v594, %v593
        %v902 = vpack.c.b16 %v595, %v594
        %v903 = vpack.c.b16 %v591, %v595
        %v908 = vunpack.c.l.b16 %v473
        %v909 = vunpack.c.l.b16 %v474
        %v910 = vunpack.c.l.b16 %v475
        %v911 = vunpack.c.l.b16 %v476
        %v912 = vpack.c.b16 %v909, %v908
        %v913 = vpack.c.b16 %v911, %v910
        %v917 = vsel %vm613, %v899, 0
        %v920 = vsel %vm613, %v900, 0
        %v923 = vsel %vm613, %v901, 0
        %v926 = vsel %vm613, %v902, 0
        %v929 = vsel %vm613, %v903, 0
        %931 = vmatpush.bf16.msra.mxu0 0
        %932 = vmatpush.bf16.msra.mxu0 0
        %933 = vmatpush.bf16.msra.mxu0 0
        %934 = vmatpush.bf16.msra.mxu0 0
        %935 = vmatpush.bf16.msra.mxu0 0
        %936 = vmatpush.bf16.msra.mxu0 0
        %937 = vmatpush.bf16.msra.mxu0 %v913
        %938 = vmatpush.bf16.msra.mxu0 %v912
        %939 = vmatmul.bf16.gmra.mxu0 %v917
        %v940 = vpop.f32.mrf.mxu0
        %v941 = vadd.f32 0.0, %v940
        %v942 = vpop.f32.mrf.mxu0
        %v943 = vadd.f32 0.0, %v942
        %944 = vmatmul.bf16.gmra.mxu0 %v920
        %v945 = vpop.f32.mrf.mxu0
        %v946 = vadd.f32 0.0, %v945
        %v947 = vpop.f32.mrf.mxu0
        %v948 = vadd.f32 0.0, %v947
        %949 = vmatmul.bf16.gmra.mxu0 %v923
        %v950 = vpop.f32.mrf.mxu0
        %v951 = vadd.f32 0.0, %v950
        %v952 = vpop.f32.mrf.mxu0
        %v953 = vadd.f32 0.0, %v952
        %954 = vmatmul.bf16.gmra.mxu0 %v926
        %v955 = vpop.f32.mrf.mxu0
        %v956 = vadd.f32 0.0, %v955
        %v957 = vpop.f32.mrf.mxu0
        %v958 = vadd.f32 0.0, %v957
        %959 = vmatmul.bf16.gmra.mxu0 %v929
        %v960 = vpop.f32.mrf.mxu0
        %v961 = vadd.f32 0.0, %v960
        %v962 = vpop.f32.mrf.mxu0
        %v963 = vadd.f32 0.0, %v962
        %964 = vdwg.mxu0
        %v965 = vadd.f32 %v889, %v941
        %v966 = vadd.f32 %v890, %v943
        %v967 = vadd.f32 %v891, %v946
        %v968 = vadd.f32 %v892, %v948
        %v969 = vadd.f32 %v893, %v951
        %v970 = vadd.f32 %v894, %v953
        %v971 = vadd.f32 %v895, %v956
        %v972 = vadd.f32 %v896, %v958
        %v973 = vadd.f32 %v897, %v961
        %v974 = vadd.f32 %v898, %v963
        %v975 = vpack.c.b16 %v743, %v742
        %v976 = vpack.c.b16 %v744, %v743
        %v977 = vpack.c.b16 %v745, %v744
        %v978 = vpack.c.b16 %v746, %v745
        %v979 = vpack.c.b16 %v742, %v746
        %v984 = vunpack.c.l.b16 %v477
        %v985 = vunpack.c.l.b16 %v478
        %v986 = vunpack.c.l.b16 %v479
        %v987 = vunpack.c.l.b16 %v480
        %v988 = vpack.c.b16 %v985, %v984
        %v989 = vpack.c.b16 %v987, %v986
        %v993 = vsel %vm613, %v975, 0
        %v996 = vsel %vm613, %v976, 0
        %v999 = vsel %vm613, %v977, 0
        %v1002 = vsel %vm613, %v978, 0
        %v1005 = vsel %vm613, %v979, 0
        %1007 = vmatpush.bf16.msra.mxu0 0
        %1008 = vmatpush.bf16.msra.mxu0 0
        %1009 = vmatpush.bf16.msra.mxu0 0
        %1010 = vmatpush.bf16.msra.mxu0 0
        %1011 = vmatpush.bf16.msra.mxu0 0
        %1012 = vmatpush.bf16.msra.mxu0 0
        %1013 = vmatpush.bf16.msra.mxu0 %v989
        %1014 = vmatpush.bf16.msra.mxu0 %v988
        %1015 = vmatmul.bf16.gmra.mxu0 %v993
        %v1016 = vpop.f32.mrf.mxu0
        %v1017 = vadd.f32 0.0, %v1016
        %v1018 = vpop.f32.mrf.mxu0
        %v1019 = vadd.f32 0.0, %v1018
        %1020 = vmatmul.bf16.gmra.mxu0 %v996
        %v1021 = vpop.f32.mrf.mxu0
        %v1022 = vadd.f32 0.0, %v1021
        %v1023 = vpop.f32.mrf.mxu0
        %v1024 = vadd.f32 0.0, %v1023
        %1025 = vmatmul.bf16.gmra.mxu0 %v999
        %v1026 = vpop.f32.mrf.mxu0
        %v1027 = vadd.f32 0.0, %v1026
        %v1028 = vpop.f32.mrf.mxu0
        %v1029 = vadd.f32 0.0, %v1028
        %1030 = vmatmul.bf16.gmra.mxu0 %v1002
        %v1031 = vpop.f32.mrf.mxu0
        %v1032 = vadd.f32 0.0, %v1031
        %v1033 = vpop.f32.mrf.mxu0
        %v1034 = vadd.f32 0.0, %v1033
        %1035 = vmatmul.bf16.gmra.mxu0 %v1005
        %v1036 = vpop.f32.mrf.mxu0
        %v1037 = vadd.f32 0.0, %v1036
        %v1038 = vpop.f32.mrf.mxu0
        %v1039 = vadd.f32 0.0, %v1038
        %1040 = vdwg.mxu0
        %v1041 = vadd.f32 %v965, %v1017
        %v1042 = vadd.f32 %v966, %v1019
        %v1043 = vadd.f32 %v967, %v1022
        %v1044 = vadd.f32 %v968, %v1024
        %v1045 = vadd.f32 %v969, %v1027
        %v1046 = vadd.f32 %v970, %v1029
        %v1047 = vadd.f32 %v971, %v1032
        %v1048 = vadd.f32 %v972, %v1034
        %v1049 = vadd.f32 %v973, %v1037
        %v1050 = vadd.f32 %v974, %v1039
        %v1055 = vunpack.c.l.b16 %v481
        %v1056 = vunpack.c.l.b16 %v482
        %v1057 = vunpack.c.l.b16 %v483
        %v1058 = vunpack.c.l.b16 %v484
        %v1059 = vpack.c.b16 %v1056, %v1055
        %v1060 = vpack.c.b16 %v1058, %v1057
        %1063 = vmatpush.bf16.msra.mxu0 0
        %1064 = vmatpush.bf16.msra.mxu0 0
        %1065 = vmatpush.bf16.msra.mxu0 0
        %1066 = vmatpush.bf16.msra.mxu0 0
        %1067 = vmatpush.bf16.msra.mxu0 0
        %1068 = vmatpush.bf16.msra.mxu0 0
        %1069 = vmatpush.bf16.msra.mxu0 %v1060
        %1070 = vmatpush.bf16.msra.mxu0 %v1059
        %1071 = vmatmul.bf16.gmra.mxu0 %v677
        %v1072 = vpop.f32.mrf.mxu0
        %v1073 = vadd.f32 0.0, %v1072
        %v1074 = vpop.f32.mrf.mxu0
        %v1075 = vadd.f32 0.0, %v1074
        %1076 = vmatmul.bf16.gmra.mxu0 %v679
        %v1077 = vpop.f32.mrf.mxu0
        %v1078 = vadd.f32 0.0, %v1077
        %v1079 = vpop.f32.mrf.mxu0
        %v1080 = vadd.f32 0.0, %v1079
        %1081 = vmatmul.bf16.gmra.mxu0 %v681
        %v1082 = vpop.f32.mrf.mxu0
        %v1083 = vadd.f32 0.0, %v1082
        %v1084 = vpop.f32.mrf.mxu0
        %v1085 = vadd.f32 0.0, %v1084
        %1086 = vmatmul.bf16.gmra.mxu0 %v683
        %v1087 = vpop.f32.mrf.mxu0
        %v1088 = vadd.f32 0.0, %v1087
        %v1089 = vpop.f32.mrf.mxu0
        %v1090 = vadd.f32 0.0, %v1089
        %1091 = vmatmul.bf16.gmra.mxu0 %v675
        %v1092 = vpop.f32.mrf.mxu0
        %v1093 = vadd.f32 0.0, %v1092
        %v1094 = vpop.f32.mrf.mxu0
        %v1095 = vadd.f32 0.0, %v1094
        %1096 = vdwg.mxu0
        %v1097 = vadd.f32 %v1041, %v1073
        %v1098 = vadd.f32 %v1042, %v1075
        %v1099 = vadd.f32 %v1043, %v1078
        %v1100 = vadd.f32 %v1044, %v1080
        %v1101 = vadd.f32 %v1045, %v1083
        %v1102 = vadd.f32 %v1046, %v1085
        %v1103 = vadd.f32 %v1047, %v1088
        %v1104 = vadd.f32 %v1048, %v1090
        %v1105 = vadd.f32 %v1049, %v1093
        %v1106 = vadd.f32 %v1050, %v1095
        %v1111 = vunpack.c.l.b16 %v485
        %v1112 = vunpack.c.l.b16 %v486
        %v1113 = vunpack.c.l.b16 %v487
        %v1114 = vunpack.c.l.b16 %v488
        %v1115 = vpack.c.b16 %v1112, %v1111
        %v1116 = vpack.c.b16 %v1114, %v1113
        %1119 = vmatpush.bf16.msra.mxu0 0
        %1120 = vmatpush.bf16.msra.mxu0 0
        %1121 = vmatpush.bf16.msra.mxu0 0
        %1122 = vmatpush.bf16.msra.mxu0 0
        %1123 = vmatpush.bf16.msra.mxu0 0
        %1124 = vmatpush.bf16.msra.mxu0 0
        %1125 = vmatpush.bf16.msra.mxu0 %v1116
        %1126 = vmatpush.bf16.msra.mxu0 %v1115
        %1127 = vmatmul.bf16.gmra.mxu0 %v618
        %v1128 = vpop.f32.mrf.mxu0
        %v1129 = vadd.f32 0.0, %v1128
        %v1130 = vpop.f32.mrf.mxu0
        %v1131 = vadd.f32 0.0, %v1130
        %1132 = vmatmul.bf16.gmra.mxu0 %v621
        %v1133 = vpop.f32.mrf.mxu0
        %v1134 = vadd.f32 0.0, %v1133
        %v1135 = vpop.f32.mrf.mxu0
        %v1136 = vadd.f32 0.0, %v1135
        %1137 = vmatmul.bf16.gmra.mxu0 %v624
        %v1138 = vpop.f32.mrf.mxu0
        %v1139 = vadd.f32 0.0, %v1138
        %v1140 = vpop.f32.mrf.mxu0
        %v1141 = vadd.f32 0.0, %v1140
        %1142 = vmatmul.bf16.gmra.mxu0 %v627
        %v1143 = vpop.f32.mrf.mxu0
        %v1144 = vadd.f32 0.0, %v1143
        %v1145 = vpop.f32.mrf.mxu0
        %v1146 = vadd.f32 0.0, %v1145
        %1147 = vmatmul.bf16.gmra.mxu0 %v615
        %v1148 = vpop.f32.mrf.mxu0
        %v1149 = vadd.f32 0.0, %v1148
        %v1150 = vpop.f32.mrf.mxu0
        %v1151 = vadd.f32 0.0, %v1150
        %1152 = vdwg.mxu0
        %v1153 = vadd.f32 %v1097, %v1129
        %v1154 = vadd.f32 %v1098, %v1131
        %v1155 = vadd.f32 %v1099, %v1134
        %v1156 = vadd.f32 %v1100, %v1136
        %v1157 = vadd.f32 %v1101, %v1139
        %v1158 = vadd.f32 %v1102, %v1141
        %v1159 = vadd.f32 %v1103, %v1144
        %v1160 = vadd.f32 %v1104, %v1146
        %v1161 = vadd.f32 %v1105, %v1149
        %v1162 = vadd.f32 %v1106, %v1151
        %v1167 = vunpack.c.l.b16 %v489
        %v1168 = vunpack.c.l.b16 %v490
        %v1169 = vunpack.c.l.b16 %v491
        %v1170 = vunpack.c.l.b16 %v492
        %v1171 = vpack.c.b16 %v1168, %v1167
        %v1172 = vpack.c.b16 %v1170, %v1169
        %1175 = vmatpush.bf16.msra.mxu0 0
        %1176 = vmatpush.bf16.msra.mxu0 0
        %1177 = vmatpush.bf16.msra.mxu0 0
        %1178 = vmatpush.bf16.msra.mxu0 0
        %1179 = vmatpush.bf16.msra.mxu0 0
        %1180 = vmatpush.bf16.msra.mxu0 0
        %1181 = vmatpush.bf16.msra.mxu0 %v1172
        %1182 = vmatpush.bf16.msra.mxu0 %v1171
        %1183 = vmatmul.bf16.gmra.mxu0 %v768
        %v1184 = vpop.f32.mrf.mxu0
        %v1185 = vadd.f32 0.0, %v1184
        %v1186 = vpop.f32.mrf.mxu0
        %v1187 = vadd.f32 0.0, %v1186
        %1188 = vmatmul.bf16.gmra.mxu0 %v771
        %v1189 = vpop.f32.mrf.mxu0
        %v1190 = vadd.f32 0.0, %v1189
        %v1191 = vpop.f32.mrf.mxu0
        %v1192 = vadd.f32 0.0, %v1191
        %1193 = vmatmul.bf16.gmra.mxu0 %v774
        %v1194 = vpop.f32.mrf.mxu0
        %v1195 = vadd.f32 0.0, %v1194
        %v1196 = vpop.f32.mrf.mxu0
        %v1197 = vadd.f32 0.0, %v1196
        %1198 = vmatmul.bf16.gmra.mxu0 %v777
        %v1199 = vpop.f32.mrf.mxu0
        %v1200 = vadd.f32 0.0, %v1199
        %v1201 = vpop.f32.mrf.mxu0
        %v1202 = vadd.f32 0.0, %v1201
        %1203 = vmatmul.bf16.gmra.mxu0 %v765
        %v1204 = vpop.f32.mrf.mxu0
        %v1205 = vadd.f32 0.0, %v1204
        %v1206 = vpop.f32.mrf.mxu0
        %v1207 = vadd.f32 0.0, %v1206
        %1208 = vdwg.mxu0
        %v1209 = vadd.f32 %v1153, %v1185
        %v1210 = vadd.f32 %v1154, %v1187
        %v1211 = vadd.f32 %v1155, %v1190
        %v1212 = vadd.f32 %v1156, %v1192
        %v1213 = vadd.f32 %v1157, %v1195
        %v1214 = vadd.f32 %v1158, %v1197
        %v1215 = vadd.f32 %v1159, %v1200
        %v1216 = vadd.f32 %v1160, %v1202
        %v1217 = vadd.f32 %v1161, %v1205
        %v1218 = vadd.f32 %v1162, %v1207
        %v1220 = vshrl.u32 %v393, 16
        %v1222 = vrot.slane %v1220, 7
        %v1223 = vshll.u32 %v393, 16
        %v1225 = vor.u32 %v1222, %v1223
        %v1227 = vshrl.u32 %v394, 16
        %v1229 = vrot.slane %v1227, 7
        %v1230 = vshll.u32 %v394, 16
        %v1232 = vor.u32 %v1229, %v1230
        %v1234 = vshrl.u32 %v395, 16
        %v1236 = vrot.slane %v1234, 7
        %v1237 = vshll.u32 %v395, 16
        %v1239 = vor.u32 %v1236, %v1237
        %v1241 = vshrl.u32 %v396, 16
        %v1243 = vrot.slane %v1241, 7
        %v1244 = vshll.u32 %v396, 16
        %v1246 = vor.u32 %v1243, %v1244
        %v1248 = vshrl.u32 %v397, 16
        %v1250 = vrot.slane %v1248, 7
        %v1251 = vshll.u32 %v397, 16
        %v1253 = vor.u32 %v1250, %v1251
        %v1255 = vshrl.u32 %v398, 16
        %v1257 = vrot.slane %v1255, 7
        %v1258 = vshll.u32 %v398, 16
        %v1260 = vor.u32 %v1257, %v1258
        %v1262 = vshrl.u32 %v399, 16
        %v1264 = vrot.slane %v1262, 7
        %v1265 = vshll.u32 %v399, 16
        %v1267 = vor.u32 %v1264, %v1265
        %v1269 = vshrl.u32 %v400, 16
        %v1271 = vrot.slane %v1269, 7
        %v1272 = vshll.u32 %v400, 16
        %v1274 = vor.u32 %v1271, %v1272
        %v1283 = vsel %vm443, 0, %v1225
        %v1284 = vsel %vm443, 0, %v1232
        %v1285 = vsel %vm443, 0, %v1239
        %v1286 = vsel %vm443, 0, %v1246
        %v1287 = vsel %vm443, 0, %v1253
        %v1288 = vsel %vm443, 0, %v1260
        %v1289 = vsel %vm443, 0, %v1267
        %v1290 = vsel %vm443, 0, %v1274
        %v1291 = vsel %vm451, %v1283, 0
        %v1292 = vsel %vm451, %v1284, 0
        %v1293 = vsel %vm451, %v1285, 0
        %v1294 = vsel %vm451, %v1286, 0
        %v1295 = vsel %vm451, %v1287, 0
        %v1296 = vsel %vm451, %v1288, 0
        %v1297 = vsel %vm451, %v1289, 0
        %v1298 = vsel %vm451, %v1290, 0
        %v1299 = vld [vmem:[%s3] sm:$0xf]
        %v1300 = vld [vmem:[%s3 + $0x4] sm:$0xf]
        %v1301 = vld [vmem:[%s3 + $0x8] sm:$0xf]
        %v1302 = vld [vmem:[%s3 + $0xc] sm:$0xf]
        %v1303 = vld [vmem:[%s3 + $0x10] sm:$0xf]
        %v1304 = vld [vmem:[%s3 + $0x14] sm:$0xf]
        %v1305 = vld [vmem:[%s3 + $0x18] sm:$0xf]
        %v1306 = vld [vmem:[%s3 + $0x1c] sm:$0xf]
        %v1307 = vld [vmem:[%s3 + $0x20] sm:$0xf]
        %v1308 = vld [vmem:[%s3 + $0x24] sm:$0xf]
        %v1309 = vld [vmem:[%s3 + $0x28] sm:$0xf]
        %v1310 = vld [vmem:[%s3 + $0x2c] sm:$0xf]
        %v1311 = vld [vmem:[%s3 + $0x30] sm:$0xf]
        %v1312 = vld [vmem:[%s3 + $0x34] sm:$0xf]
        %v1313 = vld [vmem:[%s3 + $0x38] sm:$0xf]
        %v1314 = vld [vmem:[%s3 + $0x3c] sm:$0xf]
        %v1315 = vld [vmem:[%s3 + $0x40] sm:$0xf]
        %v1316 = vld [vmem:[%s3 + $0x44] sm:$0xf]
        %v1325 = vunpack.c.l.b16 %v1291
        %v1326 = vunpack.c.l.b16 %v1292
        %v1327 = vunpack.c.l.b16 %v1293
        %v1328 = vunpack.c.l.b16 %v1294
        %v1329 = vunpack.c.l.b16 %v1295
        %v1330 = vunpack.c.l.b16 %v1296
        %v1331 = vunpack.c.l.b16 %v1297
        %v1332 = vunpack.c.l.b16 %v1298
        %v1333 = vpack.c.b16 %v1326, %v1325
        %v1334 = vpack.c.b16 %v1328, %v1327
        %v1335 = vpack.c.b16 %v1330, %v1329
        %v1336 = vpack.c.b16 %v1332, %v1331
        %v1339 = vunpack.c.l.b16 %v1299
        %v1340 = vunpack.c.l.b16 %v1300
        %v1341 = vpack.c.b16 %v1340, %v1339
        %vm1343 = vcmask 130048
        %v1344 = vsel %vm1343, %v508, 0
        %v1347 = vsel %vm1343, %v1333, 0
        %v1350 = vsel %vm1343, %v1334, 0
        %v1353 = vsel %vm1343, %v1335, 0
        %v1356 = vsel %vm1343, %v1336, 0
        %1358 = vmatpush.bf16.msra.mxu0 0
        %1359 = vmatpush.bf16.msra.mxu0 0
        %1360 = vmatpush.bf16.msra.mxu0 0
        %1361 = vmatpush.bf16.msra.mxu0 0
        %1362 = vmatpush.bf16.msra.mxu0 0
        %1363 = vmatpush.bf16.msra.mxu0 0
        %1364 = vmatpush.bf16.msra.mxu0 0
        %1365 = vmatpush.bf16.msra.mxu0 %v1341
        %1366 = vmatmul.bf16.gmra.mxu0 %v1344
        %v1367 = vpop.f32.mrf.mxu0
        %v1368 = vadd.f32 0.0, %v1367
        %v1369 = vpop.f32.mrf.mxu0
        %v1370 = vadd.f32 0.0, %v1369
        %1371 = vmatmul.bf16.gmra.mxu0 %v1347
        %v1372 = vpop.f32.mrf.mxu0
        %v1373 = vadd.f32 0.0, %v1372
        %v1374 = vpop.f32.mrf.mxu0
        %v1375 = vadd.f32 0.0, %v1374
        %1376 = vmatmul.bf16.gmra.mxu0 %v1350
        %v1377 = vpop.f32.mrf.mxu0
        %v1378 = vadd.f32 0.0, %v1377
        %v1379 = vpop.f32.mrf.mxu0
        %v1380 = vadd.f32 0.0, %v1379
        %1381 = vmatmul.bf16.gmra.mxu0 %v1353
        %v1382 = vpop.f32.mrf.mxu0
        %v1383 = vadd.f32 0.0, %v1382
        %v1384 = vpop.f32.mrf.mxu0
        %v1385 = vadd.f32 0.0, %v1384
        %1386 = vmatmul.bf16.gmra.mxu0 %v1356
        %v1387 = vpop.f32.mrf.mxu0
        %v1388 = vadd.f32 0.0, %v1387
        %v1389 = vpop.f32.mrf.mxu0
        %v1390 = vadd.f32 0.0, %v1389
        %1391 = vdwg.mxu0
        %v1392 = vadd.f32 %v1209, %v1368
        %v1393 = vadd.f32 %v1210, %v1370
        %v1394 = vadd.f32 %v1211, %v1373
        %v1395 = vadd.f32 %v1212, %v1375
        %v1396 = vadd.f32 %v1213, %v1378
        %v1397 = vadd.f32 %v1214, %v1380
        %v1398 = vadd.f32 %v1215, %v1383
        %v1399 = vadd.f32 %v1216, %v1385
        %v1400 = vadd.f32 %v1217, %v1388
        %v1401 = vadd.f32 %v1218, %v1390
        %v1402 = vunpack.c.h.b16 %v1291
        %v1403 = vunpack.c.h.b16 %v1292
        %v1404 = vunpack.c.h.b16 %v1293
        %v1405 = vunpack.c.h.b16 %v1294
        %v1406 = vunpack.c.h.b16 %v1295
        %v1407 = vunpack.c.h.b16 %v1296
        %v1408 = vunpack.c.h.b16 %v1297
        %v1409 = vunpack.c.h.b16 %v1298
        %v1410 = vpack.c.b16 %v1325, %v1325
        %v1411 = vpack.c.b16 %v1402, %v1402
        %v1412 = vpack.c.b16 %v1326, %v1326
        %v1413 = vpack.c.b16 %v1403, %v1403
        %v1414 = vpack.c.b16 %v1327, %v1327
        %v1415 = vpack.c.b16 %v1404, %v1404
        %v1416 = vpack.c.b16 %v1328, %v1328
        %v1417 = vpack.c.b16 %v1405, %v1405
        %v1418 = vpack.c.b16 %v1329, %v1329
        %v1419 = vpack.c.b16 %v1406, %v1406
        %v1420 = vpack.c.b16 %v1330, %v1330
        %v1421 = vpack.c.b16 %v1407, %v1407
        %v1422 = vpack.c.b16 %v1331, %v1331
        %v1423 = vpack.c.b16 %v1408, %v1408
        %v1424 = vpack.c.b16 %v1332, %v1332
        %v1425 = vpack.c.b16 %v1409, %v1409
        %v1427 = vshrl.u32 %v1410, 16
        %v1429 = vrot.slane %v1427, 4
        %v1430 = vshll.u32 %v1410, 16
        %v1432 = vrot.slane %v1430, 5
        %v1433 = vor.u32 %v1429, %v1432
        %v1434 = vrot.slane %v1433, 4
        %v1436 = vshll.u32 %v1411, 16
        %v1438 = vrot.slane %v1436, 5
        %v1439 = vsel %vm520, %v1434, %v1438
        %v1441 = vshrl.u32 %v1412, 16
        %v1443 = vrot.slane %v1441, 4
        %v1444 = vshll.u32 %v1412, 16
        %v1446 = vrot.slane %v1444, 5
        %v1447 = vor.u32 %v1443, %v1446
        %v1448 = vrot.slane %v1447, 4
        %v1450 = vshll.u32 %v1413, 16
        %v1452 = vrot.slane %v1450, 5
        %v1453 = vsel %vm520, %v1448, %v1452
        %v1455 = vshrl.u32 %v1414, 16
        %v1457 = vrot.slane %v1455, 4
        %v1458 = vshll.u32 %v1414, 16
        %v1460 = vrot.slane %v1458, 5
        %v1461 = vor.u32 %v1457, %v1460
        %v1462 = vrot.slane %v1461, 4
        %v1464 = vshll.u32 %v1415, 16
        %v1466 = vrot.slane %v1464, 5
        %v1467 = vsel %vm520, %v1462, %v1466
        %v1469 = vshrl.u32 %v1416, 16
        %v1471 = vrot.slane %v1469, 4
        %v1472 = vshll.u32 %v1416, 16
        %v1474 = vrot.slane %v1472, 5
        %v1475 = vor.u32 %v1471, %v1474
        %v1476 = vrot.slane %v1475, 4
        %v1478 = vshll.u32 %v1417, 16
        %v1480 = vrot.slane %v1478, 5
        %v1481 = vsel %vm520, %v1476, %v1480
        %v1483 = vshrl.u32 %v1418, 16
        %v1485 = vrot.slane %v1483, 4
        %v1486 = vshll.u32 %v1418, 16
        %v1488 = vrot.slane %v1486, 5
        %v1489 = vor.u32 %v1485, %v1488
        %v1490 = vrot.slane %v1489, 4
        %v1492 = vshll.u32 %v1419, 16
        %v1494 = vrot.slane %v1492, 5
        %v1495 = vsel %vm520, %v1490, %v1494
        %v1497 = vshrl.u32 %v1420, 16
        %v1499 = vrot.slane %v1497, 4
        %v1500 = vshll.u32 %v1420, 16
        %v1502 = vrot.slane %v1500, 5
        %v1503 = vor.u32 %v1499, %v1502
        %v1504 = vrot.slane %v1503, 4
        %v1506 = vshll.u32 %v1421, 16
        %v1508 = vrot.slane %v1506, 5
        %v1509 = vsel %vm520, %v1504, %v1508
        %v1511 = vshrl.u32 %v1422, 16
        %v1513 = vrot.slane %v1511, 4
        %v1514 = vshll.u32 %v1422, 16
        %v1516 = vrot.slane %v1514, 5
        %v1517 = vor.u32 %v1513, %v1516
        %v1518 = vrot.slane %v1517, 4
        %v1520 = vshll.u32 %v1423, 16
        %v1522 = vrot.slane %v1520, 5
        %v1523 = vsel %vm520, %v1518, %v1522
        %v1525 = vshrl.u32 %v1424, 16
        %v1527 = vrot.slane %v1525, 4
        %v1528 = vshll.u32 %v1424, 16
        %v1530 = vrot.slane %v1528, 5
        %v1531 = vor.u32 %v1527, %v1530
        %v1532 = vrot.slane %v1531, 4
        %v1534 = vshll.u32 %v1425, 16
        %v1536 = vrot.slane %v1534, 5
        %v1537 = vsel %vm520, %v1532, %v1536
        %v1538 = vunpack.c.l.b16 %v1439
        %v1539 = vunpack.c.l.b16 %v1453
        %v1540 = vunpack.c.l.b16 %v1467
        %v1541 = vunpack.c.l.b16 %v1481
        %v1542 = vunpack.c.l.b16 %v1495
        %v1543 = vunpack.c.l.b16 %v1509
        %v1544 = vunpack.c.l.b16 %v1523
        %v1545 = vunpack.c.l.b16 %v1537
        %v1546 = vpack.c.b16 %v1539, %v1538
        %v1547 = vpack.c.b16 %v1541, %v1540
        %v1548 = vpack.c.b16 %v1543, %v1542
        %v1549 = vpack.c.b16 %v1545, %v1544
        %v1552 = vunpack.c.l.b16 %v1301
        %v1553 = vunpack.c.l.b16 %v1302
        %v1554 = vpack.c.b16 %v1553, %v1552
        %v1556 = vsel %vm1343, %v596, 0
        %v1559 = vsel %vm1343, %v1546, 0
        %v1562 = vsel %vm1343, %v1547, 0
        %v1565 = vsel %vm1343, %v1548, 0
        %v1568 = vsel %vm1343, %v1549, 0
        %1570 = vmatpush.bf16.msra.mxu0 0
        %1571 = vmatpush.bf16.msra.mxu0 0
        %1572 = vmatpush.bf16.msra.mxu0 0
        %1573 = vmatpush.bf16.msra.mxu0 0
        %1574 = vmatpush.bf16.msra.mxu0 0
        %1575 = vmatpush.bf16.msra.mxu0 0
        %1576 = vmatpush.bf16.msra.mxu0 0
        %1577 = vmatpush.bf16.msra.mxu0 %v1554
        %1578 = vmatmul.bf16.gmra.mxu0 %v1556
        %v1579 = vpop.f32.mrf.mxu0
        %v1580 = vadd.f32 0.0, %v1579
        %v1581 = vpop.f32.mrf.mxu0
        %v1582 = vadd.f32 0.0, %v1581
        %1583 = vmatmul.bf16.gmra.mxu0 %v1559
        %v1584 = vpop.f32.mrf.mxu0
        %v1585 = vadd.f32 0.0, %v1584
        %v1586 = vpop.f32.mrf.mxu0
        %v1587 = vadd.f32 0.0, %v1586
        %1588 = vmatmul.bf16.gmra.mxu0 %v1562
        %v1589 = vpop.f32.mrf.mxu0
        %v1590 = vadd.f32 0.0, %v1589
        %v1591 = vpop.f32.mrf.mxu0
        %v1592 = vadd.f32 0.0, %v1591
        %1593 = vmatmul.bf16.gmra.mxu0 %v1565
        %v1594 = vpop.f32.mrf.mxu0
        %v1595 = vadd.f32 0.0, %v1594
        %v1596 = vpop.f32.mrf.mxu0
        %v1597 = vadd.f32 0.0, %v1596
        %1598 = vmatmul.bf16.gmra.mxu0 %v1568
        %v1599 = vpop.f32.mrf.mxu0
        %v1600 = vadd.f32 0.0, %v1599
        %v1601 = vpop.f32.mrf.mxu0
        %v1602 = vadd.f32 0.0, %v1601
        %1603 = vdwg.mxu0
        %v1604 = vadd.f32 %v1392, %v1580
        %v1605 = vadd.f32 %v1393, %v1582
        %v1606 = vadd.f32 %v1394, %v1585
        %v1607 = vadd.f32 %v1395, %v1587
        %v1608 = vadd.f32 %v1396, %v1590
        %v1609 = vadd.f32 %v1397, %v1592
        %v1610 = vadd.f32 %v1398, %v1595
        %v1611 = vadd.f32 %v1399, %v1597
        %v1612 = vadd.f32 %v1400, %v1600
        %v1613 = vadd.f32 %v1401, %v1602
        %v1614 = vrot.slane %v1410, 5
        %v1615 = vrot.slane %v1614, 4
        %v1616 = vrot.slane %v1411, 5
        %v1617 = vsel %vm721, %v1615, %v1616
        %v1618 = vrot.slane %v1412, 5
        %v1619 = vrot.slane %v1618, 4
        %v1620 = vrot.slane %v1413, 5
        %v1621 = vsel %vm721, %v1619, %v1620
        %v1622 = vrot.slane %v1414, 5
        %v1623 = vrot.slane %v1622, 4
        %v1624 = vrot.slane %v1415, 5
        %v1625 = vsel %vm721, %v1623, %v1624
        %v1626 = vrot.slane %v1416, 5
        %v1627 = vrot.slane %v1626, 4
        %v1628 = vrot.slane %v1417, 5
        %v1629 = vsel %vm721, %v1627, %v1628
        %v1630 = vrot.slane %v1418, 5
        %v1631 = vrot.slane %v1630, 4
        %v1632 = vrot.slane %v1419, 5
        %v1633 = vsel %vm721, %v1631, %v1632
        %v1634 = vrot.slane %v1420, 5
        %v1635 = vrot.slane %v1634, 4
        %v1636 = vrot.slane %v1421, 5
        %v1637 = vsel %vm721, %v1635, %v1636
        %v1638 = vrot.slane %v1422, 5
        %v1639 = vrot.slane %v1638, 4
        %v1640 = vrot.slane %v1423, 5
        %v1641 = vsel %vm721, %v1639, %v1640
        %v1642 = vrot.slane %v1424, 5
        %v1643 = vrot.slane %v1642, 4
        %v1644 = vrot.slane %v1425, 5
        %v1645 = vsel %vm721, %v1643, %v1644
        %v1646 = vunpack.c.l.b16 %v1617
        %v1647 = vunpack.c.l.b16 %v1621
        %v1648 = vunpack.c.l.b16 %v1625
        %v1649 = vunpack.c.l.b16 %v1629
        %v1650 = vunpack.c.l.b16 %v1633
        %v1651 = vunpack.c.l.b16 %v1637
        %v1652 = vunpack.c.l.b16 %v1641
        %v1653 = vunpack.c.l.b16 %v1645
        %v1654 = vpack.c.b16 %v1647, %v1646
        %v1655 = vpack.c.b16 %v1649, %v1648
        %v1656 = vpack.c.b16 %v1651, %v1650
        %v1657 = vpack.c.b16 %v1653, %v1652
        %v1660 = vunpack.c.l.b16 %v1303
        %v1661 = vunpack.c.l.b16 %v1304
        %v1662 = vpack.c.b16 %v1661, %v1660
        %v1664 = vsel %vm1343, %v747, 0
        %v1667 = vsel %vm1343, %v1654, 0
        %v1670 = vsel %vm1343, %v1655, 0
        %v1673 = vsel %vm1343, %v1656, 0
        %v1676 = vsel %vm1343, %v1657, 0
        %1678 = vmatpush.bf16.msra.mxu0 0
        %1679 = vmatpush.bf16.msra.mxu0 0
        %1680 = vmatpush.bf16.msra.mxu0 0
        %1681 = vmatpush.bf16.msra.mxu0 0
        %1682 = vmatpush.bf16.msra.mxu0 0
        %1683 = vmatpush.bf16.msra.mxu0 0
        %1684 = vmatpush.bf16.msra.mxu0 0
        %1685 = vmatpush.bf16.msra.mxu0 %v1662
        %1686 = vmatmul.bf16.gmra.mxu0 %v1664
        %v1687 = vpop.f32.mrf.mxu0
        %v1688 = vadd.f32 0.0, %v1687
        %v1689 = vpop.f32.mrf.mxu0
        %v1690 = vadd.f32 0.0, %v1689
        %1691 = vmatmul.bf16.gmra.mxu0 %v1667
        %v1692 = vpop.f32.mrf.mxu0
        %v1693 = vadd.f32 0.0, %v1692
        %v1694 = vpop.f32.mrf.mxu0
        %v1695 = vadd.f32 0.0, %v1694
        %1696 = vmatmul.bf16.gmra.mxu0 %v1670
        %v1697 = vpop.f32.mrf.mxu0
        %v1698 = vadd.f32 0.0, %v1697
        %v1699 = vpop.f32.mrf.mxu0
        %v1700 = vadd.f32 0.0, %v1699
        %1701 = vmatmul.bf16.gmra.mxu0 %v1673
        %v1702 = vpop.f32.mrf.mxu0
        %v1703 = vadd.f32 0.0, %v1702
        %v1704 = vpop.f32.mrf.mxu0
        %v1705 = vadd.f32 0.0, %v1704
        %1706 = vmatmul.bf16.gmra.mxu0 %v1676
        %v1707 = vpop.f32.mrf.mxu0
        %v1708 = vadd.f32 0.0, %v1707
        %v1709 = vpop.f32.mrf.mxu0
        %v1710 = vadd.f32 0.0, %v1709
        %1711 = vdwg.mxu0
        %v1712 = vadd.f32 %v1604, %v1688
        %v1713 = vadd.f32 %v1605, %v1690
        %v1714 = vadd.f32 %v1606, %v1693
        %v1715 = vadd.f32 %v1607, %v1695
        %v1716 = vadd.f32 %v1608, %v1698
        %v1717 = vadd.f32 %v1609, %v1700
        %v1718 = vadd.f32 %v1610, %v1703
        %v1719 = vadd.f32 %v1611, %v1705
        %v1720 = vadd.f32 %v1612, %v1708
        %v1721 = vadd.f32 %v1613, %v1710
        %v1722 = vpack.c.b16 %v1325, %v498
        %v1723 = vpack.c.b16 %v1327, %v1326
        %v1724 = vpack.c.b16 %v1329, %v1328
        %v1725 = vpack.c.b16 %v1331, %v1330
        %v1726 = vpack.c.b16 %v498, %v1332
        %v1729 = vunpack.c.l.b16 %v1305
        %v1730 = vunpack.c.l.b16 %v1306
        %v1731 = vpack.c.b16 %v1730, %v1729
        %v1734 = vsel %vm1343, %v1722, 0
        %v1737 = vsel %vm1343, %v1723, 0
        %v1740 = vsel %vm1343, %v1724, 0
        %v1743 = vsel %vm1343, %v1725, 0
        %v1746 = vsel %vm1343, %v1726, 0
        %1748 = vmatpush.bf16.msra.mxu0 0
        %1749 = vmatpush.bf16.msra.mxu0 0
        %1750 = vmatpush.bf16.msra.mxu0 0
        %1751 = vmatpush.bf16.msra.mxu0 0
        %1752 = vmatpush.bf16.msra.mxu0 0
        %1753 = vmatpush.bf16.msra.mxu0 0
        %1754 = vmatpush.bf16.msra.mxu0 0
        %1755 = vmatpush.bf16.msra.mxu0 %v1731
        %1756 = vmatmul.bf16.gmra.mxu0 %v1734
        %v1757 = vpop.f32.mrf.mxu0
        %v1758 = vadd.f32 0.0, %v1757
        %v1759 = vpop.f32.mrf.mxu0
        %v1760 = vadd.f32 0.0, %v1759
        %1761 = vmatmul.bf16.gmra.mxu0 %v1737
        %v1762 = vpop.f32.mrf.mxu0
        %v1763 = vadd.f32 0.0, %v1762
        %v1764 = vpop.f32.mrf.mxu0
        %v1765 = vadd.f32 0.0, %v1764
        %1766 = vmatmul.bf16.gmra.mxu0 %v1740
        %v1767 = vpop.f32.mrf.mxu0
        %v1768 = vadd.f32 0.0, %v1767
        %v1769 = vpop.f32.mrf.mxu0
        %v1770 = vadd.f32 0.0, %v1769
        %1771 = vmatmul.bf16.gmra.mxu0 %v1743
        %v1772 = vpop.f32.mrf.mxu0
        %v1773 = vadd.f32 0.0, %v1772
        %v1774 = vpop.f32.mrf.mxu0
        %v1775 = vadd.f32 0.0, %v1774
        %1776 = vmatmul.bf16.gmra.mxu0 %v1746
        %v1777 = vpop.f32.mrf.mxu0
        %v1778 = vadd.f32 0.0, %v1777
        %v1779 = vpop.f32.mrf.mxu0
        %v1780 = vadd.f32 0.0, %v1779
        %1781 = vdwg.mxu0
        %v1782 = vadd.f32 %v1712, %v1758
        %v1783 = vadd.f32 %v1713, %v1760
        %v1784 = vadd.f32 %v1714, %v1763
        %v1785 = vadd.f32 %v1715, %v1765
        %v1786 = vadd.f32 %v1716, %v1768
        %v1787 = vadd.f32 %v1717, %v1770
        %v1788 = vadd.f32 %v1718, %v1773
        %v1789 = vadd.f32 %v1719, %v1775
        %v1790 = vadd.f32 %v1720, %v1778
        %v1791 = vadd.f32 %v1721, %v1780
        %v1792 = vpack.c.b16 %v1538, %v591
        %v1793 = vpack.c.b16 %v1540, %v1539
        %v1794 = vpack.c.b16 %v1542, %v1541
        %v1795 = vpack.c.b16 %v1544, %v1543
        %v1796 = vpack.c.b16 %v591, %v1545
        %v1799 = vunpack.c.l.b16 %v1307
        %v1800 = vunpack.c.l.b16 %v1308
        %v1801 = vpack.c.b16 %v1800, %v1799
        %v1804 = vsel %vm1343, %v1792, 0
        %v1807 = vsel %vm1343, %v1793, 0
        %v1810 = vsel %vm1343, %v1794, 0
        %v1813 = vsel %vm1343, %v1795, 0
        %v1816 = vsel %vm1343, %v1796, 0
        %1818 = vmatpush.bf16.msra.mxu0 0
        %1819 = vmatpush.bf16.msra.mxu0 0
        %1820 = vmatpush.bf16.msra.mxu0 0
        %1821 = vmatpush.bf16.msra.mxu0 0
        %1822 = vmatpush.bf16.msra.mxu0 0
        %1823 = vmatpush.bf16.msra.mxu0 0
        %1824 = vmatpush.bf16.msra.mxu0 0
        %1825 = vmatpush.bf16.msra.mxu0 %v1801
        %1826 = vmatmul.bf16.gmra.mxu0 %v1804
        %v1827 = vpop.f32.mrf.mxu0
        %v1828 = vadd.f32 0.0, %v1827
        %v1829 = vpop.f32.mrf.mxu0
        %v1830 = vadd.f32 0.0, %v1829
        %1831 = vmatmul.bf16.gmra.mxu0 %v1807
        %v1832 = vpop.f32.mrf.mxu0
        %v1833 = vadd.f32 0.0, %v1832
        %v1834 = vpop.f32.mrf.mxu0
        %v1835 = vadd.f32 0.0, %v1834
        %1836 = vmatmul.bf16.gmra.mxu0 %v1810
        %v1837 = vpop.f32.mrf.mxu0
        %v1838 = vadd.f32 0.0, %v1837
        %v1839 = vpop.f32.mrf.mxu0
        %v1840 = vadd.f32 0.0, %v1839
        %1841 = vmatmul.bf16.gmra.mxu0 %v1813
        %v1842 = vpop.f32.mrf.mxu0
        %v1843 = vadd.f32 0.0, %v1842
        %v1844 = vpop.f32.mrf.mxu0
        %v1845 = vadd.f32 0.0, %v1844
        %1846 = vmatmul.bf16.gmra.mxu0 %v1816
        %v1847 = vpop.f32.mrf.mxu0
        %v1848 = vadd.f32 0.0, %v1847
        %v1849 = vpop.f32.mrf.mxu0
        %v1850 = vadd.f32 0.0, %v1849
        %1851 = vdwg.mxu0
        %v1852 = vadd.f32 %v1782, %v1828
        %v1853 = vadd.f32 %v1783, %v1830
        %v1854 = vadd.f32 %v1784, %v1833
        %v1855 = vadd.f32 %v1785, %v1835
        %v1856 = vadd.f32 %v1786, %v1838
        %v1857 = vadd.f32 %v1787, %v1840
        %v1858 = vadd.f32 %v1788, %v1843
        %v1859 = vadd.f32 %v1789, %v1845
        %v1860 = vadd.f32 %v1790, %v1848
        %v1861 = vadd.f32 %v1791, %v1850
        %v1862 = vpack.c.b16 %v1646, %v742
        %v1863 = vpack.c.b16 %v1648, %v1647
        %v1864 = vpack.c.b16 %v1650, %v1649
        %v1865 = vpack.c.b16 %v1652, %v1651
        %v1866 = vpack.c.b16 %v742, %v1653
        %v1869 = vunpack.c.l.b16 %v1309
        %v1870 = vunpack.c.l.b16 %v1310
        %v1871 = vpack.c.b16 %v1870, %v1869
        %v1874 = vsel %vm1343, %v1862, 0
        %v1877 = vsel %vm1343, %v1863, 0
        %v1880 = vsel %vm1343, %v1864, 0
        %v1883 = vsel %vm1343, %v1865, 0
        %v1886 = vsel %vm1343, %v1866, 0
        %1888 = vmatpush.bf16.msra.mxu0 0
        %1889 = vmatpush.bf16.msra.mxu0 0
        %1890 = vmatpush.bf16.msra.mxu0 0
        %1891 = vmatpush.bf16.msra.mxu0 0
        %1892 = vmatpush.bf16.msra.mxu0 0
        %1893 = vmatpush.bf16.msra.mxu0 0
        %1894 = vmatpush.bf16.msra.mxu0 0
        %1895 = vmatpush.bf16.msra.mxu0 %v1871
        %1896 = vmatmul.bf16.gmra.mxu0 %v1874
        %v1897 = vpop.f32.mrf.mxu0
        %v1898 = vadd.f32 0.0, %v1897
        %v1899 = vpop.f32.mrf.mxu0
        %v1900 = vadd.f32 0.0, %v1899
        %1901 = vmatmul.bf16.gmra.mxu0 %v1877
        %v1902 = vpop.f32.mrf.mxu0
        %v1903 = vadd.f32 0.0, %v1902
        %v1904 = vpop.f32.mrf.mxu0
        %v1905 = vadd.f32 0.0, %v1904
        %1906 = vmatmul.bf16.gmra.mxu0 %v1880
        %v1907 = vpop.f32.mrf.mxu0
        %v1908 = vadd.f32 0.0, %v1907
        %v1909 = vpop.f32.mrf.mxu0
        %v1910 = vadd.f32 0.0, %v1909
        %1911 = vmatmul.bf16.gmra.mxu0 %v1883
        %v1912 = vpop.f32.mrf.mxu0
        %v1913 = vadd.f32 0.0, %v1912
        %v1914 = vpop.f32.mrf.mxu0
        %v1915 = vadd.f32 0.0, %v1914
        %1916 = vmatmul.bf16.gmra.mxu0 %v1886
        %v1917 = vpop.f32.mrf.mxu0
        %v1918 = vadd.f32 0.0, %v1917
        %v1919 = vpop.f32.mrf.mxu0
        %v1920 = vadd.f32 0.0, %v1919
        %1921 = vdwg.mxu0
        %v1922 = vadd.f32 %v1852, %v1898
        %v1923 = vadd.f32 %v1853, %v1900
        %v1924 = vadd.f32 %v1854, %v1903
        %v1925 = vadd.f32 %v1855, %v1905
        %v1926 = vadd.f32 %v1856, %v1908
        %v1927 = vadd.f32 %v1857, %v1910
        %v1928 = vadd.f32 %v1858, %v1913
        %v1929 = vadd.f32 %v1859, %v1915
        %v1930 = vadd.f32 %v1860, %v1918
        %v1931 = vadd.f32 %v1861, %v1920
        %v1934 = vunpack.c.l.b16 %v1311
        %v1935 = vunpack.c.l.b16 %v1312
        %v1936 = vpack.c.b16 %v1935, %v1934
        %1938 = vmatpush.bf16.msra.mxu0 0
        %1939 = vmatpush.bf16.msra.mxu0 0
        %1940 = vmatpush.bf16.msra.mxu0 0
        %1941 = vmatpush.bf16.msra.mxu0 0
        %1942 = vmatpush.bf16.msra.mxu0 0
        %1943 = vmatpush.bf16.msra.mxu0 0
        %1944 = vmatpush.bf16.msra.mxu0 0
        %1945 = vmatpush.bf16.msra.mxu0 %v1936
        %1946 = vmatmul.bf16.gmra.mxu0 %v1347
        %v1947 = vpop.f32.mrf.mxu0
        %v1948 = vadd.f32 0.0, %v1947
        %v1949 = vpop.f32.mrf.mxu0
        %v1950 = vadd.f32 0.0, %v1949
        %1951 = vmatmul.bf16.gmra.mxu0 %v1350
        %v1952 = vpop.f32.mrf.mxu0
        %v1953 = vadd.f32 0.0, %v1952
        %v1954 = vpop.f32.mrf.mxu0
        %v1955 = vadd.f32 0.0, %v1954
        %1956 = vmatmul.bf16.gmra.mxu0 %v1353
        %v1957 = vpop.f32.mrf.mxu0
        %v1958 = vadd.f32 0.0, %v1957
        %v1959 = vpop.f32.mrf.mxu0
        %v1960 = vadd.f32 0.0, %v1959
        %1961 = vmatmul.bf16.gmra.mxu0 %v1356
        %v1962 = vpop.f32.mrf.mxu0
        %v1963 = vadd.f32 0.0, %v1962
        %v1964 = vpop.f32.mrf.mxu0
        %v1965 = vadd.f32 0.0, %v1964
        %1966 = vmatmul.bf16.gmra.mxu0 %v1344
        %v1967 = vpop.f32.mrf.mxu0
        %v1968 = vadd.f32 0.0, %v1967
        %v1969 = vpop.f32.mrf.mxu0
        %v1970 = vadd.f32 0.0, %v1969
        %1971 = vdwg.mxu0
        %v1972 = vadd.f32 %v1922, %v1948
        %v1973 = vadd.f32 %v1923, %v1950
        %v1974 = vadd.f32 %v1924, %v1953
        %v1975 = vadd.f32 %v1925, %v1955
        %v1976 = vadd.f32 %v1926, %v1958
        %v1977 = vadd.f32 %v1927, %v1960
        %v1978 = vadd.f32 %v1928, %v1963
        %v1979 = vadd.f32 %v1929, %v1965
        %v1980 = vadd.f32 %v1930, %v1968
        %v1981 = vadd.f32 %v1931, %v1970
        %v1984 = vunpack.c.l.b16 %v1313
        %v1985 = vunpack.c.l.b16 %v1314
        %v1986 = vpack.c.b16 %v1985, %v1984
        %1988 = vmatpush.bf16.msra.mxu0 0
        %1989 = vmatpush.bf16.msra.mxu0 0
        %1990 = vmatpush.bf16.msra.mxu0 0
        %1991 = vmatpush.bf16.msra.mxu0 0
        %1992 = vmatpush.bf16.msra.mxu0 0
        %1993 = vmatpush.bf16.msra.mxu0 0
        %1994 = vmatpush.bf16.msra.mxu0 0
        %1995 = vmatpush.bf16.msra.mxu0 %v1986
        %1996 = vmatmul.bf16.gmra.mxu0 %v1559
        %v1997 = vpop.f32.mrf.mxu0
        %v1998 = vadd.f32 0.0, %v1997
        %v1999 = vpop.f32.mrf.mxu0
        %v2000 = vadd.f32 0.0, %v1999
        %2001 = vmatmul.bf16.gmra.mxu0 %v1562
        %v2002 = vpop.f32.mrf.mxu0
        %v2003 = vadd.f32 0.0, %v2002
        %v2004 = vpop.f32.mrf.mxu0
        %v2005 = vadd.f32 0.0, %v2004
        %2006 = vmatmul.bf16.gmra.mxu0 %v1565
        %v2007 = vpop.f32.mrf.mxu0
        %v2008 = vadd.f32 0.0, %v2007
        %v2009 = vpop.f32.mrf.mxu0
        %v2010 = vadd.f32 0.0, %v2009
        %2011 = vmatmul.bf16.gmra.mxu0 %v1568
        %v2012 = vpop.f32.mrf.mxu0
        %v2013 = vadd.f32 0.0, %v2012
        %v2014 = vpop.f32.mrf.mxu0
        %v2015 = vadd.f32 0.0, %v2014
        %2016 = vmatmul.bf16.gmra.mxu0 %v1556
        %v2017 = vpop.f32.mrf.mxu0
        %v2018 = vadd.f32 0.0, %v2017
        %v2019 = vpop.f32.mrf.mxu0
        %v2020 = vadd.f32 0.0, %v2019
        %2021 = vdwg.mxu0
        %v2022 = vadd.f32 %v1972, %v1998
        %v2023 = vadd.f32 %v1973, %v2000
        %v2024 = vadd.f32 %v1974, %v2003
        %v2025 = vadd.f32 %v1975, %v2005
        %v2026 = vadd.f32 %v1976, %v2008
        %v2027 = vadd.f32 %v1977, %v2010
        %v2028 = vadd.f32 %v1978, %v2013
        %v2029 = vadd.f32 %v1979, %v2015
        %v2030 = vadd.f32 %v1980, %v2018
        %v2031 = vadd.f32 %v1981, %v2020
        %v2034 = vunpack.c.l.b16 %v1315
        %v2035 = vunpack.c.l.b16 %v1316
        %v2036 = vpack.c.b16 %v2035, %v2034
        %2038 = vmatpush.bf16.msra.mxu0 0
        %2039 = vmatpush.bf16.msra.mxu0 0
        %2040 = vmatpush.bf16.msra.mxu0 0
        %2041 = vmatpush.bf16.msra.mxu0 0
        %2042 = vmatpush.bf16.msra.mxu0 0
        %2043 = vmatpush.bf16.msra.mxu0 0
        %2044 = vmatpush.bf16.msra.mxu0 0
        %2045 = vmatpush.bf16.msra.mxu0 %v2036
        %2046 = vmatmul.bf16.gmra.mxu0 %v1667
        %v2047 = vpop.f32.mrf.mxu0
        %v2048 = vadd.f32 0.0, %v2047
        %v2049 = vpop.f32.mrf.mxu0
        %v2050 = vadd.f32 0.0, %v2049
        %2051 = vmatmul.bf16.gmra.mxu0 %v1670
        %v2052 = vpop.f32.mrf.mxu0
        %v2053 = vadd.f32 0.0, %v2052
        %v2054 = vpop.f32.mrf.mxu0
        %v2055 = vadd.f32 0.0, %v2054
        %2056 = vmatmul.bf16.gmra.mxu0 %v1673
        %v2057 = vpop.f32.mrf.mxu0
        %v2058 = vadd.f32 0.0, %v2057
        %v2059 = vpop.f32.mrf.mxu0
        %v2060 = vadd.f32 0.0, %v2059
        %2061 = vmatmul.bf16.gmra.mxu0 %v1676
        %v2062 = vpop.f32.mrf.mxu0
        %v2063 = vadd.f32 0.0, %v2062
        %v2064 = vpop.f32.mrf.mxu0
        %v2065 = vadd.f32 0.0, %v2064
        %2066 = vmatmul.bf16.gmra.mxu0 %v1664
        %v2067 = vpop.f32.mrf.mxu0
        %v2068 = vadd.f32 0.0, %v2067
        %v2069 = vpop.f32.mrf.mxu0
        %v2070 = vadd.f32 0.0, %v2069
        %2071 = vdwg.mxu0
        %v2072 = vadd.f32 %v2022, %v2048
        %v2073 = vadd.f32 %v2023, %v2050
        %v2074 = vadd.f32 %v2024, %v2053
        %v2075 = vadd.f32 %v2025, %v2055
        %v2076 = vadd.f32 %v2026, %v2058
        %v2077 = vadd.f32 %v2027, %v2060
        %v2078 = vadd.f32 %v2028, %v2063
        %v2079 = vadd.f32 %v2029, %v2065
        %v2080 = vadd.f32 %v2030, %v2068
        %v2081 = vadd.f32 %v2031, %v2070
        %v2082 = vld [vmem:[%s4] sm:$0x1]
        %v2084 = vperm.slane %v2082, 0
        %v2086 = vmul.f32 %v2072, %v2084
        %v2087 = vmul.f32 %v2073, %v2084
        %v2088 = vmul.f32 %v2074, %v2084
        %v2089 = vmul.f32 %v2075, %v2084
        %v2090 = vmul.f32 %v2076, %v2084
        %v2091 = vmul.f32 %v2077, %v2084
        %v2092 = vmul.f32 %v2078, %v2084
        %v2093 = vmul.f32 %v2079, %v2084
        %v2094 = vmul.f32 %v2080, %v2084
        %v2095 = vmul.f32 %v2081, %v2084
        %v2096 = vld [vmem:[%s5] sm:$0x1]
        %v2098 = vperm.slane %v2096, 0
        %v2100 = vadd.f32 %v2086, %v2098
        %v2101 = vadd.f32 %v2087, %v2098
        %v2102 = vadd.f32 %v2088, %v2098
        %v2103 = vadd.f32 %v2089, %v2098
        %v2104 = vadd.f32 %v2090, %v2098
        %v2105 = vadd.f32 %v2091, %v2098
        %v2106 = vadd.f32 %v2092, %v2098
        %v2107 = vadd.f32 %v2093, %v2098
        %v2108 = vadd.f32 %v2094, %v2098
        %v2109 = vadd.f32 %v2095, %v2098
        %v2110 = vmax.f32 %v2100, 0.0
        %v2111 = vmax.f32 %v2101, 0.0
        %v2112 = vmax.f32 %v2102, 0.0
        %v2113 = vmax.f32 %v2103, 0.0
        %v2114 = vmax.f32 %v2104, 0.0
        %v2115 = vmax.f32 %v2105, 0.0
        %v2116 = vmax.f32 %v2106, 0.0
        %v2117 = vmax.f32 %v2107, 0.0
        %v2118 = vmax.f32 %v2108, 0.0
        %v2119 = vmax.f32 %v2109, 0.0
        %v2120 = vpack.c.bf16 %v2110, %v2110
        %v2121 = vpack.c.bf16 %v2111, %v2111
        %v2122 = vpack.c.bf16 %v2112, %v2112
        %v2123 = vpack.c.bf16 %v2113, %v2113
        %v2124 = vpack.c.bf16 %v2114, %v2114
        %v2125 = vpack.c.bf16 %v2115, %v2115
        %v2126 = vpack.c.bf16 %v2116, %v2116
        %v2127 = vpack.c.bf16 %v2117, %v2117
        %v2128 = vpack.c.bf16 %v2118, %v2118
        %v2129 = vpack.c.bf16 %v2119, %v2119
        %s2130 = smul.u32 %s31, 8
        %s2131 = ssub.s32 %s2130, 1
        %v2132 = vstv %s2131
        %v2133 = vadd.s32 %v2132, 1
        %v2134 = vadd.s32 %v2132, 2
        %v2135 = vadd.s32 %v2132, 3
        %v2136 = vadd.s32 %v2132, 4
        %v2137 = vadd.s32 %v2132, 5
        %v2138 = vadd.s32 %v2132, 6
        %v2139 = vadd.s32 %v2132, 7
        %v2140 = vadd.s32 %v2132, 8
        %v2141 = vadd.s32 %v2132, 9
        %vm2142 = vcmp.ge.s32.totalorder %v2132, 0
        %vm2143 = vcmp.ge.s32.totalorder %v2133, 0
        %vm2144 = vcmp.ge.s32.totalorder %v2134, 0
        %vm2145 = vcmp.ge.s32.totalorder %v2135, 0
        %vm2146 = vcmp.ge.s32.totalorder %v2136, 0
        %vm2147 = vcmp.ge.s32.totalorder %v2137, 0
        %vm2148 = vcmp.ge.s32.totalorder %v2138, 0
        %vm2149 = vcmp.ge.s32.totalorder %v2139, 0
        %vm2150 = vcmp.ge.s32.totalorder %v2140, 0
        %vm2151 = vcmp.ge.s32.totalorder %v2141, 0
        %vm2152 = vcmp.lt.s32.totalorder %v2132, 8
        %vm2153 = vcmp.lt.s32.totalorder %v2133, 8
        %vm2154 = vcmp.lt.s32.totalorder %v2134, 8
        %vm2155 = vcmp.lt.s32.totalorder %v2135, 8
        %vm2156 = vcmp.lt.s32.totalorder %v2136, 8
        %vm2157 = vcmp.lt.s32.totalorder %v2137, 8
        %vm2158 = vcmp.lt.s32.totalorder %v2138, 8
        %vm2159 = vcmp.lt.s32.totalorder %v2139, 8
        %vm2160 = vcmp.lt.s32.totalorder %v2140, 8
        %vm2161 = vcmp.lt.s32.totalorder %v2141, 8
        %vm2162 = vmand %vm2142, %vm2152
        %vm2163 = vmand %vm2143, %vm2153
        %vm2164 = vmand %vm2144, %vm2154
        %vm2165 = vmand %vm2145, %vm2155
        %vm2166 = vmand %vm2146, %vm2156
        %vm2167 = vmand %vm2147, %vm2157
        %vm2168 = vmand %vm2148, %vm2158
        %vm2169 = vmand %vm2149, %vm2159
        %vm2170 = vmand %vm2150, %vm2160
        %vm2171 = vmand %vm2151, %vm2161
        %v2172 = vsel %vm2162, 1, 0
        %v2173 = vsel %vm2163, 1, 0
        %v2174 = vsel %vm2164, 1, 0
        %v2175 = vsel %vm2165, 1, 0
        %v2176 = vsel %vm2166, 1, 0
        %v2177 = vsel %vm2167, 1, 0
        %v2178 = vsel %vm2168, 1, 0
        %v2179 = vsel %vm2169, 1, 0
        %v2180 = vsel %vm2170, 1, 0
        %v2181 = vsel %vm2171, 1, 0
        %vm2182 = vcmp.eq.s32.totalorder %v2172, 1
        %vm2183 = vcmp.eq.s32.totalorder %v2173, 1
        %vm2184 = vcmp.eq.s32.totalorder %v2174, 1
        %vm2185 = vcmp.eq.s32.totalorder %v2175, 1
        %vm2186 = vcmp.eq.s32.totalorder %v2176, 1
        %vm2187 = vcmp.eq.s32.totalorder %v2177, 1
        %vm2188 = vcmp.eq.s32.totalorder %v2178, 1
        %vm2189 = vcmp.eq.s32.totalorder %v2179, 1
        %vm2190 = vcmp.eq.s32.totalorder %v2180, 1
        %vm2191 = vcmp.eq.s32.totalorder %v2181, 1
        %v2192 = vsel %vm2182, %v2120, 0
        %v2193 = vsel %vm2183, %v2121, 0
        %v2194 = vsel %vm2184, %v2122, 0
        %v2195 = vsel %vm2185, %v2123, 0
        %v2196 = vsel %vm2186, %v2124, 0
        %v2197 = vsel %vm2187, %v2125, 0
        %v2198 = vsel %vm2188, %v2126, 0
        %v2199 = vsel %vm2189, %v2127, 0
        %v2200 = vsel %vm2190, %v2128, 0
        %v2201 = vsel %vm2191, %v2129, 0
        %v2212 = vunpack.c.l.b16 %v2192
        %v2213 = vunpack.c.l.b16 %v2193
        %v2214 = vunpack.c.l.b16 %v2194
        %v2215 = vunpack.c.l.b16 %v2195
        %v2216 = vunpack.c.l.b16 %v2196
        %v2217 = vunpack.c.l.b16 %v2197
        %v2218 = vunpack.c.l.b16 %v2198
        %v2219 = vunpack.c.l.b16 %v2199
        %v2220 = vunpack.c.l.b16 %v2200
        %v2221 = vunpack.c.l.b16 %v2201
        %v2222 = vpack.c.b16 %v2212, %v2212
        %v2223 = vpack.c.b16 %v2213, %v2213
        %v2224 = vpack.c.b16 %v2214, %v2214
        %v2225 = vpack.c.b16 %v2215, %v2215
        %v2226 = vpack.c.b16 %v2216, %v2216
        %v2227 = vpack.c.b16 %v2217, %v2217
        %v2228 = vpack.c.b16 %v2218, %v2218
        %v2229 = vpack.c.b16 %v2219, %v2219
        %v2230 = vpack.c.b16 %v2220, %v2220
        %v2231 = vpack.c.b16 %v2221, %v2221
        %v2233 = vshrl.u32 %v2222, 16
        %v2235 = vrot.slane %v2233, 7
        %v2236 = vshll.u32 %v2222, 16
        %v2238 = vor.u32 %v2235, %v2236
        %v2240 = vshrl.u32 %v2223, 16
        %v2242 = vrot.slane %v2240, 7
        %v2243 = vshll.u32 %v2223, 16
        %v2245 = vor.u32 %v2242, %v2243
        %v2247 = vshrl.u32 %v2224, 16
        %v2249 = vrot.slane %v2247, 7
        %v2250 = vshll.u32 %v2224, 16
        %v2252 = vor.u32 %v2249, %v2250
        %v2254 = vshrl.u32 %v2225, 16
        %v2256 = vrot.slane %v2254, 7
        %v2257 = vshll.u32 %v2225, 16
        %v2259 = vor.u32 %v2256, %v2257
        %v2261 = vshrl.u32 %v2226, 16
        %v2263 = vrot.slane %v2261, 7
        %v2264 = vshll.u32 %v2226, 16
        %v2266 = vor.u32 %v2263, %v2264
        %v2268 = vshrl.u32 %v2227, 16
        %v2270 = vrot.slane %v2268, 7
        %v2271 = vshll.u32 %v2227, 16
        %v2273 = vor.u32 %v2270, %v2271
        %v2275 = vshrl.u32 %v2228, 16
        %v2277 = vrot.slane %v2275, 7
        %v2278 = vshll.u32 %v2228, 16
        %v2280 = vor.u32 %v2277, %v2278
        %v2282 = vshrl.u32 %v2229, 16
        %v2284 = vrot.slane %v2282, 7
        %v2285 = vshll.u32 %v2229, 16
        %v2287 = vor.u32 %v2284, %v2285
        %v2289 = vshrl.u32 %v2230, 16
        %v2291 = vrot.slane %v2289, 7
        %v2292 = vshll.u32 %v2230, 16
        %v2294 = vor.u32 %v2291, %v2292
        %v2296 = vshrl.u32 %v2231, 16
        %v2298 = vrot.slane %v2296, 7
        %v2299 = vshll.u32 %v2231, 16
        %v2301 = vor.u32 %v2298, %v2299
        %v2312 = vsel %vm443, 0, %v2238
        %v2313 = vsel %vm443, 0, %v2245
        %v2314 = vsel %vm443, 0, %v2252
        %v2315 = vsel %vm443, 0, %v2259
        %v2316 = vsel %vm443, 0, %v2266
        %v2317 = vsel %vm443, 0, %v2273
        %v2318 = vsel %vm443, 0, %v2280
        %v2319 = vsel %vm443, 0, %v2287
        %v2320 = vsel %vm443, 0, %v2294
        %v2321 = vsel %vm443, 0, %v2301
        %v2322 = vsel %vm451, %v2312, 0
        %v2323 = vsel %vm451, %v2313, 0
        %v2324 = vsel %vm451, %v2314, 0
        %v2325 = vsel %vm451, %v2315, 0
        %v2326 = vsel %vm451, %v2316, 0
        %v2327 = vsel %vm451, %v2317, 0
        %v2328 = vsel %vm451, %v2318, 0
        %v2329 = vsel %vm451, %v2319, 0
        %v2330 = vsel %vm451, %v2320, 0
        %v2331 = vsel %vm451, %v2321, 0
        %v2332 = vld [vmem:[%s6] sm:$0xf]
        %v2333 = vld [vmem:[%s6 + $0x4] sm:$0xf]
        %v2334 = vld [vmem:[%s6 + $0x8] sm:$0xf]
        %v2335 = vld [vmem:[%s6 + $0xc] sm:$0xf]
        %v2336 = vld [vmem:[%s6 + $0x10] sm:$0xf]
        %v2337 = vld [vmem:[%s6 + $0x14] sm:$0xf]
        %v2338 = vld [vmem:[%s6 + $0x18] sm:$0xf]
        %v2339 = vld [vmem:[%s6 + $0x1c] sm:$0xf]
        %v2340 = vld [vmem:[%s6 + $0x20] sm:$0xf]
        %v2341 = vld [vmem:[%s6 + $0x24] sm:$0xf]
        %v2342 = vld [vmem:[%s6 + $0x28] sm:$0xf]
        %v2343 = vld [vmem:[%s6 + $0x2c] sm:$0xf]
        %v2344 = vld [vmem:[%s6 + $0x30] sm:$0xf]
        %v2345 = vld [vmem:[%s6 + $0x34] sm:$0xf]
        %v2346 = vld [vmem:[%s6 + $0x38] sm:$0xf]
        %v2347 = vld [vmem:[%s6 + $0x3c] sm:$0xf]
        %v2348 = vld [vmem:[%s6 + $0x40] sm:$0xf]
        %v2349 = vld [vmem:[%s6 + $0x44] sm:$0xf]
        %v2358 = vunpack.c.l.b16 %v2322
        %v2359 = vunpack.c.h.b16 %v2322
        %v2360 = vunpack.c.l.b16 %v2323
        %v2361 = vunpack.c.h.b16 %v2323
        %v2362 = vunpack.c.l.b16 %v2324
        %v2363 = vunpack.c.h.b16 %v2324
        %v2364 = vunpack.c.l.b16 %v2325
        %v2365 = vunpack.c.h.b16 %v2325
        %v2366 = vunpack.c.l.b16 %v2326
        %v2367 = vunpack.c.h.b16 %v2326
        %v2368 = vunpack.c.l.b16 %v2327
        %v2369 = vunpack.c.h.b16 %v2327
        %v2370 = vunpack.c.l.b16 %v2328
        %v2371 = vunpack.c.h.b16 %v2328
        %v2372 = vunpack.c.l.b16 %v2329
        %v2373 = vunpack.c.h.b16 %v2329
        %v2374 = vpack.c.b16 %v2358, %v2358
        %v2375 = vpack.c.b16 %v2359, %v2359
        %v2376 = vpack.c.b16 %v2360, %v2360
        %v2377 = vpack.c.b16 %v2361, %v2361
        %v2378 = vpack.c.b16 %v2362, %v2362
        %v2379 = vpack.c.b16 %v2363, %v2363
        %v2380 = vpack.c.b16 %v2364, %v2364
        %v2381 = vpack.c.b16 %v2365, %v2365
        %v2382 = vpack.c.b16 %v2366, %v2366
        %v2383 = vpack.c.b16 %v2367, %v2367
        %v2384 = vpack.c.b16 %v2368, %v2368
        %v2385 = vpack.c.b16 %v2369, %v2369
        %v2386 = vpack.c.b16 %v2370, %v2370
        %v2387 = vpack.c.b16 %v2371, %v2371
        %v2388 = vpack.c.b16 %v2372, %v2372
        %v2389 = vpack.c.b16 %v2373, %v2373
        %v2391 = vshrl.u32 %v2374, 16
        %v2393 = vrot.slane %v2391, 4
        %v2394 = vshll.u32 %v2374, 16
        %v2396 = vrot.slane %v2394, 5
        %v2397 = vor.u32 %v2393, %v2396
        %v2398 = vrot.slane %v2397, 4
        %v2400 = vshll.u32 %v2375, 16
        %v2402 = vrot.slane %v2400, 5
        %v2403 = vsel %vm520, %v2398, %v2402
        %v2405 = vshrl.u32 %v2376, 16
        %v2407 = vrot.slane %v2405, 4
        %v2408 = vshll.u32 %v2376, 16
        %v2410 = vrot.slane %v2408, 5
        %v2411 = vor.u32 %v2407, %v2410
        %v2412 = vrot.slane %v2411, 4
        %v2414 = vshll.u32 %v2377, 16
        %v2416 = vrot.slane %v2414, 5
        %v2417 = vsel %vm520, %v2412, %v2416
        %v2419 = vshrl.u32 %v2378, 16
        %v2421 = vrot.slane %v2419, 4
        %v2422 = vshll.u32 %v2378, 16
        %v2424 = vrot.slane %v2422, 5
        %v2425 = vor.u32 %v2421, %v2424
        %v2426 = vrot.slane %v2425, 4
        %v2428 = vshll.u32 %v2379, 16
        %v2430 = vrot.slane %v2428, 5
        %v2431 = vsel %vm520, %v2426, %v2430
        %v2433 = vshrl.u32 %v2380, 16
        %v2435 = vrot.slane %v2433, 4
        %v2436 = vshll.u32 %v2380, 16
        %v2438 = vrot.slane %v2436, 5
        %v2439 = vor.u32 %v2435, %v2438
        %v2440 = vrot.slane %v2439, 4
        %v2442 = vshll.u32 %v2381, 16
        %v2444 = vrot.slane %v2442, 5
        %v2445 = vsel %vm520, %v2440, %v2444
        %v2447 = vshrl.u32 %v2382, 16
        %v2449 = vrot.slane %v2447, 4
        %v2450 = vshll.u32 %v2382, 16
        %v2452 = vrot.slane %v2450, 5
        %v2453 = vor.u32 %v2449, %v2452
        %v2454 = vrot.slane %v2453, 4
        %v2456 = vshll.u32 %v2383, 16
        %v2458 = vrot.slane %v2456, 5
        %v2459 = vsel %vm520, %v2454, %v2458
        %v2461 = vshrl.u32 %v2384, 16
        %v2463 = vrot.slane %v2461, 4
        %v2464 = vshll.u32 %v2384, 16
        %v2466 = vrot.slane %v2464, 5
        %v2467 = vor.u32 %v2463, %v2466
        %v2468 = vrot.slane %v2467, 4
        %v2470 = vshll.u32 %v2385, 16
        %v2472 = vrot.slane %v2470, 5
        %v2473 = vsel %vm520, %v2468, %v2472
        %v2475 = vshrl.u32 %v2386, 16
        %v2477 = vrot.slane %v2475, 4
        %v2478 = vshll.u32 %v2386, 16
        %v2480 = vrot.slane %v2478, 5
        %v2481 = vor.u32 %v2477, %v2480
        %v2482 = vrot.slane %v2481, 4
        %v2484 = vshll.u32 %v2387, 16
        %v2486 = vrot.slane %v2484, 5
        %v2487 = vsel %vm520, %v2482, %v2486
        %v2489 = vshrl.u32 %v2388, 16
        %v2491 = vrot.slane %v2489, 4
        %v2492 = vshll.u32 %v2388, 16
        %v2494 = vrot.slane %v2492, 5
        %v2495 = vor.u32 %v2491, %v2494
        %v2496 = vrot.slane %v2495, 4
        %v2498 = vshll.u32 %v2389, 16
        %v2500 = vrot.slane %v2498, 5
        %v2501 = vsel %vm520, %v2496, %v2500
        %v2502 = vunpack.c.l.b16 %v2403
        %v2503 = vunpack.c.l.b16 %v2417
        %v2504 = vunpack.c.l.b16 %v2431
        %v2505 = vunpack.c.l.b16 %v2445
        %v2506 = vunpack.c.l.b16 %v2459
        %v2507 = vunpack.c.l.b16 %v2473
        %v2508 = vunpack.c.l.b16 %v2487
        %v2509 = vunpack.c.l.b16 %v2501
        %v2510 = vpack.c.b16 %v2503, %v2502
        %v2511 = vpack.c.b16 %v2505, %v2504
        %v2512 = vpack.c.b16 %v2507, %v2506
        %v2513 = vpack.c.b16 %v2509, %v2508
        %v2516 = vunpack.c.l.b16 %v2334
        %v2517 = vunpack.c.l.b16 %v2335
        %v2518 = vpack.c.b16 %v2517, %v2516
        %v2521 = vsel %vm1343, %v2510, 0
        %v2524 = vsel %vm1343, %v2511, 0
        %v2527 = vsel %vm1343, %v2512, 0
        %v2530 = vsel %vm1343, %v2513, 0
        %2532 = vmatpush.bf16.msra.mxu0 0
        %2533 = vmatpush.bf16.msra.mxu0 0
        %2534 = vmatpush.bf16.msra.mxu0 0
        %2535 = vmatpush.bf16.msra.mxu0 0
        %2536 = vmatpush.bf16.msra.mxu0 0
        %2537 = vmatpush.bf16.msra.mxu0 0
        %2538 = vmatpush.bf16.msra.mxu0 0
        %2539 = vmatpush.bf16.msra.mxu0 %v2518
        %2540 = vmatmul.bf16.gmra.mxu0 %v2521
        %v2541 = vpop.f32.mrf.mxu0
        %v2542 = vadd.f32 0.0, %v2541
        %v2543 = vpop.f32.mrf.mxu0
        %v2544 = vadd.f32 0.0, %v2543
        %2545 = vmatmul.bf16.gmra.mxu0 %v2524
        %v2546 = vpop.f32.mrf.mxu0
        %v2547 = vadd.f32 0.0, %v2546
        %v2548 = vpop.f32.mrf.mxu0
        %v2549 = vadd.f32 0.0, %v2548
        %2550 = vmatmul.bf16.gmra.mxu0 %v2527
        %v2551 = vpop.f32.mrf.mxu0
        %v2552 = vadd.f32 0.0, %v2551
        %v2553 = vpop.f32.mrf.mxu0
        %v2554 = vadd.f32 0.0, %v2553
        %2555 = vmatmul.bf16.gmra.mxu0 %v2530
        %v2556 = vpop.f32.mrf.mxu0
        %v2557 = vadd.f32 0.0, %v2556
        %v2558 = vpop.f32.mrf.mxu0
        %v2559 = vadd.f32 0.0, %v2558
        %2560 = vdwg.mxu0
        %v2561 = vpack.c.b16 %v2360, %v2358
        %v2562 = vpack.c.b16 %v2364, %v2362
        %v2563 = vpack.c.b16 %v2368, %v2366
        %v2564 = vpack.c.b16 %v2372, %v2370
        %v2567 = vunpack.c.l.b16 %v2332
        %v2568 = vunpack.c.l.b16 %v2333
        %v2569 = vpack.c.b16 %v2568, %v2567
        %v2572 = vsel %vm1343, %v2561, 0
        %v2575 = vsel %vm1343, %v2562, 0
        %v2578 = vsel %vm1343, %v2563, 0
        %v2581 = vsel %vm1343, %v2564, 0
        %2583 = vmatpush.bf16.msra.mxu0 0
        %2584 = vmatpush.bf16.msra.mxu0 0
        %2585 = vmatpush.bf16.msra.mxu0 0
        %2586 = vmatpush.bf16.msra.mxu0 0
        %2587 = vmatpush.bf16.msra.mxu0 0
        %2588 = vmatpush.bf16.msra.mxu0 0
        %2589 = vmatpush.bf16.msra.mxu0 0
        %2590 = vmatpush.bf16.msra.mxu0 %v2569
        %2591 = vmatmul.bf16.gmra.mxu0 %v2572
        %v2592 = vpop.f32.mrf.mxu0
        %v2593 = vadd.f32 %v2542, %v2592
        %v2594 = vpop.f32.mrf.mxu0
        %v2595 = vadd.f32 %v2544, %v2594
        %2596 = vmatmul.bf16.gmra.mxu0 %v2575
        %v2597 = vpop.f32.mrf.mxu0
        %v2598 = vadd.f32 %v2547, %v2597
        %v2599 = vpop.f32.mrf.mxu0
        %v2600 = vadd.f32 %v2549, %v2599
        %2601 = vmatmul.bf16.gmra.mxu0 %v2578
        %v2602 = vpop.f32.mrf.mxu0
        %v2603 = vadd.f32 %v2552, %v2602
        %v2604 = vpop.f32.mrf.mxu0
        %v2605 = vadd.f32 %v2554, %v2604
        %2606 = vmatmul.bf16.gmra.mxu0 %v2581
        %v2607 = vpop.f32.mrf.mxu0
        %v2608 = vadd.f32 %v2557, %v2607
        %v2609 = vpop.f32.mrf.mxu0
        %v2610 = vadd.f32 %v2559, %v2609
        %2611 = vdwg.mxu0
        %v2612 = vrot.slane %v2374, 5
        %v2613 = vrot.slane %v2612, 4
        %v2614 = vrot.slane %v2375, 5
        %v2615 = vsel %vm721, %v2613, %v2614
        %v2616 = vrot.slane %v2376, 5
        %v2617 = vrot.slane %v2616, 4
        %v2618 = vrot.slane %v2377, 5
        %v2619 = vsel %vm721, %v2617, %v2618
        %v2620 = vrot.slane %v2378, 5
        %v2621 = vrot.slane %v2620, 4
        %v2622 = vrot.slane %v2379, 5
        %v2623 = vsel %vm721, %v2621, %v2622
        %v2624 = vrot.slane %v2380, 5
        %v2625 = vrot.slane %v2624, 4
        %v2626 = vrot.slane %v2381, 5
        %v2627 = vsel %vm721, %v2625, %v2626
        %v2628 = vrot.slane %v2382, 5
        %v2629 = vrot.slane %v2628, 4
        %v2630 = vrot.slane %v2383, 5
        %v2631 = vsel %vm721, %v2629, %v2630
        %v2632 = vrot.slane %v2384, 5
        %v2633 = vrot.slane %v2632, 4
        %v2634 = vrot.slane %v2385, 5
        %v2635 = vsel %vm721, %v2633, %v2634
        %v2636 = vrot.slane %v2386, 5
        %v2637 = vrot.slane %v2636, 4
        %v2638 = vrot.slane %v2387, 5
        %v2639 = vsel %vm721, %v2637, %v2638
        %v2640 = vrot.slane %v2388, 5
        %v2641 = vrot.slane %v2640, 4
        %v2642 = vrot.slane %v2389, 5
        %v2643 = vsel %vm721, %v2641, %v2642
        %v2644 = vunpack.c.l.b16 %v2615
        %v2645 = vunpack.c.l.b16 %v2619
        %v2646 = vunpack.c.l.b16 %v2623
        %v2647 = vunpack.c.l.b16 %v2627
        %v2648 = vunpack.c.l.b16 %v2631
        %v2649 = vunpack.c.l.b16 %v2635
        %v2650 = vunpack.c.l.b16 %v2639
        %v2651 = vunpack.c.l.b16 %v2643
        %v2652 = vpack.c.b16 %v2645, %v2644
        %v2653 = vpack.c.b16 %v2647, %v2646
        %v2654 = vpack.c.b16 %v2649, %v2648
        %v2655 = vpack.c.b16 %v2651, %v2650
        %v2658 = vunpack.c.l.b16 %v2336
        %v2659 = vunpack.c.l.b16 %v2337
        %v2660 = vpack.c.b16 %v2659, %v2658
        %v2663 = vsel %vm1343, %v2652, 0
        %v2666 = vsel %vm1343, %v2653, 0
        %v2669 = vsel %vm1343, %v2654, 0
        %v2672 = vsel %vm1343, %v2655, 0
        %2674 = vmatpush.bf16.msra.mxu0 0
        %2675 = vmatpush.bf16.msra.mxu0 0
        %2676 = vmatpush.bf16.msra.mxu0 0
        %2677 = vmatpush.bf16.msra.mxu0 0
        %2678 = vmatpush.bf16.msra.mxu0 0
        %2679 = vmatpush.bf16.msra.mxu0 0
        %2680 = vmatpush.bf16.msra.mxu0 0
        %2681 = vmatpush.bf16.msra.mxu0 %v2660
        %2682 = vmatmul.bf16.gmra.mxu0 %v2663
        %v2683 = vpop.f32.mrf.mxu0
        %v2684 = vadd.f32 0.0, %v2683
        %v2685 = vpop.f32.mrf.mxu0
        %v2686 = vadd.f32 0.0, %v2685
        %2687 = vmatmul.bf16.gmra.mxu0 %v2666
        %v2688 = vpop.f32.mrf.mxu0
        %v2689 = vadd.f32 0.0, %v2688
        %v2690 = vpop.f32.mrf.mxu0
        %v2691 = vadd.f32 0.0, %v2690
        %2692 = vmatmul.bf16.gmra.mxu0 %v2669
        %v2693 = vpop.f32.mrf.mxu0
        %v2694 = vadd.f32 0.0, %v2693
        %v2695 = vpop.f32.mrf.mxu0
        %v2696 = vadd.f32 0.0, %v2695
        %2697 = vmatmul.bf16.gmra.mxu0 %v2672
        %v2698 = vpop.f32.mrf.mxu0
        %v2699 = vadd.f32 0.0, %v2698
        %v2700 = vpop.f32.mrf.mxu0
        %v2701 = vadd.f32 0.0, %v2700
        %2702 = vdwg.mxu0
        %v2703 = vadd.f32 %v2593, %v2684
        %v2704 = vadd.f32 %v2595, %v2686
        %v2705 = vadd.f32 %v2598, %v2689
        %v2706 = vadd.f32 %v2600, %v2691
        %v2707 = vadd.f32 %v2603, %v2694
        %v2708 = vadd.f32 %v2605, %v2696
        %v2709 = vadd.f32 %v2608, %v2699
        %v2710 = vadd.f32 %v2610, %v2701
        %v2712 = vunpack.c.l.b16 %v2330
        %v2713 = vpack.c.b16 %v2362, %v2360
        %v2714 = vpack.c.b16 %v2366, %v2364
        %v2715 = vpack.c.b16 %v2370, %v2368
        %v2716 = vpack.c.b16 %v2712, %v2372
        %v2719 = vunpack.c.l.b16 %v2338
        %v2720 = vunpack.c.l.b16 %v2339
        %v2721 = vpack.c.b16 %v2720, %v2719
        %v2724 = vsel %vm1343, %v2713, 0
        %v2727 = vsel %vm1343, %v2714, 0
        %v2730 = vsel %vm1343, %v2715, 0
        %v2733 = vsel %vm1343, %v2716, 0
        %2735 = vmatpush.bf16.msra.mxu0 0
        %2736 = vmatpush.bf16.msra.mxu0 0
        %2737 = vmatpush.bf16.msra.mxu0 0
        %2738 = vmatpush.bf16.msra.mxu0 0
        %2739 = vmatpush.bf16.msra.mxu0 0
        %2740 = vmatpush.bf16.msra.mxu0 0
        %2741 = vmatpush.bf16.msra.mxu0 0
        %2742 = vmatpush.bf16.msra.mxu0 %v2721
        %2743 = vmatmul.bf16.gmra.mxu0 %v2724
        %v2744 = vpop.f32.mrf.mxu0
        %v2745 = vadd.f32 0.0, %v2744
        %v2746 = vpop.f32.mrf.mxu0
        %v2747 = vadd.f32 0.0, %v2746
        %2748 = vmatmul.bf16.gmra.mxu0 %v2727
        %v2749 = vpop.f32.mrf.mxu0
        %v2750 = vadd.f32 0.0, %v2749
        %v2751 = vpop.f32.mrf.mxu0
        %v2752 = vadd.f32 0.0, %v2751
        %2753 = vmatmul.bf16.gmra.mxu0 %v2730
        %v2754 = vpop.f32.mrf.mxu0
        %v2755 = vadd.f32 0.0, %v2754
        %v2756 = vpop.f32.mrf.mxu0
        %v2757 = vadd.f32 0.0, %v2756
        %2758 = vmatmul.bf16.gmra.mxu0 %v2733
        %v2759 = vpop.f32.mrf.mxu0
        %v2760 = vadd.f32 0.0, %v2759
        %v2761 = vpop.f32.mrf.mxu0
        %v2762 = vadd.f32 0.0, %v2761
        %2763 = vdwg.mxu0
        %v2764 = vadd.f32 %v2703, %v2745
        %v2765 = vadd.f32 %v2704, %v2747
        %v2766 = vadd.f32 %v2705, %v2750
        %v2767 = vadd.f32 %v2706, %v2752
        %v2768 = vadd.f32 %v2707, %v2755
        %v2769 = vadd.f32 %v2708, %v2757
        %v2770 = vadd.f32 %v2709, %v2760
        %v2771 = vadd.f32 %v2710, %v2762
        %v2772 = vunpack.c.h.b16 %v2330
        %v2773 = vpack.c.b16 %v2712, %v2712
        %v2774 = vpack.c.b16 %v2772, %v2772
        %v2776 = vshrl.u32 %v2773, 16
        %v2778 = vrot.slane %v2776, 4
        %v2779 = vshll.u32 %v2773, 16
        %v2781 = vrot.slane %v2779, 5
        %v2782 = vor.u32 %v2778, %v2781
        %v2783 = vrot.slane %v2782, 4
        %v2785 = vshll.u32 %v2774, 16
        %v2787 = vrot.slane %v2785, 5
        %v2788 = vsel %vm520, %v2783, %v2787
        %v2789 = vunpack.c.l.b16 %v2788
        %v2790 = vpack.c.b16 %v2504, %v2503
        %v2791 = vpack.c.b16 %v2506, %v2505
        %v2792 = vpack.c.b16 %v2508, %v2507
        %v2793 = vpack.c.b16 %v2789, %v2509
        %v2796 = vunpack.c.l.b16 %v2340
        %v2797 = vunpack.c.l.b16 %v2341
        %v2798 = vpack.c.b16 %v2797, %v2796
        %v2801 = vsel %vm1343, %v2790, 0
        %v2804 = vsel %vm1343, %v2791, 0
        %v2807 = vsel %vm1343, %v2792, 0
        %v2810 = vsel %vm1343, %v2793, 0
        %2812 = vmatpush.bf16.msra.mxu0 0
        %2813 = vmatpush.bf16.msra.mxu0 0
        %2814 = vmatpush.bf16.msra.mxu0 0
        %2815 = vmatpush.bf16.msra.mxu0 0
        %2816 = vmatpush.bf16.msra.mxu0 0
        %2817 = vmatpush.bf16.msra.mxu0 0
        %2818 = vmatpush.bf16.msra.mxu0 0
        %2819 = vmatpush.bf16.msra.mxu0 %v2798
        %2820 = vmatmul.bf16.gmra.mxu0 %v2801
        %v2821 = vpop.f32.mrf.mxu0
        %v2822 = vadd.f32 0.0, %v2821
        %v2823 = vpop.f32.mrf.mxu0
        %v2824 = vadd.f32 0.0, %v2823
        %2825 = vmatmul.bf16.gmra.mxu0 %v2804
        %v2826 = vpop.f32.mrf.mxu0
        %v2827 = vadd.f32 0.0, %v2826
        %v2828 = vpop.f32.mrf.mxu0
        %v2829 = vadd.f32 0.0, %v2828
        %2830 = vmatmul.bf16.gmra.mxu0 %v2807
        %v2831 = vpop.f32.mrf.mxu0
        %v2832 = vadd.f32 0.0, %v2831
        %v2833 = vpop.f32.mrf.mxu0
        %v2834 = vadd.f32 0.0, %v2833
        %2835 = vmatmul.bf16.gmra.mxu0 %v2810
        %v2836 = vpop.f32.mrf.mxu0
        %v2837 = vadd.f32 0.0, %v2836
        %v2838 = vpop.f32.mrf.mxu0
        %v2839 = vadd.f32 0.0, %v2838
        %2840 = vdwg.mxu0
        %v2841 = vadd.f32 %v2764, %v2822
        %v2842 = vadd.f32 %v2765, %v2824
        %v2843 = vadd.f32 %v2766, %v2827
        %v2844 = vadd.f32 %v2767, %v2829
        %v2845 = vadd.f32 %v2768, %v2832
        %v2846 = vadd.f32 %v2769, %v2834
        %v2847 = vadd.f32 %v2770, %v2837
        %v2848 = vadd.f32 %v2771, %v2839
        %v2849 = vrot.slane %v2773, 5
        %v2850 = vrot.slane %v2849, 4
        %v2851 = vrot.slane %v2774, 5
        %v2852 = vsel %vm721, %v2850, %v2851
        %v2853 = vunpack.c.l.b16 %v2852
        %v2854 = vpack.c.b16 %v2646, %v2645
        %v2855 = vpack.c.b16 %v2648, %v2647
        %v2856 = vpack.c.b16 %v2650, %v2649
        %v2857 = vpack.c.b16 %v2853, %v2651
        %v2860 = vunpack.c.l.b16 %v2342
        %v2861 = vunpack.c.l.b16 %v2343
        %v2862 = vpack.c.b16 %v2861, %v2860
        %v2865 = vsel %vm1343, %v2854, 0
        %v2868 = vsel %vm1343, %v2855, 0
        %v2871 = vsel %vm1343, %v2856, 0
        %v2874 = vsel %vm1343, %v2857, 0
        %2876 = vmatpush.bf16.msra.mxu0 0
        %2877 = vmatpush.bf16.msra.mxu0 0
        %2878 = vmatpush.bf16.msra.mxu0 0
        %2879 = vmatpush.bf16.msra.mxu0 0
        %2880 = vmatpush.bf16.msra.mxu0 0
        %2881 = vmatpush.bf16.msra.mxu0 0
        %2882 = vmatpush.bf16.msra.mxu0 0
        %2883 = vmatpush.bf16.msra.mxu0 %v2862
        %2884 = vmatmul.bf16.gmra.mxu0 %v2865
        %v2885 = vpop.f32.mrf.mxu0
        %v2886 = vadd.f32 0.0, %v2885
        %v2887 = vpop.f32.mrf.mxu0
        %v2888 = vadd.f32 0.0, %v2887
        %2889 = vmatmul.bf16.gmra.mxu0 %v2868
        %v2890 = vpop.f32.mrf.mxu0
        %v2891 = vadd.f32 0.0, %v2890
        %v2892 = vpop.f32.mrf.mxu0
        %v2893 = vadd.f32 0.0, %v2892
        %2894 = vmatmul.bf16.gmra.mxu0 %v2871
        %v2895 = vpop.f32.mrf.mxu0
        %v2896 = vadd.f32 0.0, %v2895
        %v2897 = vpop.f32.mrf.mxu0
        %v2898 = vadd.f32 0.0, %v2897
        %2899 = vmatmul.bf16.gmra.mxu0 %v2874
        %v2900 = vpop.f32.mrf.mxu0
        %v2901 = vadd.f32 0.0, %v2900
        %v2902 = vpop.f32.mrf.mxu0
        %v2903 = vadd.f32 0.0, %v2902
        %2904 = vdwg.mxu0
        %v2905 = vadd.f32 %v2841, %v2886
        %v2906 = vadd.f32 %v2842, %v2888
        %v2907 = vadd.f32 %v2843, %v2891
        %v2908 = vadd.f32 %v2844, %v2893
        %v2909 = vadd.f32 %v2845, %v2896
        %v2910 = vadd.f32 %v2846, %v2898
        %v2911 = vadd.f32 %v2847, %v2901
        %v2912 = vadd.f32 %v2848, %v2903
        %v2914 = vunpack.c.l.b16 %v2331
        %v2915 = vpack.c.b16 %v2914, %v2712
        %v2918 = vunpack.c.l.b16 %v2344
        %v2919 = vunpack.c.l.b16 %v2345
        %v2920 = vpack.c.b16 %v2919, %v2918
        %v2923 = vsel %vm1343, %v2915, 0
        %2925 = vmatpush.bf16.msra.mxu0 0
        %2926 = vmatpush.bf16.msra.mxu0 0
        %2927 = vmatpush.bf16.msra.mxu0 0
        %2928 = vmatpush.bf16.msra.mxu0 0
        %2929 = vmatpush.bf16.msra.mxu0 0
        %2930 = vmatpush.bf16.msra.mxu0 0
        %2931 = vmatpush.bf16.msra.mxu0 0
        %2932 = vmatpush.bf16.msra.mxu0 %v2920
        %2933 = vmatmul.bf16.gmra.mxu0 %v2575
        %v2934 = vpop.f32.mrf.mxu0
        %v2935 = vadd.f32 0.0, %v2934
        %v2936 = vpop.f32.mrf.mxu0
        %v2937 = vadd.f32 0.0, %v2936
        %2938 = vmatmul.bf16.gmra.mxu0 %v2578
        %v2939 = vpop.f32.mrf.mxu0
        %v2940 = vadd.f32 0.0, %v2939
        %v2941 = vpop.f32.mrf.mxu0
        %v2942 = vadd.f32 0.0, %v2941
        %2943 = vmatmul.bf16.gmra.mxu0 %v2581
        %v2944 = vpop.f32.mrf.mxu0
        %v2945 = vadd.f32 0.0, %v2944
        %v2946 = vpop.f32.mrf.mxu0
        %v2947 = vadd.f32 0.0, %v2946
        %2948 = vmatmul.bf16.gmra.mxu0 %v2923
        %v2949 = vpop.f32.mrf.mxu0
        %v2950 = vadd.f32 0.0, %v2949
        %v2951 = vpop.f32.mrf.mxu0
        %v2952 = vadd.f32 0.0, %v2951
        %2953 = vdwg.mxu0
        %v2954 = vadd.f32 %v2905, %v2935
        %v2955 = vadd.f32 %v2906, %v2937
        %v2956 = vadd.f32 %v2907, %v2940
        %v2957 = vadd.f32 %v2908, %v2942
        %v2958 = vadd.f32 %v2909, %v2945
        %v2959 = vadd.f32 %v2910, %v2947
        %v2960 = vadd.f32 %v2911, %v2950
        %v2961 = vadd.f32 %v2912, %v2952
        %v2962 = vunpack.c.h.b16 %v2331
        %v2963 = vpack.c.b16 %v2914, %v2914
        %v2964 = vpack.c.b16 %v2962, %v2962
        %v2966 = vshrl.u32 %v2963, 16
        %v2968 = vrot.slane %v2966, 4
        %v2969 = vshll.u32 %v2963, 16
        %v2971 = vrot.slane %v2969, 5
        %v2972 = vor.u32 %v2968, %v2971
        %v2973 = vrot.slane %v2972, 4
        %v2975 = vshll.u32 %v2964, 16
        %v2977 = vrot.slane %v2975, 5
        %v2978 = vsel %vm520, %v2973, %v2977
        %v2979 = vunpack.c.l.b16 %v2978
        %v2980 = vpack.c.b16 %v2979, %v2789
        %v2983 = vunpack.c.l.b16 %v2346
        %v2984 = vunpack.c.l.b16 %v2347
        %v2985 = vpack.c.b16 %v2984, %v2983
        %v2988 = vsel %vm1343, %v2980, 0
        %2990 = vmatpush.bf16.msra.mxu0 0
        %2991 = vmatpush.bf16.msra.mxu0 0
        %2992 = vmatpush.bf16.msra.mxu0 0
        %2993 = vmatpush.bf16.msra.mxu0 0
        %2994 = vmatpush.bf16.msra.mxu0 0
        %2995 = vmatpush.bf16.msra.mxu0 0
        %2996 = vmatpush.bf16.msra.mxu0 0
        %2997 = vmatpush.bf16.msra.mxu0 %v2985
        %2998 = vmatmul.bf16.gmra.mxu0 %v2524
        %v2999 = vpop.f32.mrf.mxu0
        %v3000 = vadd.f32 0.0, %v2999
        %v3001 = vpop.f32.mrf.mxu0
        %v3002 = vadd.f32 0.0, %v3001
        %3003 = vmatmul.bf16.gmra.mxu0 %v2527
        %v3004 = vpop.f32.mrf.mxu0
        %v3005 = vadd.f32 0.0, %v3004
        %v3006 = vpop.f32.mrf.mxu0
        %v3007 = vadd.f32 0.0, %v3006
        %3008 = vmatmul.bf16.gmra.mxu0 %v2530
        %v3009 = vpop.f32.mrf.mxu0
        %v3010 = vadd.f32 0.0, %v3009
        %v3011 = vpop.f32.mrf.mxu0
        %v3012 = vadd.f32 0.0, %v3011
        %3013 = vmatmul.bf16.gmra.mxu0 %v2988
        %v3014 = vpop.f32.mrf.mxu0
        %v3015 = vadd.f32 0.0, %v3014
        %v3016 = vpop.f32.mrf.mxu0
        %v3017 = vadd.f32 0.0, %v3016
        %3018 = vdwg.mxu0
        %v3019 = vadd.f32 %v2954, %v3000
        %v3020 = vadd.f32 %v2955, %v3002
        %v3021 = vadd.f32 %v2956, %v3005
        %v3022 = vadd.f32 %v2957, %v3007
        %v3023 = vadd.f32 %v2958, %v3010
        %v3024 = vadd.f32 %v2959, %v3012
        %v3025 = vadd.f32 %v2960, %v3015
        %v3026 = vadd.f32 %v2961, %v3017
        %v3027 = vrot.slane %v2963, 5
        %v3028 = vrot.slane %v3027, 4
        %v3029 = vrot.slane %v2964, 5
        %v3030 = vsel %vm721, %v3028, %v3029
        %v3031 = vunpack.c.l.b16 %v3030
        %v3032 = vpack.c.b16 %v3031, %v2853
        %v3035 = vunpack.c.l.b16 %v2348
        %v3036 = vunpack.c.l.b16 %v2349
        %v3037 = vpack.c.b16 %v3036, %v3035
        %v3040 = vsel %vm1343, %v3032, 0
        %3042 = vmatpush.bf16.msra.mxu0 0
        %3043 = vmatpush.bf16.msra.mxu0 0
        %3044 = vmatpush.bf16.msra.mxu0 0
        %3045 = vmatpush.bf16.msra.mxu0 0
        %3046 = vmatpush.bf16.msra.mxu0 0
        %3047 = vmatpush.bf16.msra.mxu0 0
        %3048 = vmatpush.bf16.msra.mxu0 0
        %3049 = vmatpush.bf16.msra.mxu0 %v3037
        %3050 = vmatmul.bf16.gmra.mxu0 %v2666
        %v3051 = vpop.f32.mrf.mxu0
        %v3052 = vadd.f32 0.0, %v3051
        %v3053 = vpop.f32.mrf.mxu0
        %v3054 = vadd.f32 0.0, %v3053
        %3055 = vmatmul.bf16.gmra.mxu0 %v2669
        %v3056 = vpop.f32.mrf.mxu0
        %v3057 = vadd.f32 0.0, %v3056
        %v3058 = vpop.f32.mrf.mxu0
        %v3059 = vadd.f32 0.0, %v3058
        %3060 = vmatmul.bf16.gmra.mxu0 %v2672
        %v3061 = vpop.f32.mrf.mxu0
        %v3062 = vadd.f32 0.0, %v3061
        %v3063 = vpop.f32.mrf.mxu0
        %v3064 = vadd.f32 0.0, %v3063
        %3065 = vmatmul.bf16.gmra.mxu0 %v3040
        %v3066 = vpop.f32.mrf.mxu0
        %v3067 = vadd.f32 0.0, %v3066
        %v3068 = vpop.f32.mrf.mxu0
        %v3069 = vadd.f32 0.0, %v3068
        %3070 = vdwg.mxu0
        %v3071 = vadd.f32 %v3019, %v3052
        %v3072 = vadd.f32 %v3020, %v3054
        %v3073 = vadd.f32 %v3021, %v3057
        %v3074 = vadd.f32 %v3022, %v3059
        %v3075 = vadd.f32 %v3023, %v3062
        %v3076 = vadd.f32 %v3024, %v3064
        %v3077 = vadd.f32 %v3025, %v3067
        %v3078 = vadd.f32 %v3026, %v3069
        %v3079 = vld [vmem:[%s7] sm:$0x1]
        %v3081 = vperm.slane %v3079, 0
        %v3083 = vmul.f32 %v3071, %v3081
        %v3084 = vmul.f32 %v3072, %v3081
        %v3085 = vmul.f32 %v3073, %v3081
        %v3086 = vmul.f32 %v3074, %v3081
        %v3087 = vmul.f32 %v3075, %v3081
        %v3088 = vmul.f32 %v3076, %v3081
        %v3089 = vmul.f32 %v3077, %v3081
        %v3090 = vmul.f32 %v3078, %v3081
        %v3091 = vld [vmem:[%s8] sm:$0x1]
        %v3093 = vperm.slane %v3091, 0
        %v3095 = vadd.f32 %v3083, %v3093
        %v3096 = vadd.f32 %v3084, %v3093
        %v3097 = vadd.f32 %v3085, %v3093
        %v3098 = vadd.f32 %v3086, %v3093
        %v3099 = vadd.f32 %v3087, %v3093
        %v3100 = vadd.f32 %v3088, %v3093
        %v3101 = vadd.f32 %v3089, %v3093
        %v3102 = vadd.f32 %v3090, %v3093
        %v3103 = vmax.f32 %v3095, 0.0
        %v3104 = vmax.f32 %v3096, 0.0
        %v3105 = vmax.f32 %v3097, 0.0
        %v3106 = vmax.f32 %v3098, 0.0
        %v3107 = vmax.f32 %v3099, 0.0
        %v3108 = vmax.f32 %v3100, 0.0
        %v3109 = vmax.f32 %v3101, 0.0
        %v3110 = vmax.f32 %v3102, 0.0
        %v3111 = vpack.c.bf16 %v3103, %v3103
        %v3112 = vpack.c.bf16 %v3104, %v3104
        %v3113 = vpack.c.bf16 %v3105, %v3105
        %v3114 = vpack.c.bf16 %v3106, %v3106
        %v3115 = vpack.c.bf16 %v3107, %v3107
        %v3116 = vpack.c.bf16 %v3108, %v3108
        %v3117 = vpack.c.bf16 %v3109, %v3109
        %v3118 = vpack.c.bf16 %v3110, %v3110
        %vm3119 = vcmask 125952
        %3120 = vst.msk [vmem:[%s381] sm:$0xf] %vm3119, %v3111
        %3121 = vst.msk [vmem:[%s381 + $0x4] sm:$0xf] %vm3119, %v3112
        %3122 = vst.msk [vmem:[%s381 + $0x8] sm:$0xf] %vm3119, %v3113
        %3123 = vst.msk [vmem:[%s381 + $0xc] sm:$0xf] %vm3119, %v3114
        %3124 = vst.msk [vmem:[%s381 + $0x10] sm:$0xf] %vm3119, %v3115
        %3125 = vst.msk [vmem:[%s381 + $0x14] sm:$0xf] %vm3119, %v3116
        %3126 = vst.msk [vmem:[%s381 + $0x18] sm:$0xf] %vm3119, %v3117
        %3127 = vst.msk [vmem:[%s381 + $0x1c] sm:$0xf] %vm3119, %v3118
        %s3128 = sand.u32 %s247, 1
        %s3129 = scalar_lea.sflag [#allocation4], %s3128
        %s3130 = sand.u32 %s247, 1
        %s3131 = smul.addr %s3130, 32
        %s3132 = scalar_lea.vmem [#allocation5], %s3131
        // Predicated region
        $region61: #{tpu_custom_call.1} parent=55 // pred_check
          %p3133 = pneg %p257
        $region62: #{tpu_custom_call.1} parent=55 // pred_check_branch
          %3135 = sbr.rel (%p3133) target = $region64
        $region63: #{tpu_custom_call.1} parent=55 // pred_region
          %s3136 = smul.u32 8, %s31
          %3138 = vsyncadd %s3129, 0
          %s3139 = smul.addr %s30, 8
          %s3140 = sadd.s32 %s3136, %s3139
          %s3141 = smul.addr %s3140, 4
          %s3142 = scalar_lea.hbm %s9, %s3141
          %s3143 = sshll.u32 %s3132, 4
          %s3144 = int_to_ptr.vmem [resolvable:$true] %s3143
          %s3145 = sshll.u32 %s3142, 4
          %s3146 = int_to_ptr.hbm [resolvable:$true] %s3145
          %3151 = dma.vmem_to_hbm [thread:$0]  %s3144, 512, %s3146, %s3129, 64, 64, 4
        $region64: #{tpu_custom_call.1} parent=55 // pred_fallthru
          _
      $region56: #{tpu_custom_call.1} parent=5 // pred_fallthru
        _
      %p3152 = scmp.le.s32.totalorder 2, %s21
      // Predicated region
      $region65: #{tpu_custom_call.1} parent=5 // pred_check
        %p3153 = pneg %p3152
      $region66: #{tpu_custom_call.1} parent=5 // pred_check_branch
        %3155 = sbr.rel (%p3153) target = $region68
      $region67: #{tpu_custom_call.1} parent=5 // pred_region
        %s3156 = ssub.s32 %s21, 2
        // Predicated region
        $region69: #{tpu_custom_call.1} parent=67 // pred_check
          %p3157 = pneg %p263
        $region70: #{tpu_custom_call.1} parent=67 // pred_check_branch
          %3159 = sbr.rel (%p3157) target = $region72
        $region71: #{tpu_custom_call.1} parent=67 // pred_region
          %s3160 = sand.u32 %s248, 1
          %s3161 = scalar_lea.sflag [#allocation4], %s3160
          %s3162 = sand.u32 %s248, 1
          %s3163 = smul.addr %s3162, 32
          %s3164 = scalar_lea.vmem [#allocation5], %s3163
          %3166 = dma.done %s3161, 512
        $region72: #{tpu_custom_call.1} parent=67 // pred_fallthru
          _
      $region68: #{tpu_custom_call.1} parent=5 // pred_fallthru
        _
    $region6: #{tpu_custom_call.1} parent=1 // loop_footer
      %s25 = sadd.s32 1, %s21
    $region7: #{tpu_custom_call.1} parent=1 // loop_footer_branch
      %20 = sbr.rel target = $region3
    $region8: #{tpu_custom_call.1} parent=1 // loop_exit
      _
    %3167 = vsyncpa [#allocation3], 1
    %s3168 = scalar_lea.sflag [#allocation3], 1
    %3169 = vsyncpa %s3168, 1
    %3170 = vsyncpa [#allocation4], 1
    %s3171 = scalar_lea.sflag [#allocation4], 1
    %3172 = vsyncpa %s3171, 1

</llo_original>
